<compile_context>
chip_gen: v7x
topology: tpu7x:2x2x1
jax: 0.10.0
libtpu: 0.0.40
codegen_flags: <defaults>
</compile_context>

<pallas_src>
import numpy as np
import jax
import jax.numpy as jnp
from jax.experimental import pallas as pl
from jax.experimental.pallas import tpu as pltpu

EPS = 1e-5


# ---------------------------------------------------------------------------
# Fused kernel: conv1 + ReLU + stats + restyle + ConvTranspose3d + sigmoid
#               + conv_inverse_pca.  Single invocation (grid=(1,)).
# ---------------------------------------------------------------------------
def _make_fused_kernel(Dp, inv_m, inv_m1):
    def kernel(b6_ref,                                                # SMEM
               r_ref, wexp_ref, b1_ref, onesbd_ref, chanb_ref, mixbd_ref,
               a6_ref, scat_ref, winv_ref, binv_ref,                  # VMEM in
               out_ref):                                              # VMEM out
        # ---- conv1 (3x3x3, valid) for the WHOLE batch: one MXU matmul ------
        z = jnp.dot(wexp_ref[...], r_ref[...],
                    preferred_element_type=jnp.float32) + b1_ref[...]
        z = jnp.maximum(z, 0.0)                                  # (RB, CW)

        # ---- per-(channel, sample) stats, two-pass, broadcast to the slab --
        # (constant 0/1 matrices keep every op a (128,128)-class MXU matmul)
        s1 = jnp.dot(chanb_ref[...],
                     jnp.dot(z, onesbd_ref[...],
                             preferred_element_type=jnp.float32),
                     preferred_element_type=jnp.float32)
        mean = s1 * inv_m
        cen = z - mean
        ssd = jnp.dot(chanb_ref[...],
                      jnp.dot(cen * cen, onesbd_ref[...],
                              preferred_element_type=jnp.float32),
                      preferred_element_type=jnp.float32)
        var = ssd * inv_m1                                       # unbiased

        # ---- Spa_Spe_Randomization (training branch) -----------------------
        mean_mix = jnp.dot(mean, mixbd_ref[...],
                           preferred_element_type=jnp.float32)
        var_mix = jnp.dot(var, mixbd_ref[...],
                          preferred_element_type=jnp.float32)
        scale = jnp.sqrt(var_mix + EPS) * jax.lax.rsqrt(var + EPS)
        shift = mean_mix - mean * scale
        znorm = z * scale + shift                                # (RB, CW)

        # ---- ConvTranspose3d: banded depth/channel contraction (1 matmul) --
        d_all = jnp.dot(a6_ref[...], znorm,
                        preferred_element_type=jnp.float32)      # (9*Dp, CW)
        # block-transpose (9*Dp, CW) -> (Dp, 9*CW): every slice / concat
        # offset is (8,128)-tile aligned, then ONE fused scatter matmul.
        d2 = jnp.concatenate(
            [d_all[s * Dp:(s + 1) * Dp, :] for s in range(9)], axis=1)
        pre = jnp.dot(d2, scat_ref[...],
                      preferred_element_type=jnp.float32) + b6_ref[0]

        # ---- numerically stable sigmoid ------------------------------------
        e = jnp.exp(-jnp.abs(pre))
        sig = jnp.where(pre >= 0.0, 1.0 / (1.0 + e), e / (1.0 + e))

        # ---- conv_inverse_pca (1x1 conv): final MXU matmul, lane-dense out -
        out_ref[...] = (jnp.dot(winv_ref[...], sig,
                                preferred_element_type=jnp.float32)
                        + binv_ref[...])

    return kernel


# ---------------------------------------------------------------------------
# Full forward pass (wrapper = layout-only transforms on tiny tensors).
# ---------------------------------------------------------------------------
def generator_forward(x, params, idx_swap):
    N, cin, H, W = x.shape
    f32 = jnp.float32
    w_pca, b_pca = params["w_pca"], params["b_pca"]      # (Dp, cin, 1, 1)
    w1, b1 = params["w1"], params["b1"]                  # (CO, 1, 3, 3, 3)
    w6, b6 = params["w6"], params["b6"]                  # (CO, 1, 3, 3, 3)
    w_inv, b_inv = params["w_inv"], params["b_inv"]      # (cin, Dp, 1, 1)
    alpha = params["alpha"]

    Dp = w_pca.shape[0]                  # n_pca == conv1 input depth
    CO = w1.shape[0]                     # n_channel
    Do = Dp - 2
    ho, wo = H - 2, W - 2
    Q = ho * wo
    P = H * W
    Dpad = Dp                            # padded channel-block row stride
    RB = CO * Dpad                       # rows of the z slab (128 here)
    NQ = N * Q
    CW = ((NQ + 127) // 128) * 128       # lane width of the z slab
    OutW = N * P
    CINP = ((cin + 7) // 8) * 8          # output sublane padding
    M = Do * Q
    inv_m = 1.0 / M
    inv_m1 = 1.0 / (M - 1)

    # ---- conv_pca (1x1 Conv2d) as a wrapper einsum (XLA fuses it) ----------
    y = (jnp.einsum("oc,nchw->nohw", w_pca[:, :, 0, 0].astype(f32),
                    x.astype(f32))
         + b_pca.astype(f32)[None, :, None, None])               # (N, Dp, H, W)

    # ---- torch reshape quirk: contiguous NCHW -> (N,H,W,Dp,1).permute ------
    vol = jnp.transpose(y.reshape(N, H, W, Dp), (0, 3, 1, 2))    # (N, Dp, H, W)

    # ---- depth-expanded spatial im2col, all samples batched on lanes -------
    slabs = [vol[:, :, kh:kh + ho, kw:kw + wo]
             for kh in range(3) for kw in range(3)]
    R = jnp.stack(slabs, axis=2).reshape(N, Dp * 9, Q)
    R = jnp.transpose(R, (1, 0, 2)).reshape(Dp * 9, NQ)
    R = jnp.pad(R, ((0, 0), (0, CW - NQ))).astype(f32)           # (Dp*9, CW)

    # ---- banded conv weights with 8-sublane-aligned channel blocks ---------
    c_i, l_i, kd_i, s_i = np.meshgrid(np.arange(CO), np.arange(Do),
                                      np.arange(3), np.arange(9), indexing="ij")
    c_f, l_f, kd_f, s_f = (a.ravel() for a in (c_i, l_i, kd_i, s_i))
    tap_f = kd_f * 9 + s_f

    w1flat = w1.reshape(CO, 27).astype(f32)
    Wexp = jnp.zeros((RB, Dp * 9), f32).at[
        c_f * Dpad + l_f, (l_f + kd_f) * 9 + s_f].set(w1flat[c_f, tap_f])

    w6flat = w6.reshape(CO, 27).astype(f32)
    A6 = jnp.zeros((9 * Dp, RB), f32).at[
        s_f * Dp + l_f + kd_f, c_f * Dpad + l_f].set(w6flat[c_f, tap_f])

    rows_cl = (np.arange(CO)[:, None] * Dpad + np.arange(Do)[None, :]).ravel()
    b1col = jnp.zeros((RB, 1), f32).at[rows_cl, 0].set(
        jnp.repeat(b1.astype(f32), Do))

    # ---- constant masking / broadcast matrices (pure numpy, 0/1) -----------
    ones_bd = np.zeros((CW, CW), np.float32)        # same-sample valid lanes
    for n in range(N):
        ones_bd[n * Q:(n + 1) * Q, n * Q:(n + 1) * Q] = 1.0
    chan_bc = np.zeros((RB, RB), np.float32)        # same-channel valid rows
    for c in range(CO):
        chan_bc[c * Dpad:c * Dpad + Do, c * Dpad:c * Dpad + Do] = 1.0

    # fused ConvTranspose3d spatial-scatter matrix (padding folded in)
    scat = np.zeros((9 * CW, OutW), np.float32)
    for kh in range(3):
        for kw in range(3):
            s = kh * 3 + kw
            for n in range(N):
                for i2 in range(ho):
                    for j2 in range(wo):
                        scat[s * CW + n * Q + i2 * wo + j2,
                             n * P + (i2 + kh) * W + (j2 + kw)] = 1.0

    # ---- sample-mixing matrix (alpha and idx_swap folded in) ---------------
    perm = (jnp.arange(N)[:, None] == idx_swap[None, :]).astype(f32)
    mix = (alpha.astype(f32) * jnp.eye(N, dtype=f32)
           + (1.0 - alpha.astype(f32)) * perm)
    mix_bd = jnp.pad(jnp.kron(mix, jnp.eye(Q, dtype=f32)),
                     ((0, CW - NQ), (0, CW - NQ)))

    # ---- conv_inverse_pca weights, padded to 8 output sublanes -------------
    winv_p = jnp.zeros((CINP, Dp), f32).at[:cin, :].set(
        w_inv[:, :, 0, 0].astype(f32))
    binv_p = jnp.zeros((CINP, 1), f32).at[:cin, 0].set(b_inv.astype(f32))
    b6_arr = jnp.reshape(b6.astype(f32), (1,))

    kernel = _make_fused_kernel(Dp, inv_m, inv_m1)

    out_pad = pl.pallas_call(
        kernel,
        grid=(1,),
        in_specs=[
            pl.BlockSpec(memory_space=pltpu.MemorySpace.SMEM),      # b6
            pl.BlockSpec((Dp * 9, CW), lambda i: (0, 0)),           # R
            pl.BlockSpec((RB, Dp * 9), lambda i: (0, 0)),           # Wexp
            pl.BlockSpec((RB, 1), lambda i: (0, 0)),                # b1col
            pl.BlockSpec((CW, CW), lambda i: (0, 0)),               # ones_bd
            pl.BlockSpec((RB, RB), lambda i: (0, 0)),               # chan_bc
            pl.BlockSpec((CW, CW), lambda i: (0, 0)),               # mix_bd
            pl.BlockSpec((9 * Dp, RB), lambda i: (0, 0)),           # A6
            pl.BlockSpec((9 * CW, OutW), lambda i: (0, 0)),         # scat
            pl.BlockSpec((CINP, Dp), lambda i: (0, 0)),             # winv
            pl.BlockSpec((CINP, 1), lambda i: (0, 0)),              # binv
        ],
        out_specs=pl.BlockSpec((CINP, OutW), lambda i: (0, 0)),
        out_shape=jax.ShapeDtypeStruct((CINP, OutW), jnp.float32),
        compiler_params=pltpu.CompilerParams(
            dimension_semantics=("arbitrary",)),
    )(b6_arr, R, Wexp, b1col, jnp.asarray(ones_bd), jnp.asarray(chan_bc),
      mix_bd, A6, jnp.asarray(scat), winv_p, binv_p)

    out = out_pad[:cin, :].reshape(cin, N, P)
    out = jnp.transpose(out, (1, 0, 2)).reshape(N, cin, H, W)
    return out


# ---------------------------------------------------------------------------
# Pure-JAX reference (no Pallas, no MXU) for validation.
# ---------------------------------------------------------------------------
def reference_forward(x, params, idx_swap):
    n, cin, h, w = x.shape
    w_pca2d = params["w_pca"][:, :, 0, 0]
    n_pca = w_pca2d.shape[0]
    y = (x[:, None, :, :, :] * w_pca2d[None, :, :, None, None]).sum(axis=2)
    y = y + params["b_pca"][None, :, None, None]
    y = y.reshape(n, h, w, n_pca, 1).transpose(0, 4, 3, 1, 2)       # (N,1,Dp,H,W)

    w1, b1 = params["w1"], params["b1"]
    n_ch = w1.shape[0]
    d = n_pca
    do, ho, wo = d - 2, h - 2, w - 2
    acc = jnp.zeros((n, n_ch, do, ho, wo), jnp.float32)
    for kd in range(3):
        for kh in range(3):
            for kw in range(3):
                acc = acc + (y[:, :, kd:kd + do, kh:kh + ho, kw:kw + wo]
                             * w1[None, :, 0, kd, kh, kw, None, None, None])
    z = jnp.maximum(acc + b1[None, :, None, None, None], 0.0)

    zf = z.reshape(n, n_ch, -1)
    mean = zf.mean(-1, keepdims=True)
    var = jnp.var(zf, axis=-1, keepdims=True, ddof=1)
    zn = (zf - mean) / jnp.sqrt(var + EPS)
    alpha = params["alpha"]
    mean2 = alpha * mean + (1.0 - alpha) * mean[idx_swap]
    var2 = alpha * var + (1.0 - alpha) * var[idx_swap]
    zf = zn * jnp.sqrt(var2 + EPS) + mean2
    z = zf.reshape(n, n_ch, do, ho, wo)

    w6, b6 = params["w6"], params["b6"]
    out3 = jnp.zeros((n, 1, do + 2, ho + 2, wo + 2), jnp.float32)
    for kd in range(3):
        for kh in range(3):
            for kw in range(3):
                term = (z * w6[None, :, 0, kd, kh, kw, None, None, None]).sum(axis=1)
                out3 = out3.at[:, 0, kd:kd + do, kh:kh + ho, kw:kw + wo].add(term)
    s = jax.nn.sigmoid(out3 + b6[None, :, None, None, None])

    s = s.transpose(0, 2, 3, 4, 1).reshape(n, n_pca, h, w)
    w_inv2d = params["w_inv"][:, :, 0, 0]
    out = (s[:, None, :, :, :] * w_inv2d[None, :, :, None, None]).sum(axis=2)
    out = out + params["b_inv"][None, :, None, None]
    return out


if __name__ == "__main__":
    # Small shapes consistent with the module: batch=2, imdim=3, imsize=9,
    # dim1 (n_pca) = 32, dim2 (n_channel) = 4.
    N, imdim, imsize = 2, 3, 9
    dim1, dim2 = 32, 4

    key = jax.random.PRNGKey(0)
    keys = jax.random.split(key, 10)
    params = {
        "w_pca": 0.3 * jax.random.normal(keys[0], (dim1, imdim, 1, 1), jnp.float32),
        "b_pca": 0.1 * jax.random.normal(keys[1], (dim1,), jnp.float32),
        "w1":    0.2 * jax.random.normal(keys[2], (dim2, 1, 3, 3, 3), jnp.float32),
        "b1":    0.1 * jax.random.normal(keys[3], (dim2,), jnp.float32),
        "w6":    0.2 * jax.random.normal(keys[4], (dim2, 1, 3, 3, 3), jnp.float32),
        "b6":    0.1 * jax.random.normal(keys[5], (1,), jnp.float32),
        "w_inv": 0.3 * jax.random.normal(keys[6], (imdim, dim1, 1, 1), jnp.float32),
        "b_inv": 0.1 * jax.random.normal(keys[7], (imdim,), jnp.float32),
        "alpha": jnp.float32(0.5),
    }
    x = jax.random.normal(keys[8], (N, imdim, imsize, imsize), jnp.float32)
    # deterministic stand-in for torch.randperm(N)
    idx_swap = jax.random.permutation(keys[9], N)

    fwd = jax.jit(generator_forward)
    out = fwd(x, params, idx_swap)
    out = jax.block_until_ready(out)

    ref = reference_forward(x, params, idx_swap)
    assert out.shape == (N, imdim, imsize, imsize)
    np.testing.assert_allclose(np.asarray(out), np.asarray(ref),
                               rtol=5e-3, atol=1e-3)

    print("KERNEL_OK")
</pallas_src>

<mosaic_0001>
module attributes {stable_mosaic.version = 11 : i64} {
  func.func @kernel(%arg0: i32, %arg1: memref<1xf32, #tpu.memory_space<smem>>, %arg2: memref<288x128xf32, #tpu.memory_space<vmem>>, %arg3: memref<128x288xf32, #tpu.memory_space<vmem>>, %arg4: memref<128x1xf32, #tpu.memory_space<vmem>>, %arg5: memref<128x128xf32, #tpu.memory_space<vmem>>, %arg6: memref<128x128xf32, #tpu.memory_space<vmem>>, %arg7: memref<128x128xf32, #tpu.memory_space<vmem>>, %arg8: memref<288x128xf32, #tpu.memory_space<vmem>>, %arg9: memref<1152x162xf32, #tpu.memory_space<vmem>>, %arg10: memref<8x32xf32, #tpu.memory_space<vmem>>, %arg11: memref<8x1xf32, #tpu.memory_space<vmem>>, %arg12: memref<8x162xf32, #tpu.memory_space<vmem>>) attributes {dimension_semantics = [#tpu.dimension_semantics<arbitrary>], iteration_bounds = array<i64: 1>, scalar_prefetch = 0 : i64, scratch_operands = 0 : i64, tpu.core_type = #tpu.core_type<tc>, window_params = [{transform_indices = @transform_0, window_bounds = array<i64: 1>}, {pipeline_mode = #tpu.pipeline_mode<synchronous>, transform_indices = @transform_1, window_bounds = array<i64: 288, 128>}, {pipeline_mode = #tpu.pipeline_mode<synchronous>, transform_indices = @transform_2, window_bounds = array<i64: 128, 288>}, {pipeline_mode = #tpu.pipeline_mode<synchronous>, transform_indices = @transform_3, window_bounds = array<i64: 128, 1>}, {pipeline_mode = #tpu.pipeline_mode<synchronous>, transform_indices = @transform_4, window_bounds = array<i64: 128, 128>}, {pipeline_mode = #tpu.pipeline_mode<synchronous>, transform_indices = @transform_5, window_bounds = array<i64: 128, 128>}, {pipeline_mode = #tpu.pipeline_mode<synchronous>, transform_indices = @transform_6, window_bounds = array<i64: 128, 128>}, {pipeline_mode = #tpu.pipeline_mode<synchronous>, transform_indices = @transform_7, window_bounds = array<i64: 288, 128>}, {pipeline_mode = #tpu.pipeline_mode<synchronous>, transform_indices = @transform_8, window_bounds = array<i64: 1152, 162>}, {pipeline_mode = #tpu.pipeline_mode<synchronous>, transform_indices = @transform_9, window_bounds = array<i64: 8, 32>}, {pipeline_mode = #tpu.pipeline_mode<synchronous>, transform_indices = @transform_10, window_bounds = array<i64: 8, 1>}, {pipeline_mode = #tpu.pipeline_mode<synchronous>, transform_indices = @transform_11, window_bounds = array<i64: 8, 162>}]} {
    %c0 = arith.constant 0 : index
    %c0_0 = arith.constant 0 : index
    %0 = vector.load %arg3[%c0, %c0_0] : memref<128x288xf32, #tpu.memory_space<vmem>>, vector<128x288xf32>
    %c0_1 = arith.constant 0 : index
    %c0_2 = arith.constant 0 : index
    %1 = vector.load %arg2[%c0_1, %c0_2] : memref<288x128xf32, #tpu.memory_space<vmem>>, vector<288x128xf32>
    %cst = arith.constant dense<0.000000e+00> : vector<128x128xf32>
    %2 = tpu.matmul %0, %1, %cst {dimension_numbers = #tpu.dot_dimension_numbers<[1], [0], [0], [1], [0, 0, 1, 1], [], []>} : vector<128x288xf32>, vector<288x128xf32>, vector<128x128xf32> -> vector<128x128xf32>
    %c0_3 = arith.constant 0 : index
    %c0_4 = arith.constant 0 : index
    %3 = vector.load %arg4[%c0_3, %c0_4] : memref<128x1xf32, #tpu.memory_space<vmem>>, vector<128x1xf32>
    %4 = vector.broadcast %3 : vector<128x1xf32> to vector<128x128xf32>
    %5 = arith.addf %2, %4 : vector<128x128xf32>
    %cst_5 = arith.constant 0.000000e+00 : f32
    %6 = vector.broadcast %cst_5 : f32 to vector<128x128xf32>
    %7 = arith.maximumf %5, %6 : vector<128x128xf32>
    %c0_6 = arith.constant 0 : index
    %c0_7 = arith.constant 0 : index
    %8 = vector.load %arg6[%c0_6, %c0_7] : memref<128x128xf32, #tpu.memory_space<vmem>>, vector<128x128xf32>
    %c0_8 = arith.constant 0 : index
    %c0_9 = arith.constant 0 : index
    %9 = vector.load %arg5[%c0_8, %c0_9] : memref<128x128xf32, #tpu.memory_space<vmem>>, vector<128x128xf32>
    %cst_10 = arith.constant dense<0.000000e+00> : vector<128x128xf32>
    %10 = tpu.matmul %7, %9, %cst_10 {dimension_numbers = #tpu.dot_dimension_numbers<[1], [0], [0], [1], [0, 0, 1, 1], [], []>} : vector<128x128xf32>, vector<128x128xf32>, vector<128x128xf32> -> vector<128x128xf32>
    %cst_11 = arith.constant dense<0.000000e+00> : vector<128x128xf32>
    %11 = tpu.matmul %8, %10, %cst_11 {dimension_numbers = #tpu.dot_dimension_numbers<[1], [0], [0], [1], [0, 0, 1, 1], [], []>} : vector<128x128xf32>, vector<128x128xf32>, vector<128x128xf32> -> vector<128x128xf32>
    %cst_12 = arith.constant 6.80272118E-4 : f32
    %12 = vector.broadcast %cst_12 : f32 to vector<128x128xf32>
    %13 = arith.mulf %11, %12 : vector<128x128xf32>
    %14 = arith.subf %7, %13 : vector<128x128xf32>
    %c0_13 = arith.constant 0 : index
    %c0_14 = arith.constant 0 : index
    %15 = vector.load %arg6[%c0_13, %c0_14] : memref<128x128xf32, #tpu.memory_space<vmem>>, vector<128x128xf32>
    %16 = arith.mulf %14, %14 : vector<128x128xf32>
    %c0_15 = arith.constant 0 : index
    %c0_16 = arith.constant 0 : index
    %17 = vector.load %arg5[%c0_15, %c0_16] : memref<128x128xf32, #tpu.memory_space<vmem>>, vector<128x128xf32>
    %cst_17 = arith.constant dense<0.000000e+00> : vector<128x128xf32>
    %18 = tpu.matmul %16, %17, %cst_17 {dimension_numbers = #tpu.dot_dimension_numbers<[1], [0], [0], [1], [0, 0, 1, 1], [], []>} : vector<128x128xf32>, vector<128x128xf32>, vector<128x128xf32> -> vector<128x128xf32>
    %cst_18 = arith.constant dense<0.000000e+00> : vector<128x128xf32>
    %19 = tpu.matmul %15, %18, %cst_18 {dimension_numbers = #tpu.dot_dimension_numbers<[1], [0], [0], [1], [0, 0, 1, 1], [], []>} : vector<128x128xf32>, vector<128x128xf32>, vector<128x128xf32> -> vector<128x128xf32>
    %cst_19 = arith.constant 6.80735218E-4 : f32
    %20 = vector.broadcast %cst_19 : f32 to vector<128x128xf32>
    %21 = arith.mulf %19, %20 : vector<128x128xf32>
    %c0_20 = arith.constant 0 : index
    %c0_21 = arith.constant 0 : index
    %22 = vector.load %arg7[%c0_20, %c0_21] : memref<128x128xf32, #tpu.memory_space<vmem>>, vector<128x128xf32>
    %cst_22 = arith.constant dense<0.000000e+00> : vector<128x128xf32>
    %23 = tpu.matmul %13, %22, %cst_22 {dimension_numbers = #tpu.dot_dimension_numbers<[1], [0], [0], [1], [0, 0, 1, 1], [], []>} : vector<128x128xf32>, vector<128x128xf32>, vector<128x128xf32> -> vector<128x128xf32>
    %c0_23 = arith.constant 0 : index
    %c0_24 = arith.constant 0 : index
    %24 = vector.load %arg7[%c0_23, %c0_24] : memref<128x128xf32, #tpu.memory_space<vmem>>, vector<128x128xf32>
    %cst_25 = arith.constant dense<0.000000e+00> : vector<128x128xf32>
    %25 = tpu.matmul %21, %24, %cst_25 {dimension_numbers = #tpu.dot_dimension_numbers<[1], [0], [0], [1], [0, 0, 1, 1], [], []>} : vector<128x128xf32>, vector<128x128xf32>, vector<128x128xf32> -> vector<128x128xf32>
    %cst_26 = arith.constant 9.99999974E-6 : f32
    %26 = vector.broadcast %cst_26 : f32 to vector<128x128xf32>
    %27 = arith.addf %25, %26 : vector<128x128xf32>
    %28 = math.sqrt %27 : vector<128x128xf32>
    %cst_27 = arith.constant 9.99999974E-6 : f32
    %29 = vector.broadcast %cst_27 : f32 to vector<128x128xf32>
    %30 = arith.addf %21, %29 : vector<128x128xf32>
    %31 = math.rsqrt %30 : vector<128x128xf32>
    %32 = arith.mulf %28, %31 : vector<128x128xf32>
    %33 = arith.mulf %13, %32 : vector<128x128xf32>
    %34 = arith.subf %23, %33 : vector<128x128xf32>
    %35 = arith.mulf %7, %32 : vector<128x128xf32>
    %36 = arith.addf %35, %34 : vector<128x128xf32>
    %c0_28 = arith.constant 0 : index
    %c0_29 = arith.constant 0 : index
    %37 = vector.load %arg8[%c0_28, %c0_29] : memref<288x128xf32, #tpu.memory_space<vmem>>, vector<288x128xf32>
    %cst_30 = arith.constant dense<0.000000e+00> : vector<288x128xf32>
    %38 = tpu.matmul %37, %36, %cst_30 {dimension_numbers = #tpu.dot_dimension_numbers<[1], [0], [0], [1], [0, 0, 1, 1], [], []>} : vector<288x128xf32>, vector<128x128xf32>, vector<288x128xf32> -> vector<288x128xf32>
    %39 = vector.extract_strided_slice %38 {offsets = [0, 0], sizes = [32, 128], strides = [1, 1]} : vector<288x128xf32> to vector<32x128xf32>
    %40 = vector.extract_strided_slice %38 {offsets = [32, 0], sizes = [32, 128], strides = [1, 1]} : vector<288x128xf32> to vector<32x128xf32>
    %41 = vector.extract_strided_slice %38 {offsets = [64, 0], sizes = [32, 128], strides = [1, 1]} : vector<288x128xf32> to vector<32x128xf32>
    %42 = vector.extract_strided_slice %38 {offsets = [96, 0], sizes = [32, 128], strides = [1, 1]} : vector<288x128xf32> to vector<32x128xf32>
    %43 = vector.extract_strided_slice %38 {offsets = [128, 0], sizes = [32, 128], strides = [1, 1]} : vector<288x128xf32> to vector<32x128xf32>
    %44 = vector.extract_strided_slice %38 {offsets = [160, 0], sizes = [32, 128], strides = [1, 1]} : vector<288x128xf32> to vector<32x128xf32>
    %45 = vector.extract_strided_slice %38 {offsets = [192, 0], sizes = [32, 128], strides = [1, 1]} : vector<288x128xf32> to vector<32x128xf32>
    %46 = vector.extract_strided_slice %38 {offsets = [224, 0], sizes = [32, 128], strides = [1, 1]} : vector<288x128xf32> to vector<32x128xf32>
    %47 = vector.extract_strided_slice %38 {offsets = [256, 0], sizes = [32, 128], strides = [1, 1]} : vector<288x128xf32> to vector<32x128xf32>
    %48 = tpu.concatenate %39, %40, %41, %42, %43, %44, %45, %46, %47 in 1 : vector<32x128xf32>, vector<32x128xf32>, vector<32x128xf32>, vector<32x128xf32>, vector<32x128xf32>, vector<32x128xf32>, vector<32x128xf32>, vector<32x128xf32>, vector<32x128xf32> -> vector<32x1152xf32>
    %c0_31 = arith.constant 0 : index
    %c0_32 = arith.constant 0 : index
    %49 = vector.load %arg9[%c0_31, %c0_32] : memref<1152x162xf32, #tpu.memory_space<vmem>>, vector<1152x162xf32>
    %cst_33 = arith.constant dense<0.000000e+00> : vector<32x162xf32>
    %50 = tpu.matmul %48, %49, %cst_33 {dimension_numbers = #tpu.dot_dimension_numbers<[1], [0], [0], [1], [0, 0, 1, 1], [], []>} : vector<32x1152xf32>, vector<1152x162xf32>, vector<32x162xf32> -> vector<32x162xf32>
    %c0_34 = arith.constant 0 : index
    %51 = memref.load %arg1[%c0_34] : memref<1xf32, #tpu.memory_space<smem>>
    %52 = vector.broadcast %51 : f32 to vector<32x162xf32>
    %53 = arith.addf %50, %52 : vector<32x162xf32>
    %54 = math.absf %53 : vector<32x162xf32>
    %cst_35 = arith.constant 0.000000e+00 : f32
    %55 = vector.broadcast %cst_35 : f32 to vector<32x162xf32>
    %56 = arith.subf %55, %54 : vector<32x162xf32>
    %57 = math.exp %56 : vector<32x162xf32>
    %cst_36 = arith.constant 0.000000e+00 : f32
    %58 = vector.broadcast %cst_36 : f32 to vector<32x162xf32>
    %59 = arith.cmpf oge, %53, %58 : vector<32x162xf32>
    %cst_37 = arith.constant 1.000000e+00 : f32
    %60 = vector.broadcast %cst_37 : f32 to vector<32x162xf32>
    %61 = arith.addf %60, %57 : vector<32x162xf32>
    %cst_38 = arith.constant 1.000000e+00 : f32
    %62 = vector.broadcast %cst_38 : f32 to vector<32x162xf32>
    %63 = arith.divf %62, %61 : vector<32x162xf32>
    %cst_39 = arith.constant 1.000000e+00 : f32
    %64 = vector.broadcast %cst_39 : f32 to vector<32x162xf32>
    %65 = arith.addf %64, %57 : vector<32x162xf32>
    %66 = arith.divf %57, %65 : vector<32x162xf32>
    %67 = arith.select %59, %63, %66 : vector<32x162xi1>, vector<32x162xf32>
    %c0_40 = arith.constant 0 : index
    %c0_41 = arith.constant 0 : index
    %68 = vector.load %arg10[%c0_40, %c0_41] : memref<8x32xf32, #tpu.memory_space<vmem>>, vector<8x32xf32>
    %cst_42 = arith.constant dense<0.000000e+00> : vector<8x162xf32>
    %69 = tpu.matmul %68, %67, %cst_42 {dimension_numbers = #tpu.dot_dimension_numbers<[1], [0], [0], [1], [0, 0, 1, 1], [], []>} : vector<8x32xf32>, vector<32x162xf32>, vector<8x162xf32> -> vector<8x162xf32>
    %c0_43 = arith.constant 0 : index
    %c0_44 = arith.constant 0 : index
    %70 = vector.load %arg11[%c0_43, %c0_44] : memref<8x1xf32, #tpu.memory_space<vmem>>, vector<8x1xf32>
    %71 = vector.broadcast %70 : vector<8x1xf32> to vector<8x162xf32>
    %72 = arith.addf %69, %71 : vector<8x162xf32>
    %c0_45 = arith.constant 0 : index
    %c0_46 = arith.constant 0 : index
    %73 = vector.load %arg12[%c0_45, %c0_46] : memref<8x162xf32, #tpu.memory_space<vmem>>, vector<8x162xf32>
    tpu.vector_store %arg12[%c0_45, %c0_46], %72 {strides = array<i32>} : memref<8x162xf32, #tpu.memory_space<vmem>>, vector<8x162xf32>,
    return
  }
  func.func @transform_0(%arg0: i32) -> i32 {
    %c0_i32 = arith.constant 0 : i32
    %c0_i32_0 = arith.constant 0 : i32
    return %c0_i32 : i32
  }
  func.func @transform_1(%arg0: i32) -> (i32, i32) {
    %c0_i32 = arith.constant 0 : i32
    %c0_i32_0 = arith.constant 0 : i32
    %c0_i32_1 = arith.constant 0 : i32
    return %c0_i32, %c0_i32_0 : i32, i32
  }
  func.func @transform_2(%arg0: i32) -> (i32, i32) {
    %c0_i32 = arith.constant 0 : i32
    %c0_i32_0 = arith.constant 0 : i32
    %c0_i32_1 = arith.constant 0 : i32
    return %c0_i32, %c0_i32_0 : i32, i32
  }
  func.func @transform_3(%arg0: i32) -> (i32, i32) {
    %c0_i32 = arith.constant 0 : i32
    %c0_i32_0 = arith.constant 0 : i32
    %c0_i32_1 = arith.constant 0 : i32
    return %c0_i32, %c0_i32_0 : i32, i32
  }
  func.func @transform_4(%arg0: i32) -> (i32, i32) {
    %c0_i32 = arith.constant 0 : i32
    %c0_i32_0 = arith.constant 0 : i32
    %c0_i32_1 = arith.constant 0 : i32
    return %c0_i32, %c0_i32_0 : i32, i32
  }
  func.func @transform_5(%arg0: i32) -> (i32, i32) {
    %c0_i32 = arith.constant 0 : i32
    %c0_i32_0 = arith.constant 0 : i32
    %c0_i32_1 = arith.constant 0 : i32
    return %c0_i32, %c0_i32_0 : i32, i32
  }
  func.func @transform_6(%arg0: i32) -> (i32, i32) {
    %c0_i32 = arith.constant 0 : i32
    %c0_i32_0 = arith.constant 0 : i32
    %c0_i32_1 = arith.constant 0 : i32
    return %c0_i32, %c0_i32_0 : i32, i32
  }
  func.func @transform_7(%arg0: i32) -> (i32, i32) {
    %c0_i32 = arith.constant 0 : i32
    %c0_i32_0 = arith.constant 0 : i32
    %c0_i32_1 = arith.constant 0 : i32
    return %c0_i32, %c0_i32_0 : i32, i32
  }
  func.func @transform_8(%arg0: i32) -> (i32, i32) {
    %c0_i32 = arith.constant 0 : i32
    %c0_i32_0 = arith.constant 0 : i32
    %c0_i32_1 = arith.constant 0 : i32
    return %c0_i32, %c0_i32_0 : i32, i32
  }
  func.func @transform_9(%arg0: i32) -> (i32, i32) {
    %c0_i32 = arith.constant 0 : i32
    %c0_i32_0 = arith.constant 0 : i32
    %c0_i32_1 = arith.constant 0 : i32
    return %c0_i32, %c0_i32_0 : i32, i32
  }
  func.func @transform_10(%arg0: i32) -> (i32, i32) {
    %c0_i32 = arith.constant 0 : i32
    %c0_i32_0 = arith.constant 0 : i32
    %c0_i32_1 = arith.constant 0 : i32
    return %c0_i32, %c0_i32_0 : i32, i32
  }
  func.func @transform_11(%arg0: i32) -> (i32, i32) {
    %c0_i32 = arith.constant 0 : i32
    %c0_i32_0 = arith.constant 0 : i32
    %c0_i32_1 = arith.constant 0 : i32
    return %c0_i32, %c0_i32_0 : i32, i32
  }
}

</mosaic_0001>

<llo_original>
// kernel: generator_forward.1
$region0: #{generator_forward.1}
  #allocation0 [shape = 'u32[]', space=smem, size = 0x4, offset = 0x4, fixed_abs, tag = 'smem constant byte address 0x4 - core index']
  #allocation1 [shape = 'u32[144,128]{1,0:T(1,128)}', space=vmem, size = 0x12000, scoped, tag = 'internal scratch']
  #allocation2 [shape = 'f32[1]{0:T(128)S(6)}', space=smem, size = 0x200, scoped, tag = 'scoped memory for generator_forward.1']
  %s0 = inlined_call_operand.<no memory space> [shape: f32[1], index: 0, kind: input, shape index: {}]
  %s1 = inlined_call_operand.vmem [shape: f32[288,128], index: 1, kind: input, shape index: {}]
  %s2 = inlined_call_operand.vmem [shape: f32[128,288], index: 2, kind: input, shape index: {}]
  %s3 = inlined_call_operand.vmem [shape: f32[128,1], index: 3, kind: input, shape index: {}]
  %s4 = inlined_call_operand.vmem [shape: f32[128,128], index: 4, kind: input, shape index: {}]
  %s5 = inlined_call_operand.vmem [shape: f32[128,128], index: 5, kind: input, shape index: {}]
  %s6 = inlined_call_operand.vmem [shape: f32[128,128], index: 6, kind: input, shape index: {}]
  %s7 = inlined_call_operand.vmem [shape: f32[288,128], index: 7, kind: input, shape index: {}]
  %s8 = inlined_call_operand.vmem [shape: f32[1152,162], index: 8, kind: input, shape index: {}]
  %s9 = inlined_call_operand.vmem [shape: f32[8,32], index: 9, kind: input, shape index: {}]
  %s10 = inlined_call_operand.vmem [shape: f32[8,1], index: 10, kind: input, shape index: {}]
  %s11 = inlined_call_operand.vmem [shape: f32[8,162], index: 11, kind: output, shape index: {}]
  %s12 = sld [smem:[#allocation0]]
  $region54: #{generator_forward.1} parent=0
    _
  %s14 = ssub.s32 1, %s12
  %s15 = scalar_select 0, %s14, %s12
  %16 = sst [smem:[#allocation2]] %s0
  // Predicated region
  $region2: #{generator_forward.1} parent=0 // pred_check
    _
  $region3: #{generator_forward.1} parent=0 // pred_check_branch
    %18 = sbr.rel (0) target = $region5
  $region4: #{generator_forward.1} parent=0 // pred_region
    _
  $region5: #{generator_forward.1} parent=0 // pred_fallthru
    _
  // Predicated region
  $region6: #{generator_forward.1} parent=0 // pred_check
    _
  $region7: #{generator_forward.1} parent=0 // pred_check_branch
    %20 = sbr.rel (0) target = $region9
  $region8: #{generator_forward.1} parent=0 // pred_region
    _
  $region9: #{generator_forward.1} parent=0 // pred_fallthru
    _
  // Predicated region
  $region10: #{generator_forward.1} parent=0 // pred_check
    _
  $region11: #{generator_forward.1} parent=0 // pred_check_branch
    %22 = sbr.rel (0) target = $region13
  $region12: #{generator_forward.1} parent=0 // pred_region
    _
  $region13: #{generator_forward.1} parent=0 // pred_fallthru
    _
  // Predicated region
  $region14: #{generator_forward.1} parent=0 // pred_check
    _
  $region15: #{generator_forward.1} parent=0 // pred_check_branch
    %24 = sbr.rel (0) target = $region17
  $region16: #{generator_forward.1} parent=0 // pred_region
    _
  $region17: #{generator_forward.1} parent=0 // pred_fallthru
    _
  // Predicated region
  $region18: #{generator_forward.1} parent=0 // pred_check
    _
  $region19: #{generator_forward.1} parent=0 // pred_check_branch
    %26 = sbr.rel (0) target = $region21
  $region20: #{generator_forward.1} parent=0 // pred_region
    _
  $region21: #{generator_forward.1} parent=0 // pred_fallthru
    _
  // Predicated region
  $region22: #{generator_forward.1} parent=0 // pred_check
    _
  $region23: #{generator_forward.1} parent=0 // pred_check_branch
    %28 = sbr.rel (0) target = $region25
  $region24: #{generator_forward.1} parent=0 // pred_region
    _
  $region25: #{generator_forward.1} parent=0 // pred_fallthru
    _
  // Predicated region
  $region26: #{generator_forward.1} parent=0 // pred_check
    _
  $region27: #{generator_forward.1} parent=0 // pred_check_branch
    %30 = sbr.rel (0) target = $region29
  $region28: #{generator_forward.1} parent=0 // pred_region
    _
  $region29: #{generator_forward.1} parent=0 // pred_fallthru
    _
  // Predicated region
  $region30: #{generator_forward.1} parent=0 // pred_check
    _
  $region31: #{generator_forward.1} parent=0 // pred_check_branch
    %32 = sbr.rel (0) target = $region33
  $region32: #{generator_forward.1} parent=0 // pred_region
    _
  $region33: #{generator_forward.1} parent=0 // pred_fallthru
    _
  // Predicated region
  $region34: #{generator_forward.1} parent=0 // pred_check
    _
  $region35: #{generator_forward.1} parent=0 // pred_check_branch
    %34 = sbr.rel (0) target = $region37
  $region36: #{generator_forward.1} parent=0 // pred_region
    _
  $region37: #{generator_forward.1} parent=0 // pred_fallthru
    _
  // Predicated region
  $region38: #{generator_forward.1} parent=0 // pred_check
    _
  $region39: #{generator_forward.1} parent=0 // pred_check_branch
    %36 = sbr.rel (0) target = $region41
  $region40: #{generator_forward.1} parent=0 // pred_region
    _
  $region41: #{generator_forward.1} parent=0 // pred_fallthru
    _
  // Predicated region
  $region42: #{generator_forward.1} parent=0 // pred_check
    _
  $region43: #{generator_forward.1} parent=0 // pred_check_branch
    %38 = sbr.rel (0) target = $region45
  $region44: #{generator_forward.1} parent=0 // pred_region
    _
  $region45: #{generator_forward.1} parent=0 // pred_fallthru
    _
  %v39 = vld [vmem:[%s2] sm:$0xff]
  %v40 = vld [vmem:[%s2 + $0x8] sm:$0xff]
  %v41 = vld [vmem:[%s2 + $0x10] sm:$0xff]
  %v42 = vld [vmem:[%s2 + $0x18] sm:$0xff]
  %v43 = vld [vmem:[%s2 + $0x20] sm:$0xff]
  %v44 = vld [vmem:[%s2 + $0x28] sm:$0xff]
  %v45 = vld [vmem:[%s2 + $0x30] sm:$0xff]
  %v46 = vld [vmem:[%s2 + $0x38] sm:$0xff]
  %v47 = vld [vmem:[%s2 + $0x40] sm:$0xff]
  %v48 = vld [vmem:[%s2 + $0x48] sm:$0xff]
  %v49 = vld [vmem:[%s2 + $0x50] sm:$0xff]
  %v50 = vld [vmem:[%s2 + $0x58] sm:$0xff]
  %v51 = vld [vmem:[%s2 + $0x60] sm:$0xff]
  %v52 = vld [vmem:[%s2 + $0x68] sm:$0xff]
  %v53 = vld [vmem:[%s2 + $0x70] sm:$0xff]
  %v54 = vld [vmem:[%s2 + $0x78] sm:$0xff]
  %v55 = vld [vmem:[%s2 + $0x80] sm:$0xff]
  %v56 = vld [vmem:[%s2 + $0x88] sm:$0xff]
  %v57 = vld [vmem:[%s2 + $0x90] sm:$0xff]
  %v58 = vld [vmem:[%s2 + $0x98] sm:$0xff]
  %v59 = vld [vmem:[%s2 + $0xa0] sm:$0xff]
  %v60 = vld [vmem:[%s2 + $0xa8] sm:$0xff]
  %v61 = vld [vmem:[%s2 + $0xb0] sm:$0xff]
  %v62 = vld [vmem:[%s2 + $0xb8] sm:$0xff]
  %v63 = vld [vmem:[%s2 + $0xc0] sm:$0xff]
  %v64 = vld [vmem:[%s2 + $0xc8] sm:$0xff]
  %v65 = vld [vmem:[%s2 + $0xd0] sm:$0xff]
  %v66 = vld [vmem:[%s2 + $0xd8] sm:$0xff]
  %v67 = vld [vmem:[%s2 + $0xe0] sm:$0xff]
  %v68 = vld [vmem:[%s2 + $0xe8] sm:$0xff]
  %v69 = vld [vmem:[%s2 + $0xf0] sm:$0xff]
  %v70 = vld [vmem:[%s2 + $0xf8] sm:$0xff]
  %v71 = vld [vmem:[%s2 + $0x100] sm:$0xff]
  %v72 = vld [vmem:[%s2 + $0x108] sm:$0xff]
  %v73 = vld [vmem:[%s2 + $0x110] sm:$0xff]
  %v74 = vld [vmem:[%s2 + $0x118] sm:$0xff]
  %v75 = vld [vmem:[%s2 + $0x120] sm:$0xff]
  %v76 = vld [vmem:[%s2 + $0x128] sm:$0xff]
  %v77 = vld [vmem:[%s2 + $0x130] sm:$0xff]
  %v78 = vld [vmem:[%s2 + $0x138] sm:$0xff]
  %v79 = vld [vmem:[%s2 + $0x140] sm:$0xff]
  %v80 = vld [vmem:[%s2 + $0x148] sm:$0xff]
  %v81 = vld [vmem:[%s2 + $0x150] sm:$0xff]
  %v82 = vld [vmem:[%s2 + $0x158] sm:$0xff]
  %v83 = vld [vmem:[%s2 + $0x160] sm:$0xff]
  %v84 = vld [vmem:[%s2 + $0x168] sm:$0xff]
  %v85 = vld [vmem:[%s2 + $0x170] sm:$0xff]
  %v86 = vld [vmem:[%s2 + $0x178] sm:$0xff]
  %v87 = vld [vmem:[%s1] sm:$0xff]
  %v88 = vld [vmem:[%s1 + $0x8] sm:$0xff]
  %v89 = vld [vmem:[%s1 + $0x10] sm:$0xff]
  %v90 = vld [vmem:[%s1 + $0x18] sm:$0xff]
  %v91 = vld [vmem:[%s1 + $0x20] sm:$0xff]
  %v92 = vld [vmem:[%s1 + $0x28] sm:$0xff]
  %v93 = vld [vmem:[%s1 + $0x30] sm:$0xff]
  %v94 = vld [vmem:[%s1 + $0x38] sm:$0xff]
  %v95 = vld [vmem:[%s1 + $0x40] sm:$0xff]
  %v96 = vld [vmem:[%s1 + $0x48] sm:$0xff]
  %v97 = vld [vmem:[%s1 + $0x50] sm:$0xff]
  %v98 = vld [vmem:[%s1 + $0x58] sm:$0xff]
  %v99 = vld [vmem:[%s1 + $0x60] sm:$0xff]
  %v100 = vld [vmem:[%s1 + $0x68] sm:$0xff]
  %v101 = vld [vmem:[%s1 + $0x70] sm:$0xff]
  %v102 = vld [vmem:[%s1 + $0x78] sm:$0xff]
  %v103 = vld [vmem:[%s1 + $0x80] sm:$0xff]
  %v104 = vld [vmem:[%s1 + $0x88] sm:$0xff]
  %v105 = vld [vmem:[%s1 + $0x90] sm:$0xff]
  %v106 = vld [vmem:[%s1 + $0x98] sm:$0xff]
  %v107 = vld [vmem:[%s1 + $0xa0] sm:$0xff]
  %v108 = vld [vmem:[%s1 + $0xa8] sm:$0xff]
  %v109 = vld [vmem:[%s1 + $0xb0] sm:$0xff]
  %v110 = vld [vmem:[%s1 + $0xb8] sm:$0xff]
  %v111 = vld [vmem:[%s1 + $0xc0] sm:$0xff]
  %v112 = vld [vmem:[%s1 + $0xc8] sm:$0xff]
  %v113 = vld [vmem:[%s1 + $0xd0] sm:$0xff]
  %v114 = vld [vmem:[%s1 + $0xd8] sm:$0xff]
  %v115 = vld [vmem:[%s1 + $0xe0] sm:$0xff]
  %v116 = vld [vmem:[%s1 + $0xe8] sm:$0xff]
  %v117 = vld [vmem:[%s1 + $0xf0] sm:$0xff]
  %v118 = vld [vmem:[%s1 + $0xf8] sm:$0xff]
  %v119 = vld [vmem:[%s1 + $0x100] sm:$0xff]
  %v120 = vld [vmem:[%s1 + $0x108] sm:$0xff]
  %v121 = vld [vmem:[%s1 + $0x110] sm:$0xff]
  %v122 = vld [vmem:[%s1 + $0x118] sm:$0xff]
  %v123 = vld [vmem:[%s3] sm:$0xff]
  %v124 = vld [vmem:[%s3 + $0x8] sm:$0xff]
  %v125 = vld [vmem:[%s3 + $0x10] sm:$0xff]
  %v126 = vld [vmem:[%s3 + $0x18] sm:$0xff]
  %v127 = vld [vmem:[%s3 + $0x20] sm:$0xff]
  %v128 = vld [vmem:[%s3 + $0x28] sm:$0xff]
  %v129 = vld [vmem:[%s3 + $0x30] sm:$0xff]
  %v130 = vld [vmem:[%s3 + $0x38] sm:$0xff]
  %v131 = vld [vmem:[%s3 + $0x40] sm:$0xff]
  %v132 = vld [vmem:[%s3 + $0x48] sm:$0xff]
  %v133 = vld [vmem:[%s3 + $0x50] sm:$0xff]
  %v134 = vld [vmem:[%s3 + $0x58] sm:$0xff]
  %v135 = vld [vmem:[%s3 + $0x60] sm:$0xff]
  %v136 = vld [vmem:[%s3 + $0x68] sm:$0xff]
  %v137 = vld [vmem:[%s3 + $0x70] sm:$0xff]
  %v138 = vld [vmem:[%s3 + $0x78] sm:$0xff]
  %140 = vset.pattern.permute.xlu0 0
  %141 = vperm.xlu0 %140, %v123
  %v142 = vpop.permute.xlu0 %141
  %145 = vset.pattern.permute.xlu0 0
  %146 = vperm.xlu0 %145, %v124
  %v147 = vpop.permute.xlu0 %146
  %150 = vset.pattern.permute.xlu0 0
  %151 = vperm.xlu0 %150, %v125
  %v152 = vpop.permute.xlu0 %151
  %155 = vset.pattern.permute.xlu0 0
  %156 = vperm.xlu0 %155, %v126
  %v157 = vpop.permute.xlu0 %156
  %160 = vset.pattern.permute.xlu0 0
  %161 = vperm.xlu0 %160, %v127
  %v162 = vpop.permute.xlu0 %161
  %165 = vset.pattern.permute.xlu0 0
  %166 = vperm.xlu0 %165, %v128
  %v167 = vpop.permute.xlu0 %166
  %170 = vset.pattern.permute.xlu0 0
  %171 = vperm.xlu0 %170, %v129
  %v172 = vpop.permute.xlu0 %171
  %175 = vset.pattern.permute.xlu0 0
  %176 = vperm.xlu0 %175, %v130
  %v177 = vpop.permute.xlu0 %176
  %180 = vset.pattern.permute.xlu0 0
  %181 = vperm.xlu0 %180, %v131
  %v182 = vpop.permute.xlu0 %181
  %185 = vset.pattern.permute.xlu0 0
  %186 = vperm.xlu0 %185, %v132
  %v187 = vpop.permute.xlu0 %186
  %190 = vset.pattern.permute.xlu0 0
  %191 = vperm.xlu0 %190, %v133
  %v192 = vpop.permute.xlu0 %191
  %195 = vset.pattern.permute.xlu0 0
  %196 = vperm.xlu0 %195, %v134
  %v197 = vpop.permute.xlu0 %196
  %200 = vset.pattern.permute.xlu0 0
  %201 = vperm.xlu0 %200, %v135
  %v202 = vpop.permute.xlu0 %201
  %205 = vset.pattern.permute.xlu0 0
  %206 = vperm.xlu0 %205, %v136
  %v207 = vpop.permute.xlu0 %206
  %210 = vset.pattern.permute.xlu0 0
  %211 = vperm.xlu0 %210, %v137
  %v212 = vpop.permute.xlu0 %211
  %215 = vset.pattern.permute.xlu0 0
  %216 = vperm.xlu0 %215, %v138
  %v217 = vpop.permute.xlu0 %216
  %vm219 = vcmask 261120
  %v221 = vsel %vm219, %v41, 0
  %v224 = vsel %vm219, %v44, 0
  %v227 = vsel %vm219, %v47, 0
  %v230 = vsel %vm219, %v50, 0
  %v233 = vsel %vm219, %v53, 0
  %v236 = vsel %vm219, %v56, 0
  %v239 = vsel %vm219, %v59, 0
  %v242 = vsel %vm219, %v62, 0
  %v245 = vsel %vm219, %v65, 0
  %v248 = vsel %vm219, %v68, 0
  %v251 = vsel %vm219, %v71, 0
  %v254 = vsel %vm219, %v74, 0
  %v257 = vsel %vm219, %v77, 0
  %v260 = vsel %vm219, %v80, 0
  %v263 = vsel %vm219, %v83, 0
  %v266 = vsel %vm219, %v86, 0
  %268 = vmatprep.subr.mxu0 0.0
  %269 = vmatpush1.msra.mxu0 %v87
  %270 = vmatprep.subr.mxu0 0.0
  %271 = vmatpush1.msra.mxu0 %v88
  %272 = vmatprep.subr.mxu0 0.0
  %273 = vmatpush1.msra.mxu0 %v89
  %274 = vmatprep.subr.mxu0 0.0
  %275 = vmatpush1.msra.mxu0 %v90
  %276 = vmatprep.subr.mxu0 0.0
  %277 = vmatpush1.msra.mxu0 %v91
  %278 = vmatprep.subr.mxu0 0.0
  %279 = vmatpush1.msra.mxu0 %v92
  %280 = vmatprep.subr.mxu0 0.0
  %281 = vmatpush1.msra.mxu0 %v93
  %282 = vmatprep.subr.mxu0 0.0
  %283 = vmatpush1.msra.mxu0 %v94
  %284 = vmatprep.subr.mxu0 0.0
  %285 = vmatpush1.msra.mxu0 %v95
  %286 = vmatprep.subr.mxu0 0.0
  %287 = vmatpush1.msra.mxu0 %v96
  %288 = vmatprep.subr.mxu0 0.0
  %289 = vmatpush1.msra.mxu0 %v97
  %290 = vmatprep.subr.mxu0 0.0
  %291 = vmatpush1.msra.mxu0 %v98
  %292 = vmatprep.subr.mxu0 0.0
  %293 = vmatpush1.msra.mxu0 %v99
  %294 = vmatprep.subr.mxu0 0.0
  %295 = vmatpush1.msra.mxu0 %v100
  %296 = vmatprep.subr.mxu0 0.0
  %297 = vmatpush1.msra.mxu0 %v101
  %298 = vmatprep.subr.mxu0 0.0
  %299 = vmatpush1.msra.mxu0 %v102
  %300 = vmatprep.subr.mxu0 0.0
  %301 = vmatpush1.msra.mxu0 %v103
  %302 = vmatprep.subr.mxu0 0.0
  %303 = vmatpush1.msra.mxu0 %v104
  %304 = vmatprep.subr.mxu0 0.0
  %305 = vmatpush1.msra.mxu0 %v105
  %306 = vmatprep.subr.mxu0 0.0
  %307 = vmatpush1.msra.mxu0 %v106
  %308 = vmatprep.subr.mxu0 0.0
  %309 = vmatpush1.msra.mxu0 %v107
  %310 = vmatprep.subr.mxu0 0.0
  %311 = vmatpush1.msra.mxu0 %v108
  %312 = vmatprep.subr.mxu0 0.0
  %313 = vmatpush1.msra.mxu0 %v109
  %314 = vmatprep.subr.mxu0 0.0
  %315 = vmatpush1.msra.mxu0 %v110
  %316 = vmatprep.subr.mxu0 0.0
  %317 = vmatpush1.msra.mxu0 %v111
  %318 = vmatprep.subr.mxu0 0.0
  %319 = vmatpush1.msra.mxu0 %v112
  %320 = vmatprep.subr.mxu0 0.0
  %321 = vmatpush1.msra.mxu0 %v113
  %322 = vmatprep.subr.mxu0 0.0
  %323 = vmatpush1.msra.mxu0 %v114
  %324 = vmatprep.subr.mxu0 0.0
  %325 = vmatpush1.msra.mxu0 %v115
  %326 = vmatprep.subr.mxu0 0.0
  %327 = vmatpush1.msra.mxu0 %v116
  %328 = vmatprep.subr.mxu0 0.0
  %329 = vmatpush1.msra.mxu0 %v117
  %330 = vmatprep.subr.mxu0 0.0
  %331 = vmatpush1.msra.mxu0 %v118
  %332 = vmatprep.mubr.f32.mxu0 %v40
  %333 = vmatmul.mubr.f32.gmra.mrb[0].mxu0 %v39
  %v334 = vpop.f32.mrb[0].mxu0
  %v335 = vadd.f32 %v142, %v334
  %v336 = vpop.f32.mrb[0].mxu0
  %337 = vmatprep.mubr.f32.mxu0 %v43
  %338 = vmatmul.mubr.f32.gmra.mrb[0].mxu0 %v42
  %v339 = vpop.f32.mrb[0].mxu0
  %v340 = vadd.f32 %v147, %v339
  %v341 = vpop.f32.mrb[0].mxu0
  %342 = vmatprep.mubr.f32.mxu0 %v46
  %343 = vmatmul.mubr.f32.gmra.mrb[0].mxu0 %v45
  %v344 = vpop.f32.mrb[0].mxu0
  %v345 = vadd.f32 %v152, %v344
  %v346 = vpop.f32.mrb[0].mxu0
  %347 = vmatprep.mubr.f32.mxu0 %v49
  %348 = vmatmul.mubr.f32.gmra.mrb[0].mxu0 %v48
  %v349 = vpop.f32.mrb[0].mxu0
  %v350 = vadd.f32 %v157, %v349
  %v351 = vpop.f32.mrb[0].mxu0
  %352 = vmatprep.mubr.f32.mxu0 %v52
  %353 = vmatmul.mubr.f32.gmra.mrb[0].mxu0 %v51
  %v354 = vpop.f32.mrb[0].mxu0
  %v355 = vadd.f32 %v162, %v354
  %v356 = vpop.f32.mrb[0].mxu0
  %357 = vmatprep.mubr.f32.mxu0 %v55
  %358 = vmatmul.mubr.f32.gmra.mrb[0].mxu0 %v54
  %v359 = vpop.f32.mrb[0].mxu0
  %v360 = vadd.f32 %v167, %v359
  %v361 = vpop.f32.mrb[0].mxu0
  %362 = vmatprep.mubr.f32.mxu0 %v58
  %363 = vmatmul.mubr.f32.gmra.mrb[0].mxu0 %v57
  %v364 = vpop.f32.mrb[0].mxu0
  %v365 = vadd.f32 %v172, %v364
  %v366 = vpop.f32.mrb[0].mxu0
  %367 = vmatprep.mubr.f32.mxu0 %v61
  %368 = vmatmul.mubr.f32.gmra.mrb[0].mxu0 %v60
  %v369 = vpop.f32.mrb[0].mxu0
  %v370 = vadd.f32 %v177, %v369
  %v371 = vpop.f32.mrb[0].mxu0
  %372 = vmatprep.mubr.f32.mxu0 %v64
  %373 = vmatmul.mubr.f32.gmra.mrb[0].mxu0 %v63
  %v374 = vpop.f32.mrb[0].mxu0
  %v375 = vadd.f32 %v182, %v374
  %v376 = vpop.f32.mrb[0].mxu0
  %377 = vmatprep.mubr.f32.mxu0 %v67
  %378 = vmatmul.mubr.f32.gmra.mrb[0].mxu0 %v66
  %v379 = vpop.f32.mrb[0].mxu0
  %v380 = vadd.f32 %v187, %v379
  %v381 = vpop.f32.mrb[0].mxu0
  %382 = vmatprep.mubr.f32.mxu0 %v70
  %383 = vmatmul.mubr.f32.gmra.mrb[0].mxu0 %v69
  %v384 = vpop.f32.mrb[0].mxu0
  %v385 = vadd.f32 %v192, %v384
  %v386 = vpop.f32.mrb[0].mxu0
  %387 = vmatprep.mubr.f32.mxu0 %v73
  %388 = vmatmul.mubr.f32.gmra.mrb[0].mxu0 %v72
  %v389 = vpop.f32.mrb[0].mxu0
  %v390 = vadd.f32 %v197, %v389
  %v391 = vpop.f32.mrb[0].mxu0
  %392 = vmatprep.mubr.f32.mxu0 %v76
  %393 = vmatmul.mubr.f32.gmra.mrb[0].mxu0 %v75
  %v394 = vpop.f32.mrb[0].mxu0
  %v395 = vadd.f32 %v202, %v394
  %v396 = vpop.f32.mrb[0].mxu0
  %397 = vmatprep.mubr.f32.mxu0 %v79
  %398 = vmatmul.mubr.f32.gmra.mrb[0].mxu0 %v78
  %v399 = vpop.f32.mrb[0].mxu0
  %v400 = vadd.f32 %v207, %v399
  %v401 = vpop.f32.mrb[0].mxu0
  %402 = vmatprep.mubr.f32.mxu0 %v82
  %403 = vmatmul.mubr.f32.gmra.mrb[0].mxu0 %v81
  %v404 = vpop.f32.mrb[0].mxu0
  %v405 = vadd.f32 %v212, %v404
  %v406 = vpop.f32.mrb[0].mxu0
  %407 = vmatprep.mubr.f32.mxu0 %v85
  %408 = vmatmul.mubr.f32.gmra.mrb[0].mxu0 %v84
  %v409 = vpop.f32.mrb[0].mxu0
  %v410 = vadd.f32 %v217, %v409
  %v411 = vpop.f32.mrb[0].mxu0
  %412 = vdwg.mxu0
  %413 = vmatprep.subr.mxu0 0.0
  %414 = vmatpush1.msra.mxu0 %v119
  %415 = vmatprep.subr.mxu0 0.0
  %416 = vmatpush1.msra.mxu0 %v120
  %417 = vmatprep.subr.mxu0 0.0
  %418 = vmatpush1.msra.mxu0 %v121
  %419 = vmatprep.subr.mxu0 0.0
  %420 = vmatpush1.msra.mxu0 %v122
  %421 = vmatprep.subr.mxu0 0.0
  %422 = vmatpush1.msra.mxu0 0.0
  %423 = vmatprep.subr.mxu0 0.0
  %424 = vmatpush1.msra.mxu0 0.0
  %425 = vmatprep.subr.mxu0 0.0
  %426 = vmatpush1.msra.mxu0 0.0
  %427 = vmatprep.subr.mxu0 0.0
  %428 = vmatpush1.msra.mxu0 0.0
  %429 = vmatprep.subr.mxu0 0.0
  %430 = vmatpush1.msra.mxu0 0.0
  %431 = vmatprep.subr.mxu0 0.0
  %432 = vmatpush1.msra.mxu0 0.0
  %433 = vmatprep.subr.mxu0 0.0
  %434 = vmatpush1.msra.mxu0 0.0
  %435 = vmatprep.subr.mxu0 0.0
  %436 = vmatpush1.msra.mxu0 0.0
  %437 = vmatprep.subr.mxu0 0.0
  %438 = vmatpush1.msra.mxu0 0.0
  %439 = vmatprep.subr.mxu0 0.0
  %440 = vmatpush1.msra.mxu0 0.0
  %441 = vmatprep.subr.mxu0 0.0
  %442 = vmatpush1.msra.mxu0 0.0
  %443 = vmatprep.subr.mxu0 0.0
  %444 = vmatpush1.msra.mxu0 0.0
  %445 = vmatprep.subr.mxu0 0.0
  %446 = vmatpush1.msra.mxu0 0.0
  %447 = vmatprep.subr.mxu0 0.0
  %448 = vmatpush1.msra.mxu0 0.0
  %449 = vmatprep.subr.mxu0 0.0
  %450 = vmatpush1.msra.mxu0 0.0
  %451 = vmatprep.subr.mxu0 0.0
  %452 = vmatpush1.msra.mxu0 0.0
  %453 = vmatprep.subr.mxu0 0.0
  %454 = vmatpush1.msra.mxu0 0.0
  %455 = vmatprep.subr.mxu0 0.0
  %456 = vmatpush1.msra.mxu0 0.0
  %457 = vmatprep.subr.mxu0 0.0
  %458 = vmatpush1.msra.mxu0 0.0
  %459 = vmatprep.subr.mxu0 0.0
  %460 = vmatpush1.msra.mxu0 0.0
  %461 = vmatprep.subr.mxu0 0.0
  %462 = vmatpush1.msra.mxu0 0.0
  %463 = vmatprep.subr.mxu0 0.0
  %464 = vmatpush1.msra.mxu0 0.0
  %465 = vmatprep.subr.mxu0 0.0
  %466 = vmatpush1.msra.mxu0 0.0
  %467 = vmatprep.subr.mxu0 0.0
  %468 = vmatpush1.msra.mxu0 0.0
  %469 = vmatprep.subr.mxu0 0.0
  %470 = vmatpush1.msra.mxu0 0.0
  %471 = vmatprep.subr.mxu0 0.0
  %472 = vmatpush1.msra.mxu0 0.0
  %473 = vmatprep.subr.mxu0 0.0
  %474 = vmatpush1.msra.mxu0 0.0
  %475 = vmatprep.subr.mxu0 0.0
  %476 = vmatpush1.msra.mxu0 0.0
  %477 = vmatprep.mubr.f32.mxu0 0.0
  %478 = vmatmul.mubr.f32.gmra.mrb[0].mxu0 %v221
  %v479 = vpop.f32.mrb[0].mxu0
  %v480 = vadd.f32 %v335, %v479
  %v481 = vpop.f32.mrb[0].mxu0
  %482 = vmatprep.mubr.f32.mxu0 0.0
  %483 = vmatmul.mubr.f32.gmra.mrb[0].mxu0 %v224
  %v484 = vpop.f32.mrb[0].mxu0
  %v485 = vadd.f32 %v340, %v484
  %v486 = vpop.f32.mrb[0].mxu0
  %487 = vmatprep.mubr.f32.mxu0 0.0
  %488 = vmatmul.mubr.f32.gmra.mrb[0].mxu0 %v227
  %v489 = vpop.f32.mrb[0].mxu0
  %v490 = vadd.f32 %v345, %v489
  %v491 = vpop.f32.mrb[0].mxu0
  %492 = vmatprep.mubr.f32.mxu0 0.0
  %493 = vmatmul.mubr.f32.gmra.mrb[0].mxu0 %v230
  %v494 = vpop.f32.mrb[0].mxu0
  %v495 = vadd.f32 %v350, %v494
  %v496 = vpop.f32.mrb[0].mxu0
  %497 = vmatprep.mubr.f32.mxu0 0.0
  %498 = vmatmul.mubr.f32.gmra.mrb[0].mxu0 %v233
  %v499 = vpop.f32.mrb[0].mxu0
  %v500 = vadd.f32 %v355, %v499
  %v501 = vpop.f32.mrb[0].mxu0
  %502 = vmatprep.mubr.f32.mxu0 0.0
  %503 = vmatmul.mubr.f32.gmra.mrb[0].mxu0 %v236
  %v504 = vpop.f32.mrb[0].mxu0
  %v505 = vadd.f32 %v360, %v504
  %v506 = vpop.f32.mrb[0].mxu0
  %507 = vmatprep.mubr.f32.mxu0 0.0
  %508 = vmatmul.mubr.f32.gmra.mrb[0].mxu0 %v239
  %v509 = vpop.f32.mrb[0].mxu0
  %v510 = vadd.f32 %v365, %v509
  %v511 = vpop.f32.mrb[0].mxu0
  %512 = vmatprep.mubr.f32.mxu0 0.0
  %513 = vmatmul.mubr.f32.gmra.mrb[0].mxu0 %v242
  %v514 = vpop.f32.mrb[0].mxu0
  %v515 = vadd.f32 %v370, %v514
  %v516 = vpop.f32.mrb[0].mxu0
  %517 = vmatprep.mubr.f32.mxu0 0.0
  %518 = vmatmul.mubr.f32.gmra.mrb[0].mxu0 %v245
  %v519 = vpop.f32.mrb[0].mxu0
  %v520 = vadd.f32 %v375, %v519
  %v521 = vpop.f32.mrb[0].mxu0
  %522 = vmatprep.mubr.f32.mxu0 0.0
  %523 = vmatmul.mubr.f32.gmra.mrb[0].mxu0 %v248
  %v524 = vpop.f32.mrb[0].mxu0
  %v525 = vadd.f32 %v380, %v524
  %v526 = vpop.f32.mrb[0].mxu0
  %527 = vmatprep.mubr.f32.mxu0 0.0
  %528 = vmatmul.mubr.f32.gmra.mrb[0].mxu0 %v251
  %v529 = vpop.f32.mrb[0].mxu0
  %v530 = vadd.f32 %v385, %v529
  %v531 = vpop.f32.mrb[0].mxu0
  %532 = vmatprep.mubr.f32.mxu0 0.0
  %533 = vmatmul.mubr.f32.gmra.mrb[0].mxu0 %v254
  %v534 = vpop.f32.mrb[0].mxu0
  %v535 = vadd.f32 %v390, %v534
  %v536 = vpop.f32.mrb[0].mxu0
  %537 = vmatprep.mubr.f32.mxu0 0.0
  %538 = vmatmul.mubr.f32.gmra.mrb[0].mxu0 %v257
  %v539 = vpop.f32.mrb[0].mxu0
  %v540 = vadd.f32 %v395, %v539
  %v541 = vpop.f32.mrb[0].mxu0
  %542 = vmatprep.mubr.f32.mxu0 0.0
  %543 = vmatmul.mubr.f32.gmra.mrb[0].mxu0 %v260
  %v544 = vpop.f32.mrb[0].mxu0
  %v545 = vadd.f32 %v400, %v544
  %v546 = vpop.f32.mrb[0].mxu0
  %547 = vmatprep.mubr.f32.mxu0 0.0
  %548 = vmatmul.mubr.f32.gmra.mrb[0].mxu0 %v263
  %v549 = vpop.f32.mrb[0].mxu0
  %v550 = vadd.f32 %v405, %v549
  %v551 = vpop.f32.mrb[0].mxu0
  %552 = vmatprep.mubr.f32.mxu0 0.0
  %553 = vmatmul.mubr.f32.gmra.mrb[0].mxu0 %v266
  %v554 = vpop.f32.mrb[0].mxu0
  %v555 = vadd.f32 %v410, %v554
  %v556 = vpop.f32.mrb[0].mxu0
  %557 = vdwg.mxu0
  %v558 = vmax.f32 %v480, 0.0
  %v559 = vmax.f32 %v485, 0.0
  %v560 = vmax.f32 %v490, 0.0
  %v561 = vmax.f32 %v495, 0.0
  %v562 = vmax.f32 %v500, 0.0
  %v563 = vmax.f32 %v505, 0.0
  %v564 = vmax.f32 %v510, 0.0
  %v565 = vmax.f32 %v515, 0.0
  %v566 = vmax.f32 %v520, 0.0
  %v567 = vmax.f32 %v525, 0.0
  %v568 = vmax.f32 %v530, 0.0
  %v569 = vmax.f32 %v535, 0.0
  %v570 = vmax.f32 %v540, 0.0
  %v571 = vmax.f32 %v545, 0.0
  %v572 = vmax.f32 %v550, 0.0
  %v573 = vmax.f32 %v555, 0.0
  %v574 = vld [vmem:[%s5] sm:$0xff]
  %v575 = vld [vmem:[%s5 + $0x8] sm:$0xff]
  %v576 = vld [vmem:[%s5 + $0x10] sm:$0xff]
  %v577 = vld [vmem:[%s5 + $0x18] sm:$0xff]
  %v578 = vld [vmem:[%s5 + $0x20] sm:$0xff]
  %v579 = vld [vmem:[%s5 + $0x28] sm:$0xff]
  %v580 = vld [vmem:[%s5 + $0x30] sm:$0xff]
  %v581 = vld [vmem:[%s5 + $0x38] sm:$0xff]
  %v582 = vld [vmem:[%s5 + $0x40] sm:$0xff]
  %v583 = vld [vmem:[%s5 + $0x48] sm:$0xff]
  %v584 = vld [vmem:[%s5 + $0x50] sm:$0xff]
  %v585 = vld [vmem:[%s5 + $0x58] sm:$0xff]
  %v586 = vld [vmem:[%s5 + $0x60] sm:$0xff]
  %v587 = vld [vmem:[%s5 + $0x68] sm:$0xff]
  %v588 = vld [vmem:[%s5 + $0x70] sm:$0xff]
  %v589 = vld [vmem:[%s5 + $0x78] sm:$0xff]
  %v590 = vld [vmem:[%s4] sm:$0xff]
  %v591 = vld [vmem:[%s4 + $0x8] sm:$0xff]
  %v592 = vld [vmem:[%s4 + $0x10] sm:$0xff]
  %v593 = vld [vmem:[%s4 + $0x18] sm:$0xff]
  %v594 = vld [vmem:[%s4 + $0x20] sm:$0xff]
  %v595 = vld [vmem:[%s4 + $0x28] sm:$0xff]
  %v596 = vld [vmem:[%s4 + $0x30] sm:$0xff]
  %v597 = vld [vmem:[%s4 + $0x38] sm:$0xff]
  %v598 = vld [vmem:[%s4 + $0x40] sm:$0xff]
  %v599 = vld [vmem:[%s4 + $0x48] sm:$0xff]
  %v600 = vld [vmem:[%s4 + $0x50] sm:$0xff]
  %v601 = vld [vmem:[%s4 + $0x58] sm:$0xff]
  %v602 = vld [vmem:[%s4 + $0x60] sm:$0xff]
  %v603 = vld [vmem:[%s4 + $0x68] sm:$0xff]
  %v604 = vld [vmem:[%s4 + $0x70] sm:$0xff]
  %v605 = vld [vmem:[%s4 + $0x78] sm:$0xff]
  %606 = vmatprep.subr.mxu0 0.0
  %607 = vmatpush1.msra.mxu0 %v590
  %608 = vmatprep.subr.mxu0 0.0
  %609 = vmatpush1.msra.mxu0 %v591
  %610 = vmatprep.subr.mxu0 0.0
  %611 = vmatpush1.msra.mxu0 %v592
  %612 = vmatprep.subr.mxu0 0.0
  %613 = vmatpush1.msra.mxu0 %v593
  %614 = vmatprep.subr.mxu0 0.0
  %615 = vmatpush1.msra.mxu0 %v594
  %616 = vmatprep.subr.mxu0 0.0
  %617 = vmatpush1.msra.mxu0 %v595
  %618 = vmatprep.subr.mxu0 0.0
  %619 = vmatpush1.msra.mxu0 %v596
  %620 = vmatprep.subr.mxu0 0.0
  %621 = vmatpush1.msra.mxu0 %v597
  %622 = vmatprep.subr.mxu0 0.0
  %623 = vmatpush1.msra.mxu0 %v598
  %624 = vmatprep.subr.mxu0 0.0
  %625 = vmatpush1.msra.mxu0 %v599
  %626 = vmatprep.subr.mxu0 0.0
  %627 = vmatpush1.msra.mxu0 %v600
  %628 = vmatprep.subr.mxu0 0.0
  %629 = vmatpush1.msra.mxu0 %v601
  %630 = vmatprep.subr.mxu0 0.0
  %631 = vmatpush1.msra.mxu0 %v602
  %632 = vmatprep.subr.mxu0 0.0
  %633 = vmatpush1.msra.mxu0 %v603
  %634 = vmatprep.subr.mxu0 0.0
  %635 = vmatpush1.msra.mxu0 %v604
  %636 = vmatprep.subr.mxu0 0.0
  %637 = vmatpush1.msra.mxu0 %v605
  %638 = vmatprep.subr.mxu0 0.0
  %639 = vmatpush1.msra.mxu0 0.0
  %640 = vmatprep.subr.mxu0 0.0
  %641 = vmatpush1.msra.mxu0 0.0
  %642 = vmatprep.subr.mxu0 0.0
  %643 = vmatpush1.msra.mxu0 0.0
  %644 = vmatprep.subr.mxu0 0.0
  %645 = vmatpush1.msra.mxu0 0.0
  %646 = vmatprep.subr.mxu0 0.0
  %647 = vmatpush1.msra.mxu0 0.0
  %648 = vmatprep.subr.mxu0 0.0
  %649 = vmatpush1.msra.mxu0 0.0
  %650 = vmatprep.subr.mxu0 0.0
  %651 = vmatpush1.msra.mxu0 0.0
  %652 = vmatprep.subr.mxu0 0.0
  %653 = vmatpush1.msra.mxu0 0.0
  %654 = vmatprep.subr.mxu0 0.0
  %655 = vmatpush1.msra.mxu0 0.0
  %656 = vmatprep.subr.mxu0 0.0
  %657 = vmatpush1.msra.mxu0 0.0
  %658 = vmatprep.subr.mxu0 0.0
  %659 = vmatpush1.msra.mxu0 0.0
  %660 = vmatprep.subr.mxu0 0.0
  %661 = vmatpush1.msra.mxu0 0.0
  %662 = vmatprep.subr.mxu0 0.0
  %663 = vmatpush1.msra.mxu0 0.0
  %664 = vmatprep.subr.mxu0 0.0
  %665 = vmatpush1.msra.mxu0 0.0
  %666 = vmatprep.subr.mxu0 0.0
  %667 = vmatpush1.msra.mxu0 0.0
  %668 = vmatprep.subr.mxu0 0.0
  %669 = vmatpush1.msra.mxu0 0.0
  %670 = vmatprep.mubr.f32.mxu0 0.0
  %671 = vmatmul.mubr.f32.gmra.mrb[0].mxu0 %v558
  %v672 = vpop.f32.mrb[0].mxu0
  %v673 = vadd.f32 0.0, %v672
  %v674 = vpop.f32.mrb[0].mxu0
  %675 = vmatprep.mubr.f32.mxu0 0.0
  %676 = vmatmul.mubr.f32.gmra.mrb[0].mxu0 %v559
  %v677 = vpop.f32.mrb[0].mxu0
  %v678 = vadd.f32 0.0, %v677
  %v679 = vpop.f32.mrb[0].mxu0
  %680 = vmatprep.mubr.f32.mxu0 0.0
  %681 = vmatmul.mubr.f32.gmra.mrb[0].mxu0 %v560
  %v682 = vpop.f32.mrb[0].mxu0
  %v683 = vadd.f32 0.0, %v682
  %v684 = vpop.f32.mrb[0].mxu0
  %685 = vmatprep.mubr.f32.mxu0 0.0
  %686 = vmatmul.mubr.f32.gmra.mrb[0].mxu0 %v561
  %v687 = vpop.f32.mrb[0].mxu0
  %v688 = vadd.f32 0.0, %v687
  %v689 = vpop.f32.mrb[0].mxu0
  %690 = vmatprep.mubr.f32.mxu0 0.0
  %691 = vmatmul.mubr.f32.gmra.mrb[0].mxu0 %v562
  %v692 = vpop.f32.mrb[0].mxu0
  %v693 = vadd.f32 0.0, %v692
  %v694 = vpop.f32.mrb[0].mxu0
  %695 = vmatprep.mubr.f32.mxu0 0.0
  %696 = vmatmul.mubr.f32.gmra.mrb[0].mxu0 %v563
  %v697 = vpop.f32.mrb[0].mxu0
  %v698 = vadd.f32 0.0, %v697
  %v699 = vpop.f32.mrb[0].mxu0
  %700 = vmatprep.mubr.f32.mxu0 0.0
  %701 = vmatmul.mubr.f32.gmra.mrb[0].mxu0 %v564
  %v702 = vpop.f32.mrb[0].mxu0
  %v703 = vadd.f32 0.0, %v702
  %v704 = vpop.f32.mrb[0].mxu0
  %705 = vmatprep.mubr.f32.mxu0 0.0
  %706 = vmatmul.mubr.f32.gmra.mrb[0].mxu0 %v565
  %v707 = vpop.f32.mrb[0].mxu0
  %v708 = vadd.f32 0.0, %v707
  %v709 = vpop.f32.mrb[0].mxu0
  %710 = vmatprep.mubr.f32.mxu0 0.0
  %711 = vmatmul.mubr.f32.gmra.mrb[0].mxu0 %v566
  %v712 = vpop.f32.mrb[0].mxu0
  %v713 = vadd.f32 0.0, %v712
  %v714 = vpop.f32.mrb[0].mxu0
  %715 = vmatprep.mubr.f32.mxu0 0.0
  %716 = vmatmul.mubr.f32.gmra.mrb[0].mxu0 %v567
  %v717 = vpop.f32.mrb[0].mxu0
  %v718 = vadd.f32 0.0, %v717
  %v719 = vpop.f32.mrb[0].mxu0
  %720 = vmatprep.mubr.f32.mxu0 0.0
  %721 = vmatmul.mubr.f32.gmra.mrb[0].mxu0 %v568
  %v722 = vpop.f32.mrb[0].mxu0
  %v723 = vadd.f32 0.0, %v722
  %v724 = vpop.f32.mrb[0].mxu0
  %725 = vmatprep.mubr.f32.mxu0 0.0
  %726 = vmatmul.mubr.f32.gmra.mrb[0].mxu0 %v569
  %v727 = vpop.f32.mrb[0].mxu0
  %v728 = vadd.f32 0.0, %v727
  %v729 = vpop.f32.mrb[0].mxu0
  %730 = vmatprep.mubr.f32.mxu0 0.0
  %731 = vmatmul.mubr.f32.gmra.mrb[0].mxu0 %v570
  %v732 = vpop.f32.mrb[0].mxu0
  %v733 = vadd.f32 0.0, %v732
  %v734 = vpop.f32.mrb[0].mxu0
  %735 = vmatprep.mubr.f32.mxu0 0.0
  %736 = vmatmul.mubr.f32.gmra.mrb[0].mxu0 %v571
  %v737 = vpop.f32.mrb[0].mxu0
  %v738 = vadd.f32 0.0, %v737
  %v739 = vpop.f32.mrb[0].mxu0
  %740 = vmatprep.mubr.f32.mxu0 0.0
  %741 = vmatmul.mubr.f32.gmra.mrb[0].mxu0 %v572
  %v742 = vpop.f32.mrb[0].mxu0
  %v743 = vadd.f32 0.0, %v742
  %v744 = vpop.f32.mrb[0].mxu0
  %745 = vmatprep.mubr.f32.mxu0 0.0
  %746 = vmatmul.mubr.f32.gmra.mrb[0].mxu0 %v573
  %v747 = vpop.f32.mrb[0].mxu0
  %v748 = vadd.f32 0.0, %v747
  %v749 = vpop.f32.mrb[0].mxu0
  %750 = vdwg.mxu0
  %751 = vmatprep.subr.mxu0 0.0
  %752 = vmatpush1.msra.mxu0 %v673
  %753 = vmatprep.subr.mxu0 0.0
  %754 = vmatpush1.msra.mxu0 %v678
  %755 = vmatprep.subr.mxu0 0.0
  %756 = vmatpush1.msra.mxu0 %v683
  %757 = vmatprep.subr.mxu0 0.0
  %758 = vmatpush1.msra.mxu0 %v688
  %759 = vmatprep.subr.mxu0 0.0
  %760 = vmatpush1.msra.mxu0 %v693
  %761 = vmatprep.subr.mxu0 0.0
  %762 = vmatpush1.msra.mxu0 %v698
  %763 = vmatprep.subr.mxu0 0.0
  %764 = vmatpush1.msra.mxu0 %v703
  %765 = vmatprep.subr.mxu0 0.0
  %766 = vmatpush1.msra.mxu0 %v708
  %767 = vmatprep.subr.mxu0 0.0
  %768 = vmatpush1.msra.mxu0 %v713
  %769 = vmatprep.subr.mxu0 0.0
  %770 = vmatpush1.msra.mxu0 %v718
  %771 = vmatprep.subr.mxu0 0.0
  %772 = vmatpush1.msra.mxu0 %v723
  %773 = vmatprep.subr.mxu0 0.0
  %774 = vmatpush1.msra.mxu0 %v728
  %775 = vmatprep.subr.mxu0 0.0
  %776 = vmatpush1.msra.mxu0 %v733
  %777 = vmatprep.subr.mxu0 0.0
  %778 = vmatpush1.msra.mxu0 %v738
  %779 = vmatprep.subr.mxu0 0.0
  %780 = vmatpush1.msra.mxu0 %v743
  %781 = vmatprep.subr.mxu0 0.0
  %782 = vmatpush1.msra.mxu0 %v748
  %783 = vmatprep.subr.mxu0 0.0
  %784 = vmatpush1.msra.mxu0 0.0
  %785 = vmatprep.subr.mxu0 0.0
  %786 = vmatpush1.msra.mxu0 0.0
  %787 = vmatprep.subr.mxu0 0.0
  %788 = vmatpush1.msra.mxu0 0.0
  %789 = vmatprep.subr.mxu0 0.0
  %790 = vmatpush1.msra.mxu0 0.0
  %791 = vmatprep.subr.mxu0 0.0
  %792 = vmatpush1.msra.mxu0 0.0
  %793 = vmatprep.subr.mxu0 0.0
  %794 = vmatpush1.msra.mxu0 0.0
  %795 = vmatprep.subr.mxu0 0.0
  %796 = vmatpush1.msra.mxu0 0.0
  %797 = vmatprep.subr.mxu0 0.0
  %798 = vmatpush1.msra.mxu0 0.0
  %799 = vmatprep.subr.mxu0 0.0
  %800 = vmatpush1.msra.mxu0 0.0
  %801 = vmatprep.subr.mxu0 0.0
  %802 = vmatpush1.msra.mxu0 0.0
  %803 = vmatprep.subr.mxu0 0.0
  %804 = vmatpush1.msra.mxu0 0.0
  %805 = vmatprep.subr.mxu0 0.0
  %806 = vmatpush1.msra.mxu0 0.0
  %807 = vmatprep.subr.mxu0 0.0
  %808 = vmatpush1.msra.mxu0 0.0
  %809 = vmatprep.subr.mxu0 0.0
  %810 = vmatpush1.msra.mxu0 0.0
  %811 = vmatprep.subr.mxu0 0.0
  %812 = vmatpush1.msra.mxu0 0.0
  %813 = vmatprep.subr.mxu0 0.0
  %814 = vmatpush1.msra.mxu0 0.0
  %815 = vmatprep.mubr.f32.mxu0 0.0
  %816 = vmatmul.mubr.f32.gmra.mrb[0].mxu0 %v574
  %v817 = vpop.f32.mrb[0].mxu0
  %v818 = vadd.f32 0.0, %v817
  %v819 = vpop.f32.mrb[0].mxu0
  %820 = vmatprep.mubr.f32.mxu0 0.0
  %821 = vmatmul.mubr.f32.gmra.mrb[0].mxu0 %v575
  %v822 = vpop.f32.mrb[0].mxu0
  %v823 = vadd.f32 0.0, %v822
  %v824 = vpop.f32.mrb[0].mxu0
  %825 = vmatprep.mubr.f32.mxu0 0.0
  %826 = vmatmul.mubr.f32.gmra.mrb[0].mxu0 %v576
  %v827 = vpop.f32.mrb[0].mxu0
  %v828 = vadd.f32 0.0, %v827
  %v829 = vpop.f32.mrb[0].mxu0
  %830 = vmatprep.mubr.f32.mxu0 0.0
  %831 = vmatmul.mubr.f32.gmra.mrb[0].mxu0 %v577
  %v832 = vpop.f32.mrb[0].mxu0
  %v833 = vadd.f32 0.0, %v832
  %v834 = vpop.f32.mrb[0].mxu0
  %835 = vmatprep.mubr.f32.mxu0 0.0
  %836 = vmatmul.mubr.f32.gmra.mrb[0].mxu0 %v578
  %v837 = vpop.f32.mrb[0].mxu0
  %v838 = vadd.f32 0.0, %v837
  %v839 = vpop.f32.mrb[0].mxu0
  %840 = vmatprep.mubr.f32.mxu0 0.0
  %841 = vmatmul.mubr.f32.gmra.mrb[0].mxu0 %v579
  %v842 = vpop.f32.mrb[0].mxu0
  %v843 = vadd.f32 0.0, %v842
  %v844 = vpop.f32.mrb[0].mxu0
  %845 = vmatprep.mubr.f32.mxu0 0.0
  %846 = vmatmul.mubr.f32.gmra.mrb[0].mxu0 %v580
  %v847 = vpop.f32.mrb[0].mxu0
  %v848 = vadd.f32 0.0, %v847
  %v849 = vpop.f32.mrb[0].mxu0
  %850 = vmatprep.mubr.f32.mxu0 0.0
  %851 = vmatmul.mubr.f32.gmra.mrb[0].mxu0 %v581
  %v852 = vpop.f32.mrb[0].mxu0
  %v853 = vadd.f32 0.0, %v852
  %v854 = vpop.f32.mrb[0].mxu0
  %855 = vmatprep.mubr.f32.mxu0 0.0
  %856 = vmatmul.mubr.f32.gmra.mrb[0].mxu0 %v582
  %v857 = vpop.f32.mrb[0].mxu0
  %v858 = vadd.f32 0.0, %v857
  %v859 = vpop.f32.mrb[0].mxu0
  %860 = vmatprep.mubr.f32.mxu0 0.0
  %861 = vmatmul.mubr.f32.gmra.mrb[0].mxu0 %v583
  %v862 = vpop.f32.mrb[0].mxu0
  %v863 = vadd.f32 0.0, %v862
  %v864 = vpop.f32.mrb[0].mxu0
  %865 = vmatprep.mubr.f32.mxu0 0.0
  %866 = vmatmul.mubr.f32.gmra.mrb[0].mxu0 %v584
  %v867 = vpop.f32.mrb[0].mxu0
  %v868 = vadd.f32 0.0, %v867
  %v869 = vpop.f32.mrb[0].mxu0
  %870 = vmatprep.mubr.f32.mxu0 0.0
  %871 = vmatmul.mubr.f32.gmra.mrb[0].mxu0 %v585
  %v872 = vpop.f32.mrb[0].mxu0
  %v873 = vadd.f32 0.0, %v872
  %v874 = vpop.f32.mrb[0].mxu0
  %875 = vmatprep.mubr.f32.mxu0 0.0
  %876 = vmatmul.mubr.f32.gmra.mrb[0].mxu0 %v586
  %v877 = vpop.f32.mrb[0].mxu0
  %v878 = vadd.f32 0.0, %v877
  %v879 = vpop.f32.mrb[0].mxu0
  %880 = vmatprep.mubr.f32.mxu0 0.0
  %881 = vmatmul.mubr.f32.gmra.mrb[0].mxu0 %v587
  %v882 = vpop.f32.mrb[0].mxu0
  %v883 = vadd.f32 0.0, %v882
  %v884 = vpop.f32.mrb[0].mxu0
  %885 = vmatprep.mubr.f32.mxu0 0.0
  %886 = vmatmul.mubr.f32.gmra.mrb[0].mxu0 %v588
  %v887 = vpop.f32.mrb[0].mxu0
  %v888 = vadd.f32 0.0, %v887
  %v889 = vpop.f32.mrb[0].mxu0
  %890 = vmatprep.mubr.f32.mxu0 0.0
  %891 = vmatmul.mubr.f32.gmra.mrb[0].mxu0 %v589
  %v892 = vpop.f32.mrb[0].mxu0
  %v893 = vadd.f32 0.0, %v892
  %v894 = vpop.f32.mrb[0].mxu0
  %895 = vdwg.mxu0
  %v896 = vmul.f32 %v818, 0.0006802721
  %v897 = vmul.f32 %v823, 0.0006802721
  %v898 = vmul.f32 %v828, 0.0006802721
  %v899 = vmul.f32 %v833, 0.0006802721
  %v900 = vmul.f32 %v838, 0.0006802721
  %v901 = vmul.f32 %v843, 0.0006802721
  %v902 = vmul.f32 %v848, 0.0006802721
  %v903 = vmul.f32 %v853, 0.0006802721
  %v904 = vmul.f32 %v858, 0.0006802721
  %v905 = vmul.f32 %v863, 0.0006802721
  %v906 = vmul.f32 %v868, 0.0006802721
  %v907 = vmul.f32 %v873, 0.0006802721
  %v908 = vmul.f32 %v878, 0.0006802721
  %v909 = vmul.f32 %v883, 0.0006802721
  %v910 = vmul.f32 %v888, 0.0006802721
  %v911 = vmul.f32 %v893, 0.0006802721
  %v912 = vsub.f32 %v558, %v896
  %v913 = vsub.f32 %v559, %v897
  %v914 = vsub.f32 %v560, %v898
  %v915 = vsub.f32 %v561, %v899
  %v916 = vsub.f32 %v562, %v900
  %v917 = vsub.f32 %v563, %v901
  %v918 = vsub.f32 %v564, %v902
  %v919 = vsub.f32 %v565, %v903
  %v920 = vsub.f32 %v566, %v904
  %v921 = vsub.f32 %v567, %v905
  %v922 = vsub.f32 %v568, %v906
  %v923 = vsub.f32 %v569, %v907
  %v924 = vsub.f32 %v570, %v908
  %v925 = vsub.f32 %v571, %v909
  %v926 = vsub.f32 %v572, %v910
  %v927 = vsub.f32 %v573, %v911
  %v928 = vmul.f32 %v912, %v912
  %v929 = vmul.f32 %v913, %v913
  %v930 = vmul.f32 %v914, %v914
  %v931 = vmul.f32 %v915, %v915
  %v932 = vmul.f32 %v916, %v916
  %v933 = vmul.f32 %v917, %v917
  %v934 = vmul.f32 %v918, %v918
  %v935 = vmul.f32 %v919, %v919
  %v936 = vmul.f32 %v920, %v920
  %v937 = vmul.f32 %v921, %v921
  %v938 = vmul.f32 %v922, %v922
  %v939 = vmul.f32 %v923, %v923
  %v940 = vmul.f32 %v924, %v924
  %v941 = vmul.f32 %v925, %v925
  %v942 = vmul.f32 %v926, %v926
  %v943 = vmul.f32 %v927, %v927
  %944 = vmatprep.subr.mxu0 0.0
  %945 = vmatpush1.msra.mxu0 %v590
  %946 = vmatprep.subr.mxu0 0.0
  %947 = vmatpush1.msra.mxu0 %v591
  %948 = vmatprep.subr.mxu0 0.0
  %949 = vmatpush1.msra.mxu0 %v592
  %950 = vmatprep.subr.mxu0 0.0
  %951 = vmatpush1.msra.mxu0 %v593
  %952 = vmatprep.subr.mxu0 0.0
  %953 = vmatpush1.msra.mxu0 %v594
  %954 = vmatprep.subr.mxu0 0.0
  %955 = vmatpush1.msra.mxu0 %v595
  %956 = vmatprep.subr.mxu0 0.0
  %957 = vmatpush1.msra.mxu0 %v596
  %958 = vmatprep.subr.mxu0 0.0
  %959 = vmatpush1.msra.mxu0 %v597
  %960 = vmatprep.subr.mxu0 0.0
  %961 = vmatpush1.msra.mxu0 %v598
  %962 = vmatprep.subr.mxu0 0.0
  %963 = vmatpush1.msra.mxu0 %v599
  %964 = vmatprep.subr.mxu0 0.0
  %965 = vmatpush1.msra.mxu0 %v600
  %966 = vmatprep.subr.mxu0 0.0
  %967 = vmatpush1.msra.mxu0 %v601
  %968 = vmatprep.subr.mxu0 0.0
  %969 = vmatpush1.msra.mxu0 %v602
  %970 = vmatprep.subr.mxu0 0.0
  %971 = vmatpush1.msra.mxu0 %v603
  %972 = vmatprep.subr.mxu0 0.0
  %973 = vmatpush1.msra.mxu0 %v604
  %974 = vmatprep.subr.mxu0 0.0
  %975 = vmatpush1.msra.mxu0 %v605
  %976 = vmatprep.subr.mxu0 0.0
  %977 = vmatpush1.msra.mxu0 0.0
  %978 = vmatprep.subr.mxu0 0.0
  %979 = vmatpush1.msra.mxu0 0.0
  %980 = vmatprep.subr.mxu0 0.0
  %981 = vmatpush1.msra.mxu0 0.0
  %982 = vmatprep.subr.mxu0 0.0
  %983 = vmatpush1.msra.mxu0 0.0
  %984 = vmatprep.subr.mxu0 0.0
  %985 = vmatpush1.msra.mxu0 0.0
  %986 = vmatprep.subr.mxu0 0.0
  %987 = vmatpush1.msra.mxu0 0.0
  %988 = vmatprep.subr.mxu0 0.0
  %989 = vmatpush1.msra.mxu0 0.0
  %990 = vmatprep.subr.mxu0 0.0
  %991 = vmatpush1.msra.mxu0 0.0
  %992 = vmatprep.subr.mxu0 0.0
  %993 = vmatpush1.msra.mxu0 0.0
  %994 = vmatprep.subr.mxu0 0.0
  %995 = vmatpush1.msra.mxu0 0.0
  %996 = vmatprep.subr.mxu0 0.0
  %997 = vmatpush1.msra.mxu0 0.0
  %998 = vmatprep.subr.mxu0 0.0
  %999 = vmatpush1.msra.mxu0 0.0
  %1000 = vmatprep.subr.mxu0 0.0
  %1001 = vmatpush1.msra.mxu0 0.0
  %1002 = vmatprep.subr.mxu0 0.0
  %1003 = vmatpush1.msra.mxu0 0.0
  %1004 = vmatprep.subr.mxu0 0.0
  %1005 = vmatpush1.msra.mxu0 0.0
  %1006 = vmatprep.subr.mxu0 0.0
  %1007 = vmatpush1.msra.mxu0 0.0
  %1008 = vmatprep.mubr.f32.mxu0 0.0
  %1009 = vmatmul.mubr.f32.gmra.mrb[0].mxu0 %v928
  %v1010 = vpop.f32.mrb[0].mxu0
  %v1011 = vadd.f32 0.0, %v1010
  %v1012 = vpop.f32.mrb[0].mxu0
  %1013 = vmatprep.mubr.f32.mxu0 0.0
  %1014 = vmatmul.mubr.f32.gmra.mrb[0].mxu0 %v929
  %v1015 = vpop.f32.mrb[0].mxu0
  %v1016 = vadd.f32 0.0, %v1015
  %v1017 = vpop.f32.mrb[0].mxu0
  %1018 = vmatprep.mubr.f32.mxu0 0.0
  %1019 = vmatmul.mubr.f32.gmra.mrb[0].mxu0 %v930
  %v1020 = vpop.f32.mrb[0].mxu0
  %v1021 = vadd.f32 0.0, %v1020
  %v1022 = vpop.f32.mrb[0].mxu0
  %1023 = vmatprep.mubr.f32.mxu0 0.0
  %1024 = vmatmul.mubr.f32.gmra.mrb[0].mxu0 %v931
  %v1025 = vpop.f32.mrb[0].mxu0
  %v1026 = vadd.f32 0.0, %v1025
  %v1027 = vpop.f32.mrb[0].mxu0
  %1028 = vmatprep.mubr.f32.mxu0 0.0
  %1029 = vmatmul.mubr.f32.gmra.mrb[0].mxu0 %v932
  %v1030 = vpop.f32.mrb[0].mxu0
  %v1031 = vadd.f32 0.0, %v1030
  %v1032 = vpop.f32.mrb[0].mxu0
  %1033 = vmatprep.mubr.f32.mxu0 0.0
  %1034 = vmatmul.mubr.f32.gmra.mrb[0].mxu0 %v933
  %v1035 = vpop.f32.mrb[0].mxu0
  %v1036 = vadd.f32 0.0, %v1035
  %v1037 = vpop.f32.mrb[0].mxu0
  %1038 = vmatprep.mubr.f32.mxu0 0.0
  %1039 = vmatmul.mubr.f32.gmra.mrb[0].mxu0 %v934
  %v1040 = vpop.f32.mrb[0].mxu0
  %v1041 = vadd.f32 0.0, %v1040
  %v1042 = vpop.f32.mrb[0].mxu0
  %1043 = vmatprep.mubr.f32.mxu0 0.0
  %1044 = vmatmul.mubr.f32.gmra.mrb[0].mxu0 %v935
  %v1045 = vpop.f32.mrb[0].mxu0
  %v1046 = vadd.f32 0.0, %v1045
  %v1047 = vpop.f32.mrb[0].mxu0
  %1048 = vmatprep.mubr.f32.mxu0 0.0
  %1049 = vmatmul.mubr.f32.gmra.mrb[0].mxu0 %v936
  %v1050 = vpop.f32.mrb[0].mxu0
  %v1051 = vadd.f32 0.0, %v1050
  %v1052 = vpop.f32.mrb[0].mxu0
  %1053 = vmatprep.mubr.f32.mxu0 0.0
  %1054 = vmatmul.mubr.f32.gmra.mrb[0].mxu0 %v937
  %v1055 = vpop.f32.mrb[0].mxu0
  %v1056 = vadd.f32 0.0, %v1055
  %v1057 = vpop.f32.mrb[0].mxu0
  %1058 = vmatprep.mubr.f32.mxu0 0.0
  %1059 = vmatmul.mubr.f32.gmra.mrb[0].mxu0 %v938
  %v1060 = vpop.f32.mrb[0].mxu0
  %v1061 = vadd.f32 0.0, %v1060
  %v1062 = vpop.f32.mrb[0].mxu0
  %1063 = vmatprep.mubr.f32.mxu0 0.0
  %1064 = vmatmul.mubr.f32.gmra.mrb[0].mxu0 %v939
  %v1065 = vpop.f32.mrb[0].mxu0
  %v1066 = vadd.f32 0.0, %v1065
  %v1067 = vpop.f32.mrb[0].mxu0
  %1068 = vmatprep.mubr.f32.mxu0 0.0
  %1069 = vmatmul.mubr.f32.gmra.mrb[0].mxu0 %v940
  %v1070 = vpop.f32.mrb[0].mxu0
  %v1071 = vadd.f32 0.0, %v1070
  %v1072 = vpop.f32.mrb[0].mxu0
  %1073 = vmatprep.mubr.f32.mxu0 0.0
  %1074 = vmatmul.mubr.f32.gmra.mrb[0].mxu0 %v941
  %v1075 = vpop.f32.mrb[0].mxu0
  %v1076 = vadd.f32 0.0, %v1075
  %v1077 = vpop.f32.mrb[0].mxu0
  %1078 = vmatprep.mubr.f32.mxu0 0.0
  %1079 = vmatmul.mubr.f32.gmra.mrb[0].mxu0 %v942
  %v1080 = vpop.f32.mrb[0].mxu0
  %v1081 = vadd.f32 0.0, %v1080
  %v1082 = vpop.f32.mrb[0].mxu0
  %1083 = vmatprep.mubr.f32.mxu0 0.0
  %1084 = vmatmul.mubr.f32.gmra.mrb[0].mxu0 %v943
  %v1085 = vpop.f32.mrb[0].mxu0
  %v1086 = vadd.f32 0.0, %v1085
  %v1087 = vpop.f32.mrb[0].mxu0
  %1088 = vdwg.mxu0
  %1089 = vmatprep.subr.mxu0 0.0
  %1090 = vmatpush1.msra.mxu0 %v1011
  %1091 = vmatprep.subr.mxu0 0.0
  %1092 = vmatpush1.msra.mxu0 %v1016
  %1093 = vmatprep.subr.mxu0 0.0
  %1094 = vmatpush1.msra.mxu0 %v1021
  %1095 = vmatprep.subr.mxu0 0.0
  %1096 = vmatpush1.msra.mxu0 %v1026
  %1097 = vmatprep.subr.mxu0 0.0
  %1098 = vmatpush1.msra.mxu0 %v1031
  %1099 = vmatprep.subr.mxu0 0.0
  %1100 = vmatpush1.msra.mxu0 %v1036
  %1101 = vmatprep.subr.mxu0 0.0
  %1102 = vmatpush1.msra.mxu0 %v1041
  %1103 = vmatprep.subr.mxu0 0.0
  %1104 = vmatpush1.msra.mxu0 %v1046
  %1105 = vmatprep.subr.mxu0 0.0
  %1106 = vmatpush1.msra.mxu0 %v1051
  %1107 = vmatprep.subr.mxu0 0.0
  %1108 = vmatpush1.msra.mxu0 %v1056
  %1109 = vmatprep.subr.mxu0 0.0
  %1110 = vmatpush1.msra.mxu0 %v1061
  %1111 = vmatprep.subr.mxu0 0.0
  %1112 = vmatpush1.msra.mxu0 %v1066
  %1113 = vmatprep.subr.mxu0 0.0
  %1114 = vmatpush1.msra.mxu0 %v1071
  %1115 = vmatprep.subr.mxu0 0.0
  %1116 = vmatpush1.msra.mxu0 %v1076
  %1117 = vmatprep.subr.mxu0 0.0
  %1118 = vmatpush1.msra.mxu0 %v1081
  %1119 = vmatprep.subr.mxu0 0.0
  %1120 = vmatpush1.msra.mxu0 %v1086
  %1121 = vmatprep.subr.mxu0 0.0
  %1122 = vmatpush1.msra.mxu0 0.0
  %1123 = vmatprep.subr.mxu0 0.0
  %1124 = vmatpush1.msra.mxu0 0.0
  %1125 = vmatprep.subr.mxu0 0.0
  %1126 = vmatpush1.msra.mxu0 0.0
  %1127 = vmatprep.subr.mxu0 0.0
  %1128 = vmatpush1.msra.mxu0 0.0
  %1129 = vmatprep.subr.mxu0 0.0
  %1130 = vmatpush1.msra.mxu0 0.0
  %1131 = vmatprep.subr.mxu0 0.0
  %1132 = vmatpush1.msra.mxu0 0.0
  %1133 = vmatprep.subr.mxu0 0.0
  %1134 = vmatpush1.msra.mxu0 0.0
  %1135 = vmatprep.subr.mxu0 0.0
  %1136 = vmatpush1.msra.mxu0 0.0
  %1137 = vmatprep.subr.mxu0 0.0
  %1138 = vmatpush1.msra.mxu0 0.0
  %1139 = vmatprep.subr.mxu0 0.0
  %1140 = vmatpush1.msra.mxu0 0.0
  %1141 = vmatprep.subr.mxu0 0.0
  %1142 = vmatpush1.msra.mxu0 0.0
  %1143 = vmatprep.subr.mxu0 0.0
  %1144 = vmatpush1.msra.mxu0 0.0
  %1145 = vmatprep.subr.mxu0 0.0
  %1146 = vmatpush1.msra.mxu0 0.0
  %1147 = vmatprep.subr.mxu0 0.0
  %1148 = vmatpush1.msra.mxu0 0.0
  %1149 = vmatprep.subr.mxu0 0.0
  %1150 = vmatpush1.msra.mxu0 0.0
  %1151 = vmatprep.subr.mxu0 0.0
  %1152 = vmatpush1.msra.mxu0 0.0
  %1153 = vmatprep.mubr.f32.mxu0 0.0
  %1154 = vmatmul.mubr.f32.gmra.mrb[0].mxu0 %v574
  %v1155 = vpop.f32.mrb[0].mxu0
  %v1156 = vadd.f32 0.0, %v1155
  %v1157 = vpop.f32.mrb[0].mxu0
  %1158 = vmatprep.mubr.f32.mxu0 0.0
  %1159 = vmatmul.mubr.f32.gmra.mrb[0].mxu0 %v575
  %v1160 = vpop.f32.mrb[0].mxu0
  %v1161 = vadd.f32 0.0, %v1160
  %v1162 = vpop.f32.mrb[0].mxu0
  %1163 = vmatprep.mubr.f32.mxu0 0.0
  %1164 = vmatmul.mubr.f32.gmra.mrb[0].mxu0 %v576
  %v1165 = vpop.f32.mrb[0].mxu0
  %v1166 = vadd.f32 0.0, %v1165
  %v1167 = vpop.f32.mrb[0].mxu0
  %1168 = vmatprep.mubr.f32.mxu0 0.0
  %1169 = vmatmul.mubr.f32.gmra.mrb[0].mxu0 %v577
  %v1170 = vpop.f32.mrb[0].mxu0
  %v1171 = vadd.f32 0.0, %v1170
  %v1172 = vpop.f32.mrb[0].mxu0
  %1173 = vmatprep.mubr.f32.mxu0 0.0
  %1174 = vmatmul.mubr.f32.gmra.mrb[0].mxu0 %v578
  %v1175 = vpop.f32.mrb[0].mxu0
  %v1176 = vadd.f32 0.0, %v1175
  %v1177 = vpop.f32.mrb[0].mxu0
  %1178 = vmatprep.mubr.f32.mxu0 0.0
  %1179 = vmatmul.mubr.f32.gmra.mrb[0].mxu0 %v579
  %v1180 = vpop.f32.mrb[0].mxu0
  %v1181 = vadd.f32 0.0, %v1180
  %v1182 = vpop.f32.mrb[0].mxu0
  %1183 = vmatprep.mubr.f32.mxu0 0.0
  %1184 = vmatmul.mubr.f32.gmra.mrb[0].mxu0 %v580
  %v1185 = vpop.f32.mrb[0].mxu0
  %v1186 = vadd.f32 0.0, %v1185
  %v1187 = vpop.f32.mrb[0].mxu0
  %1188 = vmatprep.mubr.f32.mxu0 0.0
  %1189 = vmatmul.mubr.f32.gmra.mrb[0].mxu0 %v581
  %v1190 = vpop.f32.mrb[0].mxu0
  %v1191 = vadd.f32 0.0, %v1190
  %v1192 = vpop.f32.mrb[0].mxu0
  %1193 = vmatprep.mubr.f32.mxu0 0.0
  %1194 = vmatmul.mubr.f32.gmra.mrb[0].mxu0 %v582
  %v1195 = vpop.f32.mrb[0].mxu0
  %v1196 = vadd.f32 0.0, %v1195
  %v1197 = vpop.f32.mrb[0].mxu0
  %1198 = vmatprep.mubr.f32.mxu0 0.0
  %1199 = vmatmul.mubr.f32.gmra.mrb[0].mxu0 %v583
  %v1200 = vpop.f32.mrb[0].mxu0
  %v1201 = vadd.f32 0.0, %v1200
  %v1202 = vpop.f32.mrb[0].mxu0
  %1203 = vmatprep.mubr.f32.mxu0 0.0
  %1204 = vmatmul.mubr.f32.gmra.mrb[0].mxu0 %v584
  %v1205 = vpop.f32.mrb[0].mxu0
  %v1206 = vadd.f32 0.0, %v1205
  %v1207 = vpop.f32.mrb[0].mxu0
  %1208 = vmatprep.mubr.f32.mxu0 0.0
  %1209 = vmatmul.mubr.f32.gmra.mrb[0].mxu0 %v585
  %v1210 = vpop.f32.mrb[0].mxu0
  %v1211 = vadd.f32 0.0, %v1210
  %v1212 = vpop.f32.mrb[0].mxu0
  %1213 = vmatprep.mubr.f32.mxu0 0.0
  %1214 = vmatmul.mubr.f32.gmra.mrb[0].mxu0 %v586
  %v1215 = vpop.f32.mrb[0].mxu0
  %v1216 = vadd.f32 0.0, %v1215
  %v1217 = vpop.f32.mrb[0].mxu0
  %1218 = vmatprep.mubr.f32.mxu0 0.0
  %1219 = vmatmul.mubr.f32.gmra.mrb[0].mxu0 %v587
  %v1220 = vpop.f32.mrb[0].mxu0
  %v1221 = vadd.f32 0.0, %v1220
  %v1222 = vpop.f32.mrb[0].mxu0
  %1223 = vmatprep.mubr.f32.mxu0 0.0
  %1224 = vmatmul.mubr.f32.gmra.mrb[0].mxu0 %v588
  %v1225 = vpop.f32.mrb[0].mxu0
  %v1226 = vadd.f32 0.0, %v1225
  %v1227 = vpop.f32.mrb[0].mxu0
  %1228 = vmatprep.mubr.f32.mxu0 0.0
  %1229 = vmatmul.mubr.f32.gmra.mrb[0].mxu0 %v589
  %v1230 = vpop.f32.mrb[0].mxu0
  %v1231 = vadd.f32 0.0, %v1230
  %v1232 = vpop.f32.mrb[0].mxu0
  %1233 = vdwg.mxu0
  %v1234 = vmul.f32 %v1156, 0.0006807352
  %v1235 = vmul.f32 %v1161, 0.0006807352
  %v1236 = vmul.f32 %v1166, 0.0006807352
  %v1237 = vmul.f32 %v1171, 0.0006807352
  %v1238 = vmul.f32 %v1176, 0.0006807352
  %v1239 = vmul.f32 %v1181, 0.0006807352
  %v1240 = vmul.f32 %v1186, 0.0006807352
  %v1241 = vmul.f32 %v1191, 0.0006807352
  %v1242 = vmul.f32 %v1196, 0.0006807352
  %v1243 = vmul.f32 %v1201, 0.0006807352
  %v1244 = vmul.f32 %v1206, 0.0006807352
  %v1245 = vmul.f32 %v1211, 0.0006807352
  %v1246 = vmul.f32 %v1216, 0.0006807352
  %v1247 = vmul.f32 %v1221, 0.0006807352
  %v1248 = vmul.f32 %v1226, 0.0006807352
  %v1249 = vmul.f32 %v1231, 0.0006807352
  %v1250 = vld [vmem:[%s6] sm:$0xff]
  %v1251 = vld [vmem:[%s6 + $0x8] sm:$0xff]
  %v1252 = vld [vmem:[%s6 + $0x10] sm:$0xff]
  %v1253 = vld [vmem:[%s6 + $0x18] sm:$0xff]
  %v1254 = vld [vmem:[%s6 + $0x20] sm:$0xff]
  %v1255 = vld [vmem:[%s6 + $0x28] sm:$0xff]
  %v1256 = vld [vmem:[%s6 + $0x30] sm:$0xff]
  %v1257 = vld [vmem:[%s6 + $0x38] sm:$0xff]
  %v1258 = vld [vmem:[%s6 + $0x40] sm:$0xff]
  %v1259 = vld [vmem:[%s6 + $0x48] sm:$0xff]
  %v1260 = vld [vmem:[%s6 + $0x50] sm:$0xff]
  %v1261 = vld [vmem:[%s6 + $0x58] sm:$0xff]
  %v1262 = vld [vmem:[%s6 + $0x60] sm:$0xff]
  %v1263 = vld [vmem:[%s6 + $0x68] sm:$0xff]
  %v1264 = vld [vmem:[%s6 + $0x70] sm:$0xff]
  %v1265 = vld [vmem:[%s6 + $0x78] sm:$0xff]
  %1266 = vmatprep.subr.mxu0 0.0
  %1267 = vmatpush1.msra.mxu0 %v1250
  %1268 = vmatprep.subr.mxu0 0.0
  %1269 = vmatpush1.msra.mxu0 %v1251
  %1270 = vmatprep.subr.mxu0 0.0
  %1271 = vmatpush1.msra.mxu0 %v1252
  %1272 = vmatprep.subr.mxu0 0.0
  %1273 = vmatpush1.msra.mxu0 %v1253
  %1274 = vmatprep.subr.mxu0 0.0
  %1275 = vmatpush1.msra.mxu0 %v1254
  %1276 = vmatprep.subr.mxu0 0.0
  %1277 = vmatpush1.msra.mxu0 %v1255
  %1278 = vmatprep.subr.mxu0 0.0
  %1279 = vmatpush1.msra.mxu0 %v1256
  %1280 = vmatprep.subr.mxu0 0.0
  %1281 = vmatpush1.msra.mxu0 %v1257
  %1282 = vmatprep.subr.mxu0 0.0
  %1283 = vmatpush1.msra.mxu0 %v1258
  %1284 = vmatprep.subr.mxu0 0.0
  %1285 = vmatpush1.msra.mxu0 %v1259
  %1286 = vmatprep.subr.mxu0 0.0
  %1287 = vmatpush1.msra.mxu0 %v1260
  %1288 = vmatprep.subr.mxu0 0.0
  %1289 = vmatpush1.msra.mxu0 %v1261
  %1290 = vmatprep.subr.mxu0 0.0
  %1291 = vmatpush1.msra.mxu0 %v1262
  %1292 = vmatprep.subr.mxu0 0.0
  %1293 = vmatpush1.msra.mxu0 %v1263
  %1294 = vmatprep.subr.mxu0 0.0
  %1295 = vmatpush1.msra.mxu0 %v1264
  %1296 = vmatprep.subr.mxu0 0.0
  %1297 = vmatpush1.msra.mxu0 %v1265
  %1298 = vmatprep.subr.mxu0 0.0
  %1299 = vmatpush1.msra.mxu0 0.0
  %1300 = vmatprep.subr.mxu0 0.0
  %1301 = vmatpush1.msra.mxu0 0.0
  %1302 = vmatprep.subr.mxu0 0.0
  %1303 = vmatpush1.msra.mxu0 0.0
  %1304 = vmatprep.subr.mxu0 0.0
  %1305 = vmatpush1.msra.mxu0 0.0
  %1306 = vmatprep.subr.mxu0 0.0
  %1307 = vmatpush1.msra.mxu0 0.0
  %1308 = vmatprep.subr.mxu0 0.0
  %1309 = vmatpush1.msra.mxu0 0.0
  %1310 = vmatprep.subr.mxu0 0.0
  %1311 = vmatpush1.msra.mxu0 0.0
  %1312 = vmatprep.subr.mxu0 0.0
  %1313 = vmatpush1.msra.mxu0 0.0
  %1314 = vmatprep.subr.mxu0 0.0
  %1315 = vmatpush1.msra.mxu0 0.0
  %1316 = vmatprep.subr.mxu0 0.0
  %1317 = vmatpush1.msra.mxu0 0.0
  %1318 = vmatprep.subr.mxu0 0.0
  %1319 = vmatpush1.msra.mxu0 0.0
  %1320 = vmatprep.subr.mxu0 0.0
  %1321 = vmatpush1.msra.mxu0 0.0
  %1322 = vmatprep.subr.mxu0 0.0
  %1323 = vmatpush1.msra.mxu0 0.0
  %1324 = vmatprep.subr.mxu0 0.0
  %1325 = vmatpush1.msra.mxu0 0.0
  %1326 = vmatprep.subr.mxu0 0.0
  %1327 = vmatpush1.msra.mxu0 0.0
  %1328 = vmatprep.subr.mxu0 0.0
  %1329 = vmatpush1.msra.mxu0 0.0
  %1330 = vmatprep.mubr.f32.mxu0 0.0
  %1331 = vmatmul.mubr.f32.gmra.mrb[0].mxu0 %v896
  %v1332 = vpop.f32.mrb[0].mxu0
  %v1333 = vadd.f32 0.0, %v1332
  %v1334 = vpop.f32.mrb[0].mxu0
  %1335 = vmatprep.mubr.f32.mxu0 0.0
  %1336 = vmatmul.mubr.f32.gmra.mrb[0].mxu0 %v897
  %v1337 = vpop.f32.mrb[0].mxu0
  %v1338 = vadd.f32 0.0, %v1337
  %v1339 = vpop.f32.mrb[0].mxu0
  %1340 = vmatprep.mubr.f32.mxu0 0.0
  %1341 = vmatmul.mubr.f32.gmra.mrb[0].mxu0 %v898
  %v1342 = vpop.f32.mrb[0].mxu0
  %v1343 = vadd.f32 0.0, %v1342
  %v1344 = vpop.f32.mrb[0].mxu0
  %1345 = vmatprep.mubr.f32.mxu0 0.0
  %1346 = vmatmul.mubr.f32.gmra.mrb[0].mxu0 %v899
  %v1347 = vpop.f32.mrb[0].mxu0
  %v1348 = vadd.f32 0.0, %v1347
  %v1349 = vpop.f32.mrb[0].mxu0
  %1350 = vmatprep.mubr.f32.mxu0 0.0
  %1351 = vmatmul.mubr.f32.gmra.mrb[0].mxu0 %v900
  %v1352 = vpop.f32.mrb[0].mxu0
  %v1353 = vadd.f32 0.0, %v1352
  %v1354 = vpop.f32.mrb[0].mxu0
  %1355 = vmatprep.mubr.f32.mxu0 0.0
  %1356 = vmatmul.mubr.f32.gmra.mrb[0].mxu0 %v901
  %v1357 = vpop.f32.mrb[0].mxu0
  %v1358 = vadd.f32 0.0, %v1357
  %v1359 = vpop.f32.mrb[0].mxu0
  %1360 = vmatprep.mubr.f32.mxu0 0.0
  %1361 = vmatmul.mubr.f32.gmra.mrb[0].mxu0 %v902
  %v1362 = vpop.f32.mrb[0].mxu0
  %v1363 = vadd.f32 0.0, %v1362
  %v1364 = vpop.f32.mrb[0].mxu0
  %1365 = vmatprep.mubr.f32.mxu0 0.0
  %1366 = vmatmul.mubr.f32.gmra.mrb[0].mxu0 %v903
  %v1367 = vpop.f32.mrb[0].mxu0
  %v1368 = vadd.f32 0.0, %v1367
  %v1369 = vpop.f32.mrb[0].mxu0
  %1370 = vmatprep.mubr.f32.mxu0 0.0
  %1371 = vmatmul.mubr.f32.gmra.mrb[0].mxu0 %v904
  %v1372 = vpop.f32.mrb[0].mxu0
  %v1373 = vadd.f32 0.0, %v1372
  %v1374 = vpop.f32.mrb[0].mxu0
  %1375 = vmatprep.mubr.f32.mxu0 0.0
  %1376 = vmatmul.mubr.f32.gmra.mrb[0].mxu0 %v905
  %v1377 = vpop.f32.mrb[0].mxu0
  %v1378 = vadd.f32 0.0, %v1377
  %v1379 = vpop.f32.mrb[0].mxu0
  %1380 = vmatprep.mubr.f32.mxu0 0.0
  %1381 = vmatmul.mubr.f32.gmra.mrb[0].mxu0 %v906
  %v1382 = vpop.f32.mrb[0].mxu0
  %v1383 = vadd.f32 0.0, %v1382
  %v1384 = vpop.f32.mrb[0].mxu0
  %1385 = vmatprep.mubr.f32.mxu0 0.0
  %1386 = vmatmul.mubr.f32.gmra.mrb[0].mxu0 %v907
  %v1387 = vpop.f32.mrb[0].mxu0
  %v1388 = vadd.f32 0.0, %v1387
  %v1389 = vpop.f32.mrb[0].mxu0
  %1390 = vmatprep.mubr.f32.mxu0 0.0
  %1391 = vmatmul.mubr.f32.gmra.mrb[0].mxu0 %v908
  %v1392 = vpop.f32.mrb[0].mxu0
  %v1393 = vadd.f32 0.0, %v1392
  %v1394 = vpop.f32.mrb[0].mxu0
  %1395 = vmatprep.mubr.f32.mxu0 0.0
  %1396 = vmatmul.mubr.f32.gmra.mrb[0].mxu0 %v909
  %v1397 = vpop.f32.mrb[0].mxu0
  %v1398 = vadd.f32 0.0, %v1397
  %v1399 = vpop.f32.mrb[0].mxu0
  %1400 = vmatprep.mubr.f32.mxu0 0.0
  %1401 = vmatmul.mubr.f32.gmra.mrb[0].mxu0 %v910
  %v1402 = vpop.f32.mrb[0].mxu0
  %v1403 = vadd.f32 0.0, %v1402
  %v1404 = vpop.f32.mrb[0].mxu0
  %1405 = vmatprep.mubr.f32.mxu0 0.0
  %1406 = vmatmul.mubr.f32.gmra.mrb[0].mxu0 %v911
  %v1407 = vpop.f32.mrb[0].mxu0
  %v1408 = vadd.f32 0.0, %v1407
  %v1409 = vpop.f32.mrb[0].mxu0
  %1410 = vdwg.mxu0
  %1411 = vmatprep.subr.mxu0 0.0
  %1412 = vmatpush1.msra.mxu0 %v1250
  %1413 = vmatprep.subr.mxu0 0.0
  %1414 = vmatpush1.msra.mxu0 %v1251
  %1415 = vmatprep.subr.mxu0 0.0
  %1416 = vmatpush1.msra.mxu0 %v1252
  %1417 = vmatprep.subr.mxu0 0.0
  %1418 = vmatpush1.msra.mxu0 %v1253
  %1419 = vmatprep.subr.mxu0 0.0
  %1420 = vmatpush1.msra.mxu0 %v1254
  %1421 = vmatprep.subr.mxu0 0.0
  %1422 = vmatpush1.msra.mxu0 %v1255
  %1423 = vmatprep.subr.mxu0 0.0
  %1424 = vmatpush1.msra.mxu0 %v1256
  %1425 = vmatprep.subr.mxu0 0.0
  %1426 = vmatpush1.msra.mxu0 %v1257
  %1427 = vmatprep.subr.mxu0 0.0
  %1428 = vmatpush1.msra.mxu0 %v1258
  %1429 = vmatprep.subr.mxu0 0.0
  %1430 = vmatpush1.msra.mxu0 %v1259
  %1431 = vmatprep.subr.mxu0 0.0
  %1432 = vmatpush1.msra.mxu0 %v1260
  %1433 = vmatprep.subr.mxu0 0.0
  %1434 = vmatpush1.msra.mxu0 %v1261
  %1435 = vmatprep.subr.mxu0 0.0
  %1436 = vmatpush1.msra.mxu0 %v1262
  %1437 = vmatprep.subr.mxu0 0.0
  %1438 = vmatpush1.msra.mxu0 %v1263
  %1439 = vmatprep.subr.mxu0 0.0
  %1440 = vmatpush1.msra.mxu0 %v1264
  %1441 = vmatprep.subr.mxu0 0.0
  %1442 = vmatpush1.msra.mxu0 %v1265
  %1443 = vmatprep.subr.mxu0 0.0
  %1444 = vmatpush1.msra.mxu0 0.0
  %1445 = vmatprep.subr.mxu0 0.0
  %1446 = vmatpush1.msra.mxu0 0.0
  %1447 = vmatprep.subr.mxu0 0.0
  %1448 = vmatpush1.msra.mxu0 0.0
  %1449 = vmatprep.subr.mxu0 0.0
  %1450 = vmatpush1.msra.mxu0 0.0
  %1451 = vmatprep.subr.mxu0 0.0
  %1452 = vmatpush1.msra.mxu0 0.0
  %1453 = vmatprep.subr.mxu0 0.0
  %1454 = vmatpush1.msra.mxu0 0.0
  %1455 = vmatprep.subr.mxu0 0.0
  %1456 = vmatpush1.msra.mxu0 0.0
  %1457 = vmatprep.subr.mxu0 0.0
  %1458 = vmatpush1.msra.mxu0 0.0
  %1459 = vmatprep.subr.mxu0 0.0
  %1460 = vmatpush1.msra.mxu0 0.0
  %1461 = vmatprep.subr.mxu0 0.0
  %1462 = vmatpush1.msra.mxu0 0.0
  %1463 = vmatprep.subr.mxu0 0.0
  %1464 = vmatpush1.msra.mxu0 0.0
  %1465 = vmatprep.subr.mxu0 0.0
  %1466 = vmatpush1.msra.mxu0 0.0
  %1467 = vmatprep.subr.mxu0 0.0
  %1468 = vmatpush1.msra.mxu0 0.0
  %1469 = vmatprep.subr.mxu0 0.0
  %1470 = vmatpush1.msra.mxu0 0.0
  %1471 = vmatprep.subr.mxu0 0.0
  %1472 = vmatpush1.msra.mxu0 0.0
  %1473 = vmatprep.subr.mxu0 0.0
  %1474 = vmatpush1.msra.mxu0 0.0
  %1475 = vmatprep.mubr.f32.mxu0 0.0
  %1476 = vmatmul.mubr.f32.gmra.mrb[0].mxu0 %v1234
  %v1477 = vpop.f32.mrb[0].mxu0
  %v1478 = vadd.f32 1e-05, %v1477
  %v1479 = vpop.f32.mrb[0].mxu0
  %1480 = vmatprep.mubr.f32.mxu0 0.0
  %1481 = vmatmul.mubr.f32.gmra.mrb[0].mxu0 %v1235
  %v1482 = vpop.f32.mrb[0].mxu0
  %v1483 = vadd.f32 1e-05, %v1482
  %v1484 = vpop.f32.mrb[0].mxu0
  %1485 = vmatprep.mubr.f32.mxu0 0.0
  %1486 = vmatmul.mubr.f32.gmra.mrb[0].mxu0 %v1236
  %v1487 = vpop.f32.mrb[0].mxu0
  %v1488 = vadd.f32 1e-05, %v1487
  %v1489 = vpop.f32.mrb[0].mxu0
  %1490 = vmatprep.mubr.f32.mxu0 0.0
  %1491 = vmatmul.mubr.f32.gmra.mrb[0].mxu0 %v1237
  %v1492 = vpop.f32.mrb[0].mxu0
  %v1493 = vadd.f32 1e-05, %v1492
  %v1494 = vpop.f32.mrb[0].mxu0
  %1495 = vmatprep.mubr.f32.mxu0 0.0
  %1496 = vmatmul.mubr.f32.gmra.mrb[0].mxu0 %v1238
  %v1497 = vpop.f32.mrb[0].mxu0
  %v1498 = vadd.f32 1e-05, %v1497
  %v1499 = vpop.f32.mrb[0].mxu0
  %1500 = vmatprep.mubr.f32.mxu0 0.0
  %1501 = vmatmul.mubr.f32.gmra.mrb[0].mxu0 %v1239
  %v1502 = vpop.f32.mrb[0].mxu0
  %v1503 = vadd.f32 1e-05, %v1502
  %v1504 = vpop.f32.mrb[0].mxu0
  %1505 = vmatprep.mubr.f32.mxu0 0.0
  %1506 = vmatmul.mubr.f32.gmra.mrb[0].mxu0 %v1240
  %v1507 = vpop.f32.mrb[0].mxu0
  %v1508 = vadd.f32 1e-05, %v1507
  %v1509 = vpop.f32.mrb[0].mxu0
  %1510 = vmatprep.mubr.f32.mxu0 0.0
  %1511 = vmatmul.mubr.f32.gmra.mrb[0].mxu0 %v1241
  %v1512 = vpop.f32.mrb[0].mxu0
  %v1513 = vadd.f32 1e-05, %v1512
  %v1514 = vpop.f32.mrb[0].mxu0
  %1515 = vmatprep.mubr.f32.mxu0 0.0
  %1516 = vmatmul.mubr.f32.gmra.mrb[0].mxu0 %v1242
  %v1517 = vpop.f32.mrb[0].mxu0
  %v1518 = vadd.f32 1e-05, %v1517
  %v1519 = vpop.f32.mrb[0].mxu0
  %1520 = vmatprep.mubr.f32.mxu0 0.0
  %1521 = vmatmul.mubr.f32.gmra.mrb[0].mxu0 %v1243
  %v1522 = vpop.f32.mrb[0].mxu0
  %v1523 = vadd.f32 1e-05, %v1522
  %v1524 = vpop.f32.mrb[0].mxu0
  %1525 = vmatprep.mubr.f32.mxu0 0.0
  %1526 = vmatmul.mubr.f32.gmra.mrb[0].mxu0 %v1244
  %v1527 = vpop.f32.mrb[0].mxu0
  %v1528 = vadd.f32 1e-05, %v1527
  %v1529 = vpop.f32.mrb[0].mxu0
  %1530 = vmatprep.mubr.f32.mxu0 0.0
  %1531 = vmatmul.mubr.f32.gmra.mrb[0].mxu0 %v1245
  %v1532 = vpop.f32.mrb[0].mxu0
  %v1533 = vadd.f32 1e-05, %v1532
  %v1534 = vpop.f32.mrb[0].mxu0
  %1535 = vmatprep.mubr.f32.mxu0 0.0
  %1536 = vmatmul.mubr.f32.gmra.mrb[0].mxu0 %v1246
  %v1537 = vpop.f32.mrb[0].mxu0
  %v1538 = vadd.f32 1e-05, %v1537
  %v1539 = vpop.f32.mrb[0].mxu0
  %1540 = vmatprep.mubr.f32.mxu0 0.0
  %1541 = vmatmul.mubr.f32.gmra.mrb[0].mxu0 %v1247
  %v1542 = vpop.f32.mrb[0].mxu0
  %v1543 = vadd.f32 1e-05, %v1542
  %v1544 = vpop.f32.mrb[0].mxu0
  %1545 = vmatprep.mubr.f32.mxu0 0.0
  %1546 = vmatmul.mubr.f32.gmra.mrb[0].mxu0 %v1248
  %v1547 = vpop.f32.mrb[0].mxu0
  %v1548 = vadd.f32 1e-05, %v1547
  %v1549 = vpop.f32.mrb[0].mxu0
  %1550 = vmatprep.mubr.f32.mxu0 0.0
  %1551 = vmatmul.mubr.f32.gmra.mrb[0].mxu0 %v1249
  %v1552 = vpop.f32.mrb[0].mxu0
  %v1553 = vadd.f32 1e-05, %v1552
  %v1554 = vpop.f32.mrb[0].mxu0
  %1555 = vdwg.mxu0
  %v1556 = vrsqrt.pop %v1478
  %v1557 = vmul.f32 %v1478, %v1556
  %vm1558 = vcmp.eq.f32.partialorder %v1478, inf
  %v1559 = vsel %vm1558, %v1478, %v1557
  %vm1560 = vcmp.eq.f32.partialorder %v1478, 0.0
  %v1561 = vand.u32 %v1478, 2147483648
  %v1562 = vsel %vm1560, %v1561, %v1559
  %v1563 = vrsqrt.pop %v1483
  %v1564 = vmul.f32 %v1483, %v1563
  %vm1565 = vcmp.eq.f32.partialorder %v1483, inf
  %v1566 = vsel %vm1565, %v1483, %v1564
  %vm1567 = vcmp.eq.f32.partialorder %v1483, 0.0
  %v1568 = vand.u32 %v1483, 2147483648
  %v1569 = vsel %vm1567, %v1568, %v1566
  %v1570 = vrsqrt.pop %v1488
  %v1571 = vmul.f32 %v1488, %v1570
  %vm1572 = vcmp.eq.f32.partialorder %v1488, inf
  %v1573 = vsel %vm1572, %v1488, %v1571
  %vm1574 = vcmp.eq.f32.partialorder %v1488, 0.0
  %v1575 = vand.u32 %v1488, 2147483648
  %v1576 = vsel %vm1574, %v1575, %v1573
  %v1577 = vrsqrt.pop %v1493
  %v1578 = vmul.f32 %v1493, %v1577
  %vm1579 = vcmp.eq.f32.partialorder %v1493, inf
  %v1580 = vsel %vm1579, %v1493, %v1578
  %vm1581 = vcmp.eq.f32.partialorder %v1493, 0.0
  %v1582 = vand.u32 %v1493, 2147483648
  %v1583 = vsel %vm1581, %v1582, %v1580
  %v1584 = vrsqrt.pop %v1498
  %v1585 = vmul.f32 %v1498, %v1584
  %vm1586 = vcmp.eq.f32.partialorder %v1498, inf
  %v1587 = vsel %vm1586, %v1498, %v1585
  %vm1588 = vcmp.eq.f32.partialorder %v1498, 0.0
  %v1589 = vand.u32 %v1498, 2147483648
  %v1590 = vsel %vm1588, %v1589, %v1587
  %v1591 = vrsqrt.pop %v1503
  %v1592 = vmul.f32 %v1503, %v1591
  %vm1593 = vcmp.eq.f32.partialorder %v1503, inf
  %v1594 = vsel %vm1593, %v1503, %v1592
  %vm1595 = vcmp.eq.f32.partialorder %v1503, 0.0
  %v1596 = vand.u32 %v1503, 2147483648
  %v1597 = vsel %vm1595, %v1596, %v1594
  %v1598 = vrsqrt.pop %v1508
  %v1599 = vmul.f32 %v1508, %v1598
  %vm1600 = vcmp.eq.f32.partialorder %v1508, inf
  %v1601 = vsel %vm1600, %v1508, %v1599
  %vm1602 = vcmp.eq.f32.partialorder %v1508, 0.0
  %v1603 = vand.u32 %v1508, 2147483648
  %v1604 = vsel %vm1602, %v1603, %v1601
  %v1605 = vrsqrt.pop %v1513
  %v1606 = vmul.f32 %v1513, %v1605
  %vm1607 = vcmp.eq.f32.partialorder %v1513, inf
  %v1608 = vsel %vm1607, %v1513, %v1606
  %vm1609 = vcmp.eq.f32.partialorder %v1513, 0.0
  %v1610 = vand.u32 %v1513, 2147483648
  %v1611 = vsel %vm1609, %v1610, %v1608
  %v1612 = vrsqrt.pop %v1518
  %v1613 = vmul.f32 %v1518, %v1612
  %vm1614 = vcmp.eq.f32.partialorder %v1518, inf
  %v1615 = vsel %vm1614, %v1518, %v1613
  %vm1616 = vcmp.eq.f32.partialorder %v1518, 0.0
  %v1617 = vand.u32 %v1518, 2147483648
  %v1618 = vsel %vm1616, %v1617, %v1615
  %v1619 = vrsqrt.pop %v1523
  %v1620 = vmul.f32 %v1523, %v1619
  %vm1621 = vcmp.eq.f32.partialorder %v1523, inf
  %v1622 = vsel %vm1621, %v1523, %v1620
  %vm1623 = vcmp.eq.f32.partialorder %v1523, 0.0
  %v1624 = vand.u32 %v1523, 2147483648
  %v1625 = vsel %vm1623, %v1624, %v1622
  %v1626 = vrsqrt.pop %v1528
  %v1627 = vmul.f32 %v1528, %v1626
  %vm1628 = vcmp.eq.f32.partialorder %v1528, inf
  %v1629 = vsel %vm1628, %v1528, %v1627
  %vm1630 = vcmp.eq.f32.partialorder %v1528, 0.0
  %v1631 = vand.u32 %v1528, 2147483648
  %v1632 = vsel %vm1630, %v1631, %v1629
  %v1633 = vrsqrt.pop %v1533
  %v1634 = vmul.f32 %v1533, %v1633
  %vm1635 = vcmp.eq.f32.partialorder %v1533, inf
  %v1636 = vsel %vm1635, %v1533, %v1634
  %vm1637 = vcmp.eq.f32.partialorder %v1533, 0.0
  %v1638 = vand.u32 %v1533, 2147483648
  %v1639 = vsel %vm1637, %v1638, %v1636
  %v1640 = vrsqrt.pop %v1538
  %v1641 = vmul.f32 %v1538, %v1640
  %vm1642 = vcmp.eq.f32.partialorder %v1538, inf
  %v1643 = vsel %vm1642, %v1538, %v1641
  %vm1644 = vcmp.eq.f32.partialorder %v1538, 0.0
  %v1645 = vand.u32 %v1538, 2147483648
  %v1646 = vsel %vm1644, %v1645, %v1643
  %v1647 = vrsqrt.pop %v1543
  %v1648 = vmul.f32 %v1543, %v1647
  %vm1649 = vcmp.eq.f32.partialorder %v1543, inf
  %v1650 = vsel %vm1649, %v1543, %v1648
  %vm1651 = vcmp.eq.f32.partialorder %v1543, 0.0
  %v1652 = vand.u32 %v1543, 2147483648
  %v1653 = vsel %vm1651, %v1652, %v1650
  %v1654 = vrsqrt.pop %v1548
  %v1655 = vmul.f32 %v1548, %v1654
  %vm1656 = vcmp.eq.f32.partialorder %v1548, inf
  %v1657 = vsel %vm1656, %v1548, %v1655
  %vm1658 = vcmp.eq.f32.partialorder %v1548, 0.0
  %v1659 = vand.u32 %v1548, 2147483648
  %v1660 = vsel %vm1658, %v1659, %v1657
  %v1661 = vrsqrt.pop %v1553
  %v1662 = vmul.f32 %v1553, %v1661
  %vm1663 = vcmp.eq.f32.partialorder %v1553, inf
  %v1664 = vsel %vm1663, %v1553, %v1662
  %vm1665 = vcmp.eq.f32.partialorder %v1553, 0.0
  %v1666 = vand.u32 %v1553, 2147483648
  %v1667 = vsel %vm1665, %v1666, %v1664
  %v1668 = vadd.f32 %v1234, 1e-05
  %v1669 = vadd.f32 %v1235, 1e-05
  %v1670 = vadd.f32 %v1236, 1e-05
  %v1671 = vadd.f32 %v1237, 1e-05
  %v1672 = vadd.f32 %v1238, 1e-05
  %v1673 = vadd.f32 %v1239, 1e-05
  %v1674 = vadd.f32 %v1240, 1e-05
  %v1675 = vadd.f32 %v1241, 1e-05
  %v1676 = vadd.f32 %v1242, 1e-05
  %v1677 = vadd.f32 %v1243, 1e-05
  %v1678 = vadd.f32 %v1244, 1e-05
  %v1679 = vadd.f32 %v1245, 1e-05
  %v1680 = vadd.f32 %v1246, 1e-05
  %v1681 = vadd.f32 %v1247, 1e-05
  %v1682 = vadd.f32 %v1248, 1e-05
  %v1683 = vadd.f32 %v1249, 1e-05
  %v1684 = vrsqrt.pop %v1668
  %v1685 = vrsqrt.pop %v1669
  %v1686 = vrsqrt.pop %v1670
  %v1687 = vrsqrt.pop %v1671
  %v1688 = vrsqrt.pop %v1672
  %v1689 = vrsqrt.pop %v1673
  %v1690 = vrsqrt.pop %v1674
  %v1691 = vrsqrt.pop %v1675
  %v1692 = vrsqrt.pop %v1676
  %v1693 = vrsqrt.pop %v1677
  %v1694 = vrsqrt.pop %v1678
  %v1695 = vrsqrt.pop %v1679
  %v1696 = vrsqrt.pop %v1680
  %v1697 = vrsqrt.pop %v1681
  %v1698 = vrsqrt.pop %v1682
  %v1699 = vrsqrt.pop %v1683
  %v1700 = vmul.f32 %v1562, %v1684
  %v1701 = vmul.f32 %v1569, %v1685
  %v1702 = vmul.f32 %v1576, %v1686
  %v1703 = vmul.f32 %v1583, %v1687
  %v1704 = vmul.f32 %v1590, %v1688
  %v1705 = vmul.f32 %v1597, %v1689
  %v1706 = vmul.f32 %v1604, %v1690
  %v1707 = vmul.f32 %v1611, %v1691
  %v1708 = vmul.f32 %v1618, %v1692
  %v1709 = vmul.f32 %v1625, %v1693
  %v1710 = vmul.f32 %v1632, %v1694
  %v1711 = vmul.f32 %v1639, %v1695
  %v1712 = vmul.f32 %v1646, %v1696
  %v1713 = vmul.f32 %v1653, %v1697
  %v1714 = vmul.f32 %v1660, %v1698
  %v1715 = vmul.f32 %v1667, %v1699
  %v1716 = vmul.f32 %v896, %v1700
  %v1717 = vmul.f32 %v897, %v1701
  %v1718 = vmul.f32 %v898, %v1702
  %v1719 = vmul.f32 %v899, %v1703
  %v1720 = vmul.f32 %v900, %v1704
  %v1721 = vmul.f32 %v901, %v1705
  %v1722 = vmul.f32 %v902, %v1706
  %v1723 = vmul.f32 %v903, %v1707
  %v1724 = vmul.f32 %v904, %v1708
  %v1725 = vmul.f32 %v905, %v1709
  %v1726 = vmul.f32 %v906, %v1710
  %v1727 = vmul.f32 %v907, %v1711
  %v1728 = vmul.f32 %v908, %v1712
  %v1729 = vmul.f32 %v909, %v1713
  %v1730 = vmul.f32 %v910, %v1714
  %v1731 = vmul.f32 %v911, %v1715
  %v1732 = vsub.f32 %v1333, %v1716
  %v1733 = vsub.f32 %v1338, %v1717
  %v1734 = vsub.f32 %v1343, %v1718
  %v1735 = vsub.f32 %v1348, %v1719
  %v1736 = vsub.f32 %v1353, %v1720
  %v1737 = vsub.f32 %v1358, %v1721
  %v1738 = vsub.f32 %v1363, %v1722
  %v1739 = vsub.f32 %v1368, %v1723
  %v1740 = vsub.f32 %v1373, %v1724
  %v1741 = vsub.f32 %v1378, %v1725
  %v1742 = vsub.f32 %v1383, %v1726
  %v1743 = vsub.f32 %v1388, %v1727
  %v1744 = vsub.f32 %v1393, %v1728
  %v1745 = vsub.f32 %v1398, %v1729
  %v1746 = vsub.f32 %v1403, %v1730
  %v1747 = vsub.f32 %v1408, %v1731
  %v1748 = vmul.f32 %v558, %v1700
  %v1749 = vmul.f32 %v559, %v1701
  %v1750 = vmul.f32 %v560, %v1702
  %v1751 = vmul.f32 %v561, %v1703
  %v1752 = vmul.f32 %v562, %v1704
  %v1753 = vmul.f32 %v563, %v1705
  %v1754 = vmul.f32 %v564, %v1706
  %v1755 = vmul.f32 %v565, %v1707
  %v1756 = vmul.f32 %v566, %v1708
  %v1757 = vmul.f32 %v567, %v1709
  %v1758 = vmul.f32 %v568, %v1710
  %v1759 = vmul.f32 %v569, %v1711
  %v1760 = vmul.f32 %v570, %v1712
  %v1761 = vmul.f32 %v571, %v1713
  %v1762 = vmul.f32 %v572, %v1714
  %v1763 = vmul.f32 %v573, %v1715
  %v1764 = vadd.f32 %v1748, %v1732
  %v1765 = vadd.f32 %v1749, %v1733
  %v1766 = vadd.f32 %v1750, %v1734
  %v1767 = vadd.f32 %v1751, %v1735
  %v1768 = vadd.f32 %v1752, %v1736
  %v1769 = vadd.f32 %v1753, %v1737
  %v1770 = vadd.f32 %v1754, %v1738
  %v1771 = vadd.f32 %v1755, %v1739
  %v1772 = vadd.f32 %v1756, %v1740
  %v1773 = vadd.f32 %v1757, %v1741
  %v1774 = vadd.f32 %v1758, %v1742
  %v1775 = vadd.f32 %v1759, %v1743
  %v1776 = vadd.f32 %v1760, %v1744
  %v1777 = vadd.f32 %v1761, %v1745
  %v1778 = vadd.f32 %v1762, %v1746
  %v1779 = vadd.f32 %v1763, %v1747
  %v1780 = vld [vmem:[%s7] sm:$0xff]
  %v1781 = vld [vmem:[%s7 + $0x8] sm:$0xff]
  %v1782 = vld [vmem:[%s7 + $0x10] sm:$0xff]
  %v1783 = vld [vmem:[%s7 + $0x18] sm:$0xff]
  %v1784 = vld [vmem:[%s7 + $0x20] sm:$0xff]
  %v1785 = vld [vmem:[%s7 + $0x28] sm:$0xff]
  %v1786 = vld [vmem:[%s7 + $0x30] sm:$0xff]
  %v1787 = vld [vmem:[%s7 + $0x38] sm:$0xff]
  %v1788 = vld [vmem:[%s7 + $0x40] sm:$0xff]
  %v1789 = vld [vmem:[%s7 + $0x48] sm:$0xff]
  %v1790 = vld [vmem:[%s7 + $0x50] sm:$0xff]
  %v1791 = vld [vmem:[%s7 + $0x58] sm:$0xff]
  %v1792 = vld [vmem:[%s7 + $0x60] sm:$0xff]
  %v1793 = vld [vmem:[%s7 + $0x68] sm:$0xff]
  %v1794 = vld [vmem:[%s7 + $0x70] sm:$0xff]
  %v1795 = vld [vmem:[%s7 + $0x78] sm:$0xff]
  %v1796 = vld [vmem:[%s7 + $0x80] sm:$0xff]
  %v1797 = vld [vmem:[%s7 + $0x88] sm:$0xff]
  %v1798 = vld [vmem:[%s7 + $0x90] sm:$0xff]
  %v1799 = vld [vmem:[%s7 + $0x98] sm:$0xff]
  %v1800 = vld [vmem:[%s7 + $0xa0] sm:$0xff]
  %v1801 = vld [vmem:[%s7 + $0xa8] sm:$0xff]
  %v1802 = vld [vmem:[%s7 + $0xb0] sm:$0xff]
  %v1803 = vld [vmem:[%s7 + $0xb8] sm:$0xff]
  %v1804 = vld [vmem:[%s7 + $0xc0] sm:$0xff]
  %v1805 = vld [vmem:[%s7 + $0xc8] sm:$0xff]
  %v1806 = vld [vmem:[%s7 + $0xd0] sm:$0xff]
  %v1807 = vld [vmem:[%s7 + $0xd8] sm:$0xff]
  %v1808 = vld [vmem:[%s7 + $0xe0] sm:$0xff]
  %v1809 = vld [vmem:[%s7 + $0xe8] sm:$0xff]
  %v1810 = vld [vmem:[%s7 + $0xf0] sm:$0xff]
  %v1811 = vld [vmem:[%s7 + $0xf8] sm:$0xff]
  %v1812 = vld [vmem:[%s7 + $0x100] sm:$0xff]
  %v1813 = vld [vmem:[%s7 + $0x108] sm:$0xff]
  %v1814 = vld [vmem:[%s7 + $0x110] sm:$0xff]
  %v1815 = vld [vmem:[%s7 + $0x118] sm:$0xff]
  %1816 = vmatprep.subr.mxu0 0.0
  %1817 = vmatpush1.msra.mxu0 %v1764
  %1818 = vmatprep.subr.mxu0 0.0
  %1819 = vmatpush1.msra.mxu0 %v1765
  %1820 = vmatprep.subr.mxu0 0.0
  %1821 = vmatpush1.msra.mxu0 %v1766
  %1822 = vmatprep.subr.mxu0 0.0
  %1823 = vmatpush1.msra.mxu0 %v1767
  %1824 = vmatprep.subr.mxu0 0.0
  %1825 = vmatpush1.msra.mxu0 %v1768
  %1826 = vmatprep.subr.mxu0 0.0
  %1827 = vmatpush1.msra.mxu0 %v1769
  %1828 = vmatprep.subr.mxu0 0.0
  %1829 = vmatpush1.msra.mxu0 %v1770
  %1830 = vmatprep.subr.mxu0 0.0
  %1831 = vmatpush1.msra.mxu0 %v1771
  %1832 = vmatprep.subr.mxu0 0.0
  %1833 = vmatpush1.msra.mxu0 %v1772
  %1834 = vmatprep.subr.mxu0 0.0
  %1835 = vmatpush1.msra.mxu0 %v1773
  %1836 = vmatprep.subr.mxu0 0.0
  %1837 = vmatpush1.msra.mxu0 %v1774
  %1838 = vmatprep.subr.mxu0 0.0
  %1839 = vmatpush1.msra.mxu0 %v1775
  %1840 = vmatprep.subr.mxu0 0.0
  %1841 = vmatpush1.msra.mxu0 %v1776
  %1842 = vmatprep.subr.mxu0 0.0
  %1843 = vmatpush1.msra.mxu0 %v1777
  %1844 = vmatprep.subr.mxu0 0.0
  %1845 = vmatpush1.msra.mxu0 %v1778
  %1846 = vmatprep.subr.mxu0 0.0
  %1847 = vmatpush1.msra.mxu0 %v1779
  %1848 = vmatprep.subr.mxu0 0.0
  %1849 = vmatpush1.msra.mxu0 0.0
  %1850 = vmatprep.subr.mxu0 0.0
  %1851 = vmatpush1.msra.mxu0 0.0
  %1852 = vmatprep.subr.mxu0 0.0
  %1853 = vmatpush1.msra.mxu0 0.0
  %1854 = vmatprep.subr.mxu0 0.0
  %1855 = vmatpush1.msra.mxu0 0.0
  %1856 = vmatprep.subr.mxu0 0.0
  %1857 = vmatpush1.msra.mxu0 0.0
  %1858 = vmatprep.subr.mxu0 0.0
  %1859 = vmatpush1.msra.mxu0 0.0
  %1860 = vmatprep.subr.mxu0 0.0
  %1861 = vmatpush1.msra.mxu0 0.0
  %1862 = vmatprep.subr.mxu0 0.0
  %1863 = vmatpush1.msra.mxu0 0.0
  %1864 = vmatprep.subr.mxu0 0.0
  %1865 = vmatpush1.msra.mxu0 0.0
  %1866 = vmatprep.subr.mxu0 0.0
  %1867 = vmatpush1.msra.mxu0 0.0
  %1868 = vmatprep.subr.mxu0 0.0
  %1869 = vmatpush1.msra.mxu0 0.0
  %1870 = vmatprep.subr.mxu0 0.0
  %1871 = vmatpush1.msra.mxu0 0.0
  %1872 = vmatprep.subr.mxu0 0.0
  %1873 = vmatpush1.msra.mxu0 0.0
  %1874 = vmatprep.subr.mxu0 0.0
  %1875 = vmatpush1.msra.mxu0 0.0
  %1876 = vmatprep.subr.mxu0 0.0
  %1877 = vmatpush1.msra.mxu0 0.0
  %1878 = vmatprep.subr.mxu0 0.0
  %1879 = vmatpush1.msra.mxu0 0.0
  %1880 = vmatprep.mubr.f32.mxu0 0.0
  %1881 = vmatmul.mubr.f32.gmra.mrb[0].mxu0 %v1780
  %v1882 = vpop.f32.mrb[0].mxu0
  %v1883 = vadd.f32 0.0, %v1882
  %v1884 = vpop.f32.mrb[0].mxu0
  %1885 = vmatprep.mubr.f32.mxu0 0.0
  %1886 = vmatmul.mubr.f32.gmra.mrb[0].mxu0 %v1781
  %v1887 = vpop.f32.mrb[0].mxu0
  %v1888 = vadd.f32 0.0, %v1887
  %v1889 = vpop.f32.mrb[0].mxu0
  %1890 = vmatprep.mubr.f32.mxu0 0.0
  %1891 = vmatmul.mubr.f32.gmra.mrb[0].mxu0 %v1782
  %v1892 = vpop.f32.mrb[0].mxu0
  %v1893 = vadd.f32 0.0, %v1892
  %v1894 = vpop.f32.mrb[0].mxu0
  %1895 = vmatprep.mubr.f32.mxu0 0.0
  %1896 = vmatmul.mubr.f32.gmra.mrb[0].mxu0 %v1783
  %v1897 = vpop.f32.mrb[0].mxu0
  %v1898 = vadd.f32 0.0, %v1897
  %v1899 = vpop.f32.mrb[0].mxu0
  %1900 = vmatprep.mubr.f32.mxu0 0.0
  %1901 = vmatmul.mubr.f32.gmra.mrb[0].mxu0 %v1784
  %v1902 = vpop.f32.mrb[0].mxu0
  %v1903 = vadd.f32 0.0, %v1902
  %v1904 = vpop.f32.mrb[0].mxu0
  %1905 = vmatprep.mubr.f32.mxu0 0.0
  %1906 = vmatmul.mubr.f32.gmra.mrb[0].mxu0 %v1785
  %v1907 = vpop.f32.mrb[0].mxu0
  %v1908 = vadd.f32 0.0, %v1907
  %v1909 = vpop.f32.mrb[0].mxu0
  %1910 = vmatprep.mubr.f32.mxu0 0.0
  %1911 = vmatmul.mubr.f32.gmra.mrb[0].mxu0 %v1786
  %v1912 = vpop.f32.mrb[0].mxu0
  %v1913 = vadd.f32 0.0, %v1912
  %v1914 = vpop.f32.mrb[0].mxu0
  %1915 = vmatprep.mubr.f32.mxu0 0.0
  %1916 = vmatmul.mubr.f32.gmra.mrb[0].mxu0 %v1787
  %v1917 = vpop.f32.mrb[0].mxu0
  %v1918 = vadd.f32 0.0, %v1917
  %v1919 = vpop.f32.mrb[0].mxu0
  %1920 = vmatprep.mubr.f32.mxu0 0.0
  %1921 = vmatmul.mubr.f32.gmra.mrb[0].mxu0 %v1788
  %v1922 = vpop.f32.mrb[0].mxu0
  %v1923 = vadd.f32 0.0, %v1922
  %v1924 = vpop.f32.mrb[0].mxu0
  %1925 = vmatprep.mubr.f32.mxu0 0.0
  %1926 = vmatmul.mubr.f32.gmra.mrb[0].mxu0 %v1789
  %v1927 = vpop.f32.mrb[0].mxu0
  %v1928 = vadd.f32 0.0, %v1927
  %v1929 = vpop.f32.mrb[0].mxu0
  %1930 = vmatprep.mubr.f32.mxu0 0.0
  %1931 = vmatmul.mubr.f32.gmra.mrb[0].mxu0 %v1790
  %v1932 = vpop.f32.mrb[0].mxu0
  %v1933 = vadd.f32 0.0, %v1932
  %v1934 = vpop.f32.mrb[0].mxu0
  %1935 = vmatprep.mubr.f32.mxu0 0.0
  %1936 = vmatmul.mubr.f32.gmra.mrb[0].mxu0 %v1791
  %v1937 = vpop.f32.mrb[0].mxu0
  %v1938 = vadd.f32 0.0, %v1937
  %v1939 = vpop.f32.mrb[0].mxu0
  %1940 = vmatprep.mubr.f32.mxu0 0.0
  %1941 = vmatmul.mubr.f32.gmra.mrb[0].mxu0 %v1792
  %v1942 = vpop.f32.mrb[0].mxu0
  %v1943 = vadd.f32 0.0, %v1942
  %v1944 = vpop.f32.mrb[0].mxu0
  %1945 = vmatprep.mubr.f32.mxu0 0.0
  %1946 = vmatmul.mubr.f32.gmra.mrb[0].mxu0 %v1793
  %v1947 = vpop.f32.mrb[0].mxu0
  %v1948 = vadd.f32 0.0, %v1947
  %v1949 = vpop.f32.mrb[0].mxu0
  %1950 = vmatprep.mubr.f32.mxu0 0.0
  %1951 = vmatmul.mubr.f32.gmra.mrb[0].mxu0 %v1794
  %v1952 = vpop.f32.mrb[0].mxu0
  %v1953 = vadd.f32 0.0, %v1952
  %v1954 = vpop.f32.mrb[0].mxu0
  %1955 = vmatprep.mubr.f32.mxu0 0.0
  %1956 = vmatmul.mubr.f32.gmra.mrb[0].mxu0 %v1795
  %v1957 = vpop.f32.mrb[0].mxu0
  %v1958 = vadd.f32 0.0, %v1957
  %v1959 = vpop.f32.mrb[0].mxu0
  %1960 = vmatprep.mubr.f32.mxu0 0.0
  %1961 = vmatmul.mubr.f32.gmra.mrb[0].mxu0 %v1796
  %v1962 = vpop.f32.mrb[0].mxu0
  %v1963 = vadd.f32 0.0, %v1962
  %v1964 = vpop.f32.mrb[0].mxu0
  %1965 = vmatprep.mubr.f32.mxu0 0.0
  %1966 = vmatmul.mubr.f32.gmra.mrb[0].mxu0 %v1797
  %v1967 = vpop.f32.mrb[0].mxu0
  %v1968 = vadd.f32 0.0, %v1967
  %v1969 = vpop.f32.mrb[0].mxu0
  %1970 = vmatprep.mubr.f32.mxu0 0.0
  %1971 = vmatmul.mubr.f32.gmra.mrb[0].mxu0 %v1798
  %v1972 = vpop.f32.mrb[0].mxu0
  %v1973 = vadd.f32 0.0, %v1972
  %v1974 = vpop.f32.mrb[0].mxu0
  %1975 = vmatprep.mubr.f32.mxu0 0.0
  %1976 = vmatmul.mubr.f32.gmra.mrb[0].mxu0 %v1799
  %v1977 = vpop.f32.mrb[0].mxu0
  %v1978 = vadd.f32 0.0, %v1977
  %v1979 = vpop.f32.mrb[0].mxu0
  %1980 = vmatprep.mubr.f32.mxu0 0.0
  %1981 = vmatmul.mubr.f32.gmra.mrb[0].mxu0 %v1800
  %v1982 = vpop.f32.mrb[0].mxu0
  %v1983 = vadd.f32 0.0, %v1982
  %v1984 = vpop.f32.mrb[0].mxu0
  %1985 = vmatprep.mubr.f32.mxu0 0.0
  %1986 = vmatmul.mubr.f32.gmra.mrb[0].mxu0 %v1801
  %v1987 = vpop.f32.mrb[0].mxu0
  %v1988 = vadd.f32 0.0, %v1987
  %v1989 = vpop.f32.mrb[0].mxu0
  %1990 = vmatprep.mubr.f32.mxu0 0.0
  %1991 = vmatmul.mubr.f32.gmra.mrb[0].mxu0 %v1802
  %v1992 = vpop.f32.mrb[0].mxu0
  %v1993 = vadd.f32 0.0, %v1992
  %v1994 = vpop.f32.mrb[0].mxu0
  %1995 = vmatprep.mubr.f32.mxu0 0.0
  %1996 = vmatmul.mubr.f32.gmra.mrb[0].mxu0 %v1803
  %v1997 = vpop.f32.mrb[0].mxu0
  %v1998 = vadd.f32 0.0, %v1997
  %v1999 = vpop.f32.mrb[0].mxu0
  %2000 = vmatprep.mubr.f32.mxu0 0.0
  %2001 = vmatmul.mubr.f32.gmra.mrb[0].mxu0 %v1804
  %v2002 = vpop.f32.mrb[0].mxu0
  %v2003 = vadd.f32 0.0, %v2002
  %v2004 = vpop.f32.mrb[0].mxu0
  %2005 = vmatprep.mubr.f32.mxu0 0.0
  %2006 = vmatmul.mubr.f32.gmra.mrb[0].mxu0 %v1805
  %v2007 = vpop.f32.mrb[0].mxu0
  %v2008 = vadd.f32 0.0, %v2007
  %v2009 = vpop.f32.mrb[0].mxu0
  %2010 = vmatprep.mubr.f32.mxu0 0.0
  %2011 = vmatmul.mubr.f32.gmra.mrb[0].mxu0 %v1806
  %v2012 = vpop.f32.mrb[0].mxu0
  %v2013 = vadd.f32 0.0, %v2012
  %v2014 = vpop.f32.mrb[0].mxu0
  %2015 = vmatprep.mubr.f32.mxu0 0.0
  %2016 = vmatmul.mubr.f32.gmra.mrb[0].mxu0 %v1807
  %v2017 = vpop.f32.mrb[0].mxu0
  %v2018 = vadd.f32 0.0, %v2017
  %v2019 = vpop.f32.mrb[0].mxu0
  %2020 = vmatprep.mubr.f32.mxu0 0.0
  %2021 = vmatmul.mubr.f32.gmra.mrb[0].mxu0 %v1808
  %v2022 = vpop.f32.mrb[0].mxu0
  %v2023 = vadd.f32 0.0, %v2022
  %v2024 = vpop.f32.mrb[0].mxu0
  %2025 = vmatprep.mubr.f32.mxu0 0.0
  %2026 = vmatmul.mubr.f32.gmra.mrb[0].mxu0 %v1809
  %v2027 = vpop.f32.mrb[0].mxu0
  %v2028 = vadd.f32 0.0, %v2027
  %v2029 = vpop.f32.mrb[0].mxu0
  %2030 = vmatprep.mubr.f32.mxu0 0.0
  %2031 = vmatmul.mubr.f32.gmra.mrb[0].mxu0 %v1810
  %v2032 = vpop.f32.mrb[0].mxu0
  %v2033 = vadd.f32 0.0, %v2032
  %v2034 = vpop.f32.mrb[0].mxu0
  %2035 = vmatprep.mubr.f32.mxu0 0.0
  %2036 = vmatmul.mubr.f32.gmra.mrb[0].mxu0 %v1811
  %v2037 = vpop.f32.mrb[0].mxu0
  %v2038 = vadd.f32 0.0, %v2037
  %v2039 = vpop.f32.mrb[0].mxu0
  %2040 = vmatprep.mubr.f32.mxu0 0.0
  %2041 = vmatmul.mubr.f32.gmra.mrb[0].mxu0 %v1812
  %v2042 = vpop.f32.mrb[0].mxu0
  %v2043 = vadd.f32 0.0, %v2042
  %v2044 = vpop.f32.mrb[0].mxu0
  %2045 = vmatprep.mubr.f32.mxu0 0.0
  %2046 = vmatmul.mubr.f32.gmra.mrb[0].mxu0 %v1813
  %v2047 = vpop.f32.mrb[0].mxu0
  %v2048 = vadd.f32 0.0, %v2047
  %v2049 = vpop.f32.mrb[0].mxu0
  %2050 = vmatprep.mubr.f32.mxu0 0.0
  %2051 = vmatmul.mubr.f32.gmra.mrb[0].mxu0 %v1814
  %v2052 = vpop.f32.mrb[0].mxu0
  %v2053 = vadd.f32 0.0, %v2052
  %v2054 = vpop.f32.mrb[0].mxu0
  %2055 = vmatprep.mubr.f32.mxu0 0.0
  %2056 = vmatmul.mubr.f32.gmra.mrb[0].mxu0 %v1815
  %v2057 = vpop.f32.mrb[0].mxu0
  %v2058 = vadd.f32 0.0, %v2057
  %v2059 = vpop.f32.mrb[0].mxu0
  %2060 = vdwg.mxu0
  %v2061 = vld [vmem:[%s8] sm:$0xff]
  %v2062 = vld [vmem:[%s8 + $0x8] sm:$0xff]
  %v2063 = vld [vmem:[%s8 + $0x10] sm:$0xff]
  %v2064 = vld [vmem:[%s8 + $0x18] sm:$0xff]
  %v2065 = vld [vmem:[%s8 + $0x20] sm:$0xff]
  %v2066 = vld [vmem:[%s8 + $0x28] sm:$0xff]
  %v2067 = vld [vmem:[%s8 + $0x30] sm:$0xff]
  %v2068 = vld [vmem:[%s8 + $0x38] sm:$0xff]
  %v2069 = vld [vmem:[%s8 + $0x40] sm:$0xff]
  %v2070 = vld [vmem:[%s8 + $0x48] sm:$0xff]
  %v2071 = vld [vmem:[%s8 + $0x50] sm:$0xff]
  %v2072 = vld [vmem:[%s8 + $0x58] sm:$0xff]
  %v2073 = vld [vmem:[%s8 + $0x60] sm:$0xff]
  %v2074 = vld [vmem:[%s8 + $0x68] sm:$0xff]
  %v2075 = vld [vmem:[%s8 + $0x70] sm:$0xff]
  %v2076 = vld [vmem:[%s8 + $0x78] sm:$0xff]
  %v2077 = vld [vmem:[%s8 + $0x80] sm:$0xff]
  %v2078 = vld [vmem:[%s8 + $0x88] sm:$0xff]
  %v2079 = vld [vmem:[%s8 + $0x90] sm:$0xff]
  %v2080 = vld [vmem:[%s8 + $0x98] sm:$0xff]
  %v2081 = vld [vmem:[%s8 + $0xa0] sm:$0xff]
  %v2082 = vld [vmem:[%s8 + $0xa8] sm:$0xff]
  %v2083 = vld [vmem:[%s8 + $0xb0] sm:$0xff]
  %v2084 = vld [vmem:[%s8 + $0xb8] sm:$0xff]
  %v2085 = vld [vmem:[%s8 + $0xc0] sm:$0xff]
  %v2086 = vld [vmem:[%s8 + $0xc8] sm:$0xff]
  %v2087 = vld [vmem:[%s8 + $0xd0] sm:$0xff]
  %v2088 = vld [vmem:[%s8 + $0xd8] sm:$0xff]
  %v2089 = vld [vmem:[%s8 + $0xe0] sm:$0xff]
  %v2090 = vld [vmem:[%s8 + $0xe8] sm:$0xff]
  %v2091 = vld [vmem:[%s8 + $0xf0] sm:$0xff]
  %v2092 = vld [vmem:[%s8 + $0xf8] sm:$0xff]
  %v2093 = vld [vmem:[%s8 + $0x100] sm:$0xff]
  %v2094 = vld [vmem:[%s8 + $0x108] sm:$0xff]
  %v2095 = vld [vmem:[%s8 + $0x110] sm:$0xff]
  %v2096 = vld [vmem:[%s8 + $0x118] sm:$0xff]
  %v2097 = vld [vmem:[%s8 + $0x120] sm:$0xff]
  %v2098 = vld [vmem:[%s8 + $0x128] sm:$0xff]
  %v2099 = vld [vmem:[%s8 + $0x130] sm:$0xff]
  %v2100 = vld [vmem:[%s8 + $0x138] sm:$0xff]
  %v2101 = vld [vmem:[%s8 + $0x140] sm:$0xff]
  %v2102 = vld [vmem:[%s8 + $0x148] sm:$0xff]
  %v2103 = vld [vmem:[%s8 + $0x150] sm:$0xff]
  %v2104 = vld [vmem:[%s8 + $0x158] sm:$0xff]
  %v2105 = vld [vmem:[%s8 + $0x160] sm:$0xff]
  %v2106 = vld [vmem:[%s8 + $0x168] sm:$0xff]
  %v2107 = vld [vmem:[%s8 + $0x170] sm:$0xff]
  %v2108 = vld [vmem:[%s8 + $0x178] sm:$0xff]
  %v2109 = vld [vmem:[%s8 + $0x180] sm:$0xff]
  %v2110 = vld [vmem:[%s8 + $0x188] sm:$0xff]
  %v2111 = vld [vmem:[%s8 + $0x190] sm:$0xff]
  %v2112 = vld [vmem:[%s8 + $0x198] sm:$0xff]
  %v2113 = vld [vmem:[%s8 + $0x1a0] sm:$0xff]
  %v2114 = vld [vmem:[%s8 + $0x1a8] sm:$0xff]
  %v2115 = vld [vmem:[%s8 + $0x1b0] sm:$0xff]
  %v2116 = vld [vmem:[%s8 + $0x1b8] sm:$0xff]
  %v2117 = vld [vmem:[%s8 + $0x1c0] sm:$0xff]
  %v2118 = vld [vmem:[%s8 + $0x1c8] sm:$0xff]
  %v2119 = vld [vmem:[%s8 + $0x1d0] sm:$0xff]
  %v2120 = vld [vmem:[%s8 + $0x1d8] sm:$0xff]
  %v2121 = vld [vmem:[%s8 + $0x1e0] sm:$0xff]
  %v2122 = vld [vmem:[%s8 + $0x1e8] sm:$0xff]
  %v2123 = vld [vmem:[%s8 + $0x1f0] sm:$0xff]
  %v2124 = vld [vmem:[%s8 + $0x1f8] sm:$0xff]
  %v2125 = vld [vmem:[%s8 + $0x200] sm:$0xff]
  %v2126 = vld [vmem:[%s8 + $0x208] sm:$0xff]
  %v2127 = vld [vmem:[%s8 + $0x210] sm:$0xff]
  %v2128 = vld [vmem:[%s8 + $0x218] sm:$0xff]
  %v2129 = vld [vmem:[%s8 + $0x220] sm:$0xff]
  %v2130 = vld [vmem:[%s8 + $0x228] sm:$0xff]
  %v2131 = vld [vmem:[%s8 + $0x230] sm:$0xff]
  %v2132 = vld [vmem:[%s8 + $0x238] sm:$0xff]
  %v2133 = vld [vmem:[%s8 + $0x240] sm:$0xff]
  %v2134 = vld [vmem:[%s8 + $0x248] sm:$0xff]
  %v2135 = vld [vmem:[%s8 + $0x250] sm:$0xff]
  %v2136 = vld [vmem:[%s8 + $0x258] sm:$0xff]
  %v2137 = vld [vmem:[%s8 + $0x260] sm:$0xff]
  %v2138 = vld [vmem:[%s8 + $0x268] sm:$0xff]
  %v2139 = vld [vmem:[%s8 + $0x270] sm:$0xff]
  %v2140 = vld [vmem:[%s8 + $0x278] sm:$0xff]
  %v2141 = vld [vmem:[%s8 + $0x280] sm:$0xff]
  %v2142 = vld [vmem:[%s8 + $0x288] sm:$0xff]
  %v2143 = vld [vmem:[%s8 + $0x290] sm:$0xff]
  %v2144 = vld [vmem:[%s8 + $0x298] sm:$0xff]
  %v2145 = vld [vmem:[%s8 + $0x2a0] sm:$0xff]
  %v2146 = vld [vmem:[%s8 + $0x2a8] sm:$0xff]
  %v2147 = vld [vmem:[%s8 + $0x2b0] sm:$0xff]
  %v2148 = vld [vmem:[%s8 + $0x2b8] sm:$0xff]
  %v2149 = vld [vmem:[%s8 + $0x2c0] sm:$0xff]
  %v2150 = vld [vmem:[%s8 + $0x2c8] sm:$0xff]
  %v2151 = vld [vmem:[%s8 + $0x2d0] sm:$0xff]
  %v2152 = vld [vmem:[%s8 + $0x2d8] sm:$0xff]
  %v2153 = vld [vmem:[%s8 + $0x2e0] sm:$0xff]
  %v2154 = vld [vmem:[%s8 + $0x2e8] sm:$0xff]
  %v2155 = vld [vmem:[%s8 + $0x2f0] sm:$0xff]
  %v2156 = vld [vmem:[%s8 + $0x2f8] sm:$0xff]
  %v2157 = vld [vmem:[%s8 + $0x300] sm:$0xff]
  %v2158 = vld [vmem:[%s8 + $0x308] sm:$0xff]
  %v2159 = vld [vmem:[%s8 + $0x310] sm:$0xff]
  %v2160 = vld [vmem:[%s8 + $0x318] sm:$0xff]
  %v2161 = vld [vmem:[%s8 + $0x320] sm:$0xff]
  %v2162 = vld [vmem:[%s8 + $0x328] sm:$0xff]
  %v2163 = vld [vmem:[%s8 + $0x330] sm:$0xff]
  %v2164 = vld [vmem:[%s8 + $0x338] sm:$0xff]
  %v2165 = vld [vmem:[%s8 + $0x340] sm:$0xff]
  %v2166 = vld [vmem:[%s8 + $0x348] sm:$0xff]
  %v2167 = vld [vmem:[%s8 + $0x350] sm:$0xff]
  %v2168 = vld [vmem:[%s8 + $0x358] sm:$0xff]
  %v2169 = vld [vmem:[%s8 + $0x360] sm:$0xff]
  %v2170 = vld [vmem:[%s8 + $0x368] sm:$0xff]
  %v2171 = vld [vmem:[%s8 + $0x370] sm:$0xff]
  %v2172 = vld [vmem:[%s8 + $0x378] sm:$0xff]
  %v2173 = vld [vmem:[%s8 + $0x380] sm:$0xff]
  %v2174 = vld [vmem:[%s8 + $0x388] sm:$0xff]
  %v2175 = vld [vmem:[%s8 + $0x390] sm:$0xff]
  %v2176 = vld [vmem:[%s8 + $0x398] sm:$0xff]
  %v2177 = vld [vmem:[%s8 + $0x3a0] sm:$0xff]
  %v2178 = vld [vmem:[%s8 + $0x3a8] sm:$0xff]
  %v2179 = vld [vmem:[%s8 + $0x3b0] sm:$0xff]
  %v2180 = vld [vmem:[%s8 + $0x3b8] sm:$0xff]
  %v2181 = vld [vmem:[%s8 + $0x3c0] sm:$0xff]
  %v2182 = vld [vmem:[%s8 + $0x3c8] sm:$0xff]
  %v2183 = vld [vmem:[%s8 + $0x3d0] sm:$0xff]
  %v2184 = vld [vmem:[%s8 + $0x3d8] sm:$0xff]
  %v2185 = vld [vmem:[%s8 + $0x3e0] sm:$0xff]
  %v2186 = vld [vmem:[%s8 + $0x3e8] sm:$0xff]
  %v2187 = vld [vmem:[%s8 + $0x3f0] sm:$0xff]
  %v2188 = vld [vmem:[%s8 + $0x3f8] sm:$0xff]
  %v2189 = vld [vmem:[%s8 + $0x400] sm:$0xff]
  %v2190 = vld [vmem:[%s8 + $0x408] sm:$0xff]
  %v2191 = vld [vmem:[%s8 + $0x410] sm:$0xff]
  %v2192 = vld [vmem:[%s8 + $0x418] sm:$0xff]
  %v2193 = vld [vmem:[%s8 + $0x420] sm:$0xff]
  %v2194 = vld [vmem:[%s8 + $0x428] sm:$0xff]
  %v2195 = vld [vmem:[%s8 + $0x430] sm:$0xff]
  %v2196 = vld [vmem:[%s8 + $0x438] sm:$0xff]
  %v2197 = vld [vmem:[%s8 + $0x440] sm:$0xff]
  %v2198 = vld [vmem:[%s8 + $0x448] sm:$0xff]
  %v2199 = vld [vmem:[%s8 + $0x450] sm:$0xff]
  %v2200 = vld [vmem:[%s8 + $0x458] sm:$0xff]
  %v2201 = vld [vmem:[%s8 + $0x460] sm:$0xff]
  %v2202 = vld [vmem:[%s8 + $0x468] sm:$0xff]
  %v2203 = vld [vmem:[%s8 + $0x470] sm:$0xff]
  %v2204 = vld [vmem:[%s8 + $0x478] sm:$0xff]
  %v2205 = vld [vmem:[%s8 + $0x480] sm:$0xff]
  %v2206 = vld [vmem:[%s8 + $0x488] sm:$0xff]
  %v2207 = vld [vmem:[%s8 + $0x490] sm:$0xff]
  %v2208 = vld [vmem:[%s8 + $0x498] sm:$0xff]
  %v2209 = vld [vmem:[%s8 + $0x4a0] sm:$0xff]
  %v2210 = vld [vmem:[%s8 + $0x4a8] sm:$0xff]
  %v2211 = vld [vmem:[%s8 + $0x4b0] sm:$0xff]
  %v2212 = vld [vmem:[%s8 + $0x4b8] sm:$0xff]
  %v2213 = vld [vmem:[%s8 + $0x4c0] sm:$0xff]
  %v2214 = vld [vmem:[%s8 + $0x4c8] sm:$0xff]
  %v2215 = vld [vmem:[%s8 + $0x4d0] sm:$0xff]
  %v2216 = vld [vmem:[%s8 + $0x4d8] sm:$0xff]
  %v2217 = vld [vmem:[%s8 + $0x4e0] sm:$0xff]
  %v2218 = vld [vmem:[%s8 + $0x4e8] sm:$0xff]
  %v2219 = vld [vmem:[%s8 + $0x4f0] sm:$0xff]
  %v2220 = vld [vmem:[%s8 + $0x4f8] sm:$0xff]
  %v2221 = vld [vmem:[%s8 + $0x500] sm:$0xff]
  %v2222 = vld [vmem:[%s8 + $0x508] sm:$0xff]
  %v2223 = vld [vmem:[%s8 + $0x510] sm:$0xff]
  %v2224 = vld [vmem:[%s8 + $0x518] sm:$0xff]
  %v2225 = vld [vmem:[%s8 + $0x520] sm:$0xff]
  %v2226 = vld [vmem:[%s8 + $0x528] sm:$0xff]
  %v2227 = vld [vmem:[%s8 + $0x530] sm:$0xff]
  %v2228 = vld [vmem:[%s8 + $0x538] sm:$0xff]
  %v2229 = vld [vmem:[%s8 + $0x540] sm:$0xff]
  %v2230 = vld [vmem:[%s8 + $0x548] sm:$0xff]
  %v2231 = vld [vmem:[%s8 + $0x550] sm:$0xff]
  %v2232 = vld [vmem:[%s8 + $0x558] sm:$0xff]
  %v2233 = vld [vmem:[%s8 + $0x560] sm:$0xff]
  %v2234 = vld [vmem:[%s8 + $0x568] sm:$0xff]
  %v2235 = vld [vmem:[%s8 + $0x570] sm:$0xff]
  %v2236 = vld [vmem:[%s8 + $0x578] sm:$0xff]
  %v2237 = vld [vmem:[%s8 + $0x580] sm:$0xff]
  %v2238 = vld [vmem:[%s8 + $0x588] sm:$0xff]
  %v2239 = vld [vmem:[%s8 + $0x590] sm:$0xff]
  %v2240 = vld [vmem:[%s8 + $0x598] sm:$0xff]
  %v2241 = vld [vmem:[%s8 + $0x5a0] sm:$0xff]
  %v2242 = vld [vmem:[%s8 + $0x5a8] sm:$0xff]
  %v2243 = vld [vmem:[%s8 + $0x5b0] sm:$0xff]
  %v2244 = vld [vmem:[%s8 + $0x5b8] sm:$0xff]
  %v2245 = vld [vmem:[%s8 + $0x5c0] sm:$0xff]
  %v2246 = vld [vmem:[%s8 + $0x5c8] sm:$0xff]
  %v2247 = vld [vmem:[%s8 + $0x5d0] sm:$0xff]
  %v2248 = vld [vmem:[%s8 + $0x5d8] sm:$0xff]
  %v2249 = vld [vmem:[%s8 + $0x5e0] sm:$0xff]
  %v2250 = vld [vmem:[%s8 + $0x5e8] sm:$0xff]
  %v2251 = vld [vmem:[%s8 + $0x5f0] sm:$0xff]
  %v2252 = vld [vmem:[%s8 + $0x5f8] sm:$0xff]
  %v2253 = vld [vmem:[%s8 + $0x600] sm:$0xff]
  %v2254 = vld [vmem:[%s8 + $0x608] sm:$0xff]
  %v2255 = vld [vmem:[%s8 + $0x610] sm:$0xff]
  %v2256 = vld [vmem:[%s8 + $0x618] sm:$0xff]
  %v2257 = vld [vmem:[%s8 + $0x620] sm:$0xff]
  %v2258 = vld [vmem:[%s8 + $0x628] sm:$0xff]
  %v2259 = vld [vmem:[%s8 + $0x630] sm:$0xff]
  %v2260 = vld [vmem:[%s8 + $0x638] sm:$0xff]
  %v2261 = vld [vmem:[%s8 + $0x640] sm:$0xff]
  %v2262 = vld [vmem:[%s8 + $0x648] sm:$0xff]
  %v2263 = vld [vmem:[%s8 + $0x650] sm:$0xff]
  %v2264 = vld [vmem:[%s8 + $0x658] sm:$0xff]
  %v2265 = vld [vmem:[%s8 + $0x660] sm:$0xff]
  %v2266 = vld [vmem:[%s8 + $0x668] sm:$0xff]
  %v2267 = vld [vmem:[%s8 + $0x670] sm:$0xff]
  %v2268 = vld [vmem:[%s8 + $0x678] sm:$0xff]
  %v2269 = vld [vmem:[%s8 + $0x680] sm:$0xff]
  %v2270 = vld [vmem:[%s8 + $0x688] sm:$0xff]
  %v2271 = vld [vmem:[%s8 + $0x690] sm:$0xff]
  %v2272 = vld [vmem:[%s8 + $0x698] sm:$0xff]
  %v2273 = vld [vmem:[%s8 + $0x6a0] sm:$0xff]
  %v2274 = vld [vmem:[%s8 + $0x6a8] sm:$0xff]
  %v2275 = vld [vmem:[%s8 + $0x6b0] sm:$0xff]
  %v2276 = vld [vmem:[%s8 + $0x6b8] sm:$0xff]
  %v2277 = vld [vmem:[%s8 + $0x6c0] sm:$0xff]
  %v2278 = vld [vmem:[%s8 + $0x6c8] sm:$0xff]
  %v2279 = vld [vmem:[%s8 + $0x6d0] sm:$0xff]
  %v2280 = vld [vmem:[%s8 + $0x6d8] sm:$0xff]
  %v2281 = vld [vmem:[%s8 + $0x6e0] sm:$0xff]
  %v2282 = vld [vmem:[%s8 + $0x6e8] sm:$0xff]
  %v2283 = vld [vmem:[%s8 + $0x6f0] sm:$0xff]
  %v2284 = vld [vmem:[%s8 + $0x6f8] sm:$0xff]
  %v2285 = vld [vmem:[%s8 + $0x700] sm:$0xff]
  %v2286 = vld [vmem:[%s8 + $0x708] sm:$0xff]
  %v2287 = vld [vmem:[%s8 + $0x710] sm:$0xff]
  %v2288 = vld [vmem:[%s8 + $0x718] sm:$0xff]
  %v2289 = vld [vmem:[%s8 + $0x720] sm:$0xff]
  %v2290 = vld [vmem:[%s8 + $0x728] sm:$0xff]
  %v2291 = vld [vmem:[%s8 + $0x730] sm:$0xff]
  %v2292 = vld [vmem:[%s8 + $0x738] sm:$0xff]
  %v2293 = vld [vmem:[%s8 + $0x740] sm:$0xff]
  %v2294 = vld [vmem:[%s8 + $0x748] sm:$0xff]
  %v2295 = vld [vmem:[%s8 + $0x750] sm:$0xff]
  %v2296 = vld [vmem:[%s8 + $0x758] sm:$0xff]
  %v2297 = vld [vmem:[%s8 + $0x760] sm:$0xff]
  %v2298 = vld [vmem:[%s8 + $0x768] sm:$0xff]
  %v2299 = vld [vmem:[%s8 + $0x770] sm:$0xff]
  %v2300 = vld [vmem:[%s8 + $0x778] sm:$0xff]
  %v2301 = vld [vmem:[%s8 + $0x780] sm:$0xff]
  %v2302 = vld [vmem:[%s8 + $0x788] sm:$0xff]
  %v2303 = vld [vmem:[%s8 + $0x790] sm:$0xff]
  %v2304 = vld [vmem:[%s8 + $0x798] sm:$0xff]
  %v2305 = vld [vmem:[%s8 + $0x7a0] sm:$0xff]
  %v2306 = vld [vmem:[%s8 + $0x7a8] sm:$0xff]
  %v2307 = vld [vmem:[%s8 + $0x7b0] sm:$0xff]
  %v2308 = vld [vmem:[%s8 + $0x7b8] sm:$0xff]
  %v2309 = vld [vmem:[%s8 + $0x7c0] sm:$0xff]
  %v2310 = vld [vmem:[%s8 + $0x7c8] sm:$0xff]
  %v2311 = vld [vmem:[%s8 + $0x7d0] sm:$0xff]
  %v2312 = vld [vmem:[%s8 + $0x7d8] sm:$0xff]
  %v2313 = vld [vmem:[%s8 + $0x7e0] sm:$0xff]
  %v2314 = vld [vmem:[%s8 + $0x7e8] sm:$0xff]
  %v2315 = vld [vmem:[%s8 + $0x7f0] sm:$0xff]
  %v2316 = vld [vmem:[%s8 + $0x7f8] sm:$0xff]
  %v2317 = vld [vmem:[%s8 + $0x800] sm:$0xff]
  %v2318 = vld [vmem:[%s8 + $0x808] sm:$0xff]
  %v2319 = vld [vmem:[%s8 + $0x810] sm:$0xff]
  %v2320 = vld [vmem:[%s8 + $0x818] sm:$0xff]
  %v2321 = vld [vmem:[%s8 + $0x820] sm:$0xff]
  %v2322 = vld [vmem:[%s8 + $0x828] sm:$0xff]
  %v2323 = vld [vmem:[%s8 + $0x830] sm:$0xff]
  %v2324 = vld [vmem:[%s8 + $0x838] sm:$0xff]
  %v2325 = vld [vmem:[%s8 + $0x840] sm:$0xff]
  %v2326 = vld [vmem:[%s8 + $0x848] sm:$0xff]
  %v2327 = vld [vmem:[%s8 + $0x850] sm:$0xff]
  %v2328 = vld [vmem:[%s8 + $0x858] sm:$0xff]
  %v2329 = vld [vmem:[%s8 + $0x860] sm:$0xff]
  %v2330 = vld [vmem:[%s8 + $0x868] sm:$0xff]
  %v2331 = vld [vmem:[%s8 + $0x870] sm:$0xff]
  %v2332 = vld [vmem:[%s8 + $0x878] sm:$0xff]
  %v2333 = vld [vmem:[%s8 + $0x880] sm:$0xff]
  %v2334 = vld [vmem:[%s8 + $0x888] sm:$0xff]
  %v2335 = vld [vmem:[%s8 + $0x890] sm:$0xff]
  %v2336 = vld [vmem:[%s8 + $0x898] sm:$0xff]
  %v2337 = vld [vmem:[%s8 + $0x8a0] sm:$0xff]
  %v2338 = vld [vmem:[%s8 + $0x8a8] sm:$0xff]
  %v2339 = vld [vmem:[%s8 + $0x8b0] sm:$0xff]
  %v2340 = vld [vmem:[%s8 + $0x8b8] sm:$0xff]
  %v2341 = vld [vmem:[%s8 + $0x8c0] sm:$0xff]
  %v2342 = vld [vmem:[%s8 + $0x8c8] sm:$0xff]
  %v2343 = vld [vmem:[%s8 + $0x8d0] sm:$0xff]
  %v2344 = vld [vmem:[%s8 + $0x8d8] sm:$0xff]
  %v2345 = vld [vmem:[%s8 + $0x8e0] sm:$0xff]
  %v2346 = vld [vmem:[%s8 + $0x8e8] sm:$0xff]
  %v2347 = vld [vmem:[%s8 + $0x8f0] sm:$0xff]
  %v2348 = vld [vmem:[%s8 + $0x8f8] sm:$0xff]
  %s2349 = sld [smem:[#allocation2]]
  %v2350 = vstv %s2349
  %2351 = vmatprep.subr.mxu0 %v2062
  %2352 = vmatpush1.msra.mxu0 %v2061
  %2353 = vmatprep.subr.mxu0 %v2064
  %2354 = vmatpush1.msra.mxu0 %v2063
  %2355 = vmatprep.subr.mxu0 %v2066
  %2356 = vmatpush1.msra.mxu0 %v2065
  %2357 = vmatprep.subr.mxu0 %v2068
  %2358 = vmatpush1.msra.mxu0 %v2067
  %2359 = vmatprep.subr.mxu0 %v2070
  %2360 = vmatpush1.msra.mxu0 %v2069
  %2361 = vmatprep.subr.mxu0 %v2072
  %2362 = vmatpush1.msra.mxu0 %v2071
  %2363 = vmatprep.subr.mxu0 %v2074
  %2364 = vmatpush1.msra.mxu0 %v2073
  %2365 = vmatprep.subr.mxu0 %v2076
  %2366 = vmatpush1.msra.mxu0 %v2075
  %2367 = vmatprep.subr.mxu0 %v2078
  %2368 = vmatpush1.msra.mxu0 %v2077
  %2369 = vmatprep.subr.mxu0 %v2080
  %2370 = vmatpush1.msra.mxu0 %v2079
  %2371 = vmatprep.subr.mxu0 %v2082
  %2372 = vmatpush1.msra.mxu0 %v2081
  %2373 = vmatprep.subr.mxu0 %v2084
  %2374 = vmatpush1.msra.mxu0 %v2083
  %2375 = vmatprep.subr.mxu0 %v2086
  %2376 = vmatpush1.msra.mxu0 %v2085
  %2377 = vmatprep.subr.mxu0 %v2088
  %2378 = vmatpush1.msra.mxu0 %v2087
  %2379 = vmatprep.subr.mxu0 %v2090
  %2380 = vmatpush1.msra.mxu0 %v2089
  %2381 = vmatprep.subr.mxu0 %v2092
  %2382 = vmatpush1.msra.mxu0 %v2091
  %2383 = vmatprep.subr.mxu0 %v2094
  %2384 = vmatpush1.msra.mxu0 %v2093
  %2385 = vmatprep.subr.mxu0 %v2096
  %2386 = vmatpush1.msra.mxu0 %v2095
  %2387 = vmatprep.subr.mxu0 %v2098
  %2388 = vmatpush1.msra.mxu0 %v2097
  %2389 = vmatprep.subr.mxu0 %v2100
  %2390 = vmatpush1.msra.mxu0 %v2099
  %2391 = vmatprep.subr.mxu0 %v2102
  %2392 = vmatpush1.msra.mxu0 %v2101
  %2393 = vmatprep.subr.mxu0 %v2104
  %2394 = vmatpush1.msra.mxu0 %v2103
  %2395 = vmatprep.subr.mxu0 %v2106
  %2396 = vmatpush1.msra.mxu0 %v2105
  %2397 = vmatprep.subr.mxu0 %v2108
  %2398 = vmatpush1.msra.mxu0 %v2107
  %2399 = vmatprep.subr.mxu0 %v2110
  %2400 = vmatpush1.msra.mxu0 %v2109
  %2401 = vmatprep.subr.mxu0 %v2112
  %2402 = vmatpush1.msra.mxu0 %v2111
  %2403 = vmatprep.subr.mxu0 %v2114
  %2404 = vmatpush1.msra.mxu0 %v2113
  %2405 = vmatprep.subr.mxu0 %v2116
  %2406 = vmatpush1.msra.mxu0 %v2115
  %2407 = vmatprep.subr.mxu0 %v2118
  %2408 = vmatpush1.msra.mxu0 %v2117
  %2409 = vmatprep.subr.mxu0 %v2120
  %2410 = vmatpush1.msra.mxu0 %v2119
  %2411 = vmatprep.subr.mxu0 %v2122
  %2412 = vmatpush1.msra.mxu0 %v2121
  %2413 = vmatprep.subr.mxu0 %v2124
  %2414 = vmatpush1.msra.mxu0 %v2123
  %2415 = vmatprep.mubr.f32.mxu0 %v1903
  %2416 = vmatmul.mubr.f32.gmra.mrb[0].mxu0 %v1883
  %v2417 = vpop.f32.mrb[0].mxu0
  %v2418 = vadd.f32 %v2350, %v2417
  %v2419 = vpop.f32.mrb[0].mxu0
  %v2420 = vadd.f32 %v2350, %v2419
  %2421 = vmatprep.mubr.f32.mxu0 %v1908
  %2422 = vmatmul.mubr.f32.gmra.mrb[0].mxu0 %v1888
  %v2423 = vpop.f32.mrb[0].mxu0
  %v2424 = vadd.f32 %v2350, %v2423
  %v2425 = vpop.f32.mrb[0].mxu0
  %v2426 = vadd.f32 %v2350, %v2425
  %2427 = vmatprep.mubr.f32.mxu0 %v1913
  %2428 = vmatmul.mubr.f32.gmra.mrb[0].mxu0 %v1893
  %v2429 = vpop.f32.mrb[0].mxu0
  %v2430 = vadd.f32 %v2350, %v2429
  %v2431 = vpop.f32.mrb[0].mxu0
  %v2432 = vadd.f32 %v2350, %v2431
  %2433 = vmatprep.mubr.f32.mxu0 %v1918
  %2434 = vmatmul.mubr.f32.gmra.mrb[0].mxu0 %v1898
  %v2435 = vpop.f32.mrb[0].mxu0
  %v2436 = vadd.f32 %v2350, %v2435
  %v2437 = vpop.f32.mrb[0].mxu0
  %v2438 = vadd.f32 %v2350, %v2437
  %2439 = vdwg.mxu0
  %2440 = vmatprep.subr.mxu0 %v2126
  %2441 = vmatpush1.msra.mxu0 %v2125
  %2442 = vmatprep.subr.mxu0 %v2128
  %2443 = vmatpush1.msra.mxu0 %v2127
  %2444 = vmatprep.subr.mxu0 %v2130
  %2445 = vmatpush1.msra.mxu0 %v2129
  %2446 = vmatprep.subr.mxu0 %v2132
  %2447 = vmatpush1.msra.mxu0 %v2131
  %2448 = vmatprep.subr.mxu0 %v2134
  %2449 = vmatpush1.msra.mxu0 %v2133
  %2450 = vmatprep.subr.mxu0 %v2136
  %2451 = vmatpush1.msra.mxu0 %v2135
  %2452 = vmatprep.subr.mxu0 %v2138
  %2453 = vmatpush1.msra.mxu0 %v2137
  %2454 = vmatprep.subr.mxu0 %v2140
  %2455 = vmatpush1.msra.mxu0 %v2139
  %2456 = vmatprep.subr.mxu0 %v2142
  %2457 = vmatpush1.msra.mxu0 %v2141
  %2458 = vmatprep.subr.mxu0 %v2144
  %2459 = vmatpush1.msra.mxu0 %v2143
  %2460 = vmatprep.subr.mxu0 %v2146
  %2461 = vmatpush1.msra.mxu0 %v2145
  %2462 = vmatprep.subr.mxu0 %v2148
  %2463 = vmatpush1.msra.mxu0 %v2147
  %2464 = vmatprep.subr.mxu0 %v2150
  %2465 = vmatpush1.msra.mxu0 %v2149
  %2466 = vmatprep.subr.mxu0 %v2152
  %2467 = vmatpush1.msra.mxu0 %v2151
  %2468 = vmatprep.subr.mxu0 %v2154
  %2469 = vmatpush1.msra.mxu0 %v2153
  %2470 = vmatprep.subr.mxu0 %v2156
  %2471 = vmatpush1.msra.mxu0 %v2155
  %2472 = vmatprep.subr.mxu0 %v2158
  %2473 = vmatpush1.msra.mxu0 %v2157
  %2474 = vmatprep.subr.mxu0 %v2160
  %2475 = vmatpush1.msra.mxu0 %v2159
  %2476 = vmatprep.subr.mxu0 %v2162
  %2477 = vmatpush1.msra.mxu0 %v2161
  %2478 = vmatprep.subr.mxu0 %v2164
  %2479 = vmatpush1.msra.mxu0 %v2163
  %2480 = vmatprep.subr.mxu0 %v2166
  %2481 = vmatpush1.msra.mxu0 %v2165
  %2482 = vmatprep.subr.mxu0 %v2168
  %2483 = vmatpush1.msra.mxu0 %v2167
  %2484 = vmatprep.subr.mxu0 %v2170
  %2485 = vmatpush1.msra.mxu0 %v2169
  %2486 = vmatprep.subr.mxu0 %v2172
  %2487 = vmatpush1.msra.mxu0 %v2171
  %2488 = vmatprep.subr.mxu0 %v2174
  %2489 = vmatpush1.msra.mxu0 %v2173
  %2490 = vmatprep.subr.mxu0 %v2176
  %2491 = vmatpush1.msra.mxu0 %v2175
  %2492 = vmatprep.subr.mxu0 %v2178
  %2493 = vmatpush1.msra.mxu0 %v2177
  %2494 = vmatprep.subr.mxu0 %v2180
  %2495 = vmatpush1.msra.mxu0 %v2179
  %2496 = vmatprep.subr.mxu0 %v2182
  %2497 = vmatpush1.msra.mxu0 %v2181
  %2498 = vmatprep.subr.mxu0 %v2184
  %2499 = vmatpush1.msra.mxu0 %v2183
  %2500 = vmatprep.subr.mxu0 %v2186
  %2501 = vmatpush1.msra.mxu0 %v2185
  %2502 = vmatprep.subr.mxu0 %v2188
  %2503 = vmatpush1.msra.mxu0 %v2187
  %2504 = vmatprep.mubr.f32.mxu0 %v1943
  %2505 = vmatmul.mubr.f32.gmra.mrb[0].mxu0 %v1923
  %v2506 = vpop.f32.mrb[0].mxu0
  %v2507 = vadd.f32 %v2418, %v2506
  %v2508 = vpop.f32.mrb[0].mxu0
  %v2509 = vadd.f32 %v2420, %v2508
  %2510 = vmatprep.mubr.f32.mxu0 %v1948
  %2511 = vmatmul.mubr.f32.gmra.mrb[0].mxu0 %v1928
  %v2512 = vpop.f32.mrb[0].mxu0
  %v2513 = vadd.f32 %v2424, %v2512
  %v2514 = vpop.f32.mrb[0].mxu0
  %v2515 = vadd.f32 %v2426, %v2514
  %2516 = vmatprep.mubr.f32.mxu0 %v1953
  %2517 = vmatmul.mubr.f32.gmra.mrb[0].mxu0 %v1933
  %v2518 = vpop.f32.mrb[0].mxu0
  %v2519 = vadd.f32 %v2430, %v2518
  %v2520 = vpop.f32.mrb[0].mxu0
  %v2521 = vadd.f32 %v2432, %v2520
  %2522 = vmatprep.mubr.f32.mxu0 %v1958
  %2523 = vmatmul.mubr.f32.gmra.mrb[0].mxu0 %v1938
  %v2524 = vpop.f32.mrb[0].mxu0
  %v2525 = vadd.f32 %v2436, %v2524
  %v2526 = vpop.f32.mrb[0].mxu0
  %v2527 = vadd.f32 %v2438, %v2526
  %2528 = vdwg.mxu0
  %2529 = vmatprep.subr.mxu0 %v2190
  %2530 = vmatpush1.msra.mxu0 %v2189
  %2531 = vmatprep.subr.mxu0 %v2192
  %2532 = vmatpush1.msra.mxu0 %v2191
  %2533 = vmatprep.subr.mxu0 %v2194
  %2534 = vmatpush1.msra.mxu0 %v2193
  %2535 = vmatprep.subr.mxu0 %v2196
  %2536 = vmatpush1.msra.mxu0 %v2195
  %2537 = vmatprep.subr.mxu0 %v2198
  %2538 = vmatpush1.msra.mxu0 %v2197
  %2539 = vmatprep.subr.mxu0 %v2200
  %2540 = vmatpush1.msra.mxu0 %v2199
  %2541 = vmatprep.subr.mxu0 %v2202
  %2542 = vmatpush1.msra.mxu0 %v2201
  %2543 = vmatprep.subr.mxu0 %v2204
  %2544 = vmatpush1.msra.mxu0 %v2203
  %2545 = vmatprep.subr.mxu0 %v2206
  %2546 = vmatpush1.msra.mxu0 %v2205
  %2547 = vmatprep.subr.mxu0 %v2208
  %2548 = vmatpush1.msra.mxu0 %v2207
  %2549 = vmatprep.subr.mxu0 %v2210
  %2550 = vmatpush1.msra.mxu0 %v2209
  %2551 = vmatprep.subr.mxu0 %v2212
  %2552 = vmatpush1.msra.mxu0 %v2211
  %2553 = vmatprep.subr.mxu0 %v2214
  %2554 = vmatpush1.msra.mxu0 %v2213
  %2555 = vmatprep.subr.mxu0 %v2216
  %2556 = vmatpush1.msra.mxu0 %v2215
  %2557 = vmatprep.subr.mxu0 %v2218
  %2558 = vmatpush1.msra.mxu0 %v2217
  %2559 = vmatprep.subr.mxu0 %v2220
  %2560 = vmatpush1.msra.mxu0 %v2219
  %2561 = vmatprep.subr.mxu0 %v2222
  %2562 = vmatpush1.msra.mxu0 %v2221
  %2563 = vmatprep.subr.mxu0 %v2224
  %2564 = vmatpush1.msra.mxu0 %v2223
  %2565 = vmatprep.subr.mxu0 %v2226
  %2566 = vmatpush1.msra.mxu0 %v2225
  %2567 = vmatprep.subr.mxu0 %v2228
  %2568 = vmatpush1.msra.mxu0 %v2227
  %2569 = vmatprep.subr.mxu0 %v2230
  %2570 = vmatpush1.msra.mxu0 %v2229
  %2571 = vmatprep.subr.mxu0 %v2232
  %2572 = vmatpush1.msra.mxu0 %v2231
  %2573 = vmatprep.subr.mxu0 %v2234
  %2574 = vmatpush1.msra.mxu0 %v2233
  %2575 = vmatprep.subr.mxu0 %v2236
  %2576 = vmatpush1.msra.mxu0 %v2235
  %2577 = vmatprep.subr.mxu0 %v2238
  %2578 = vmatpush1.msra.mxu0 %v2237
  %2579 = vmatprep.subr.mxu0 %v2240
  %2580 = vmatpush1.msra.mxu0 %v2239
  %2581 = vmatprep.subr.mxu0 %v2242
  %2582 = vmatpush1.msra.mxu0 %v2241
  %2583 = vmatprep.subr.mxu0 %v2244
  %2584 = vmatpush1.msra.mxu0 %v2243
  %2585 = vmatprep.subr.mxu0 %v2246
  %2586 = vmatpush1.msra.mxu0 %v2245
  %2587 = vmatprep.subr.mxu0 %v2248
  %2588 = vmatpush1.msra.mxu0 %v2247
  %2589 = vmatprep.subr.mxu0 %v2250
  %2590 = vmatpush1.msra.mxu0 %v2249
  %2591 = vmatprep.subr.mxu0 %v2252
  %2592 = vmatpush1.msra.mxu0 %v2251
  %2593 = vmatprep.mubr.f32.mxu0 %v1983
  %2594 = vmatmul.mubr.f32.gmra.mrb[0].mxu0 %v1963
  %v2595 = vpop.f32.mrb[0].mxu0
  %v2596 = vadd.f32 %v2507, %v2595
  %v2597 = vpop.f32.mrb[0].mxu0
  %v2598 = vadd.f32 %v2509, %v2597
  %2599 = vmatprep.mubr.f32.mxu0 %v1988
  %2600 = vmatmul.mubr.f32.gmra.mrb[0].mxu0 %v1968
  %v2601 = vpop.f32.mrb[0].mxu0
  %v2602 = vadd.f32 %v2513, %v2601
  %v2603 = vpop.f32.mrb[0].mxu0
  %v2604 = vadd.f32 %v2515, %v2603
  %2605 = vmatprep.mubr.f32.mxu0 %v1993
  %2606 = vmatmul.mubr.f32.gmra.mrb[0].mxu0 %v1973
  %v2607 = vpop.f32.mrb[0].mxu0
  %v2608 = vadd.f32 %v2519, %v2607
  %v2609 = vpop.f32.mrb[0].mxu0
  %v2610 = vadd.f32 %v2521, %v2609
  %2611 = vmatprep.mubr.f32.mxu0 %v1998
  %2612 = vmatmul.mubr.f32.gmra.mrb[0].mxu0 %v1978
  %v2613 = vpop.f32.mrb[0].mxu0
  %v2614 = vadd.f32 %v2525, %v2613
  %v2615 = vpop.f32.mrb[0].mxu0
  %v2616 = vadd.f32 %v2527, %v2615
  %2617 = vdwg.mxu0
  %2618 = vmatprep.subr.mxu0 %v2254
  %2619 = vmatpush1.msra.mxu0 %v2253
  %2620 = vmatprep.subr.mxu0 %v2256
  %2621 = vmatpush1.msra.mxu0 %v2255
  %2622 = vmatprep.subr.mxu0 %v2258
  %2623 = vmatpush1.msra.mxu0 %v2257
  %2624 = vmatprep.subr.mxu0 %v2260
  %2625 = vmatpush1.msra.mxu0 %v2259
  %2626 = vmatprep.subr.mxu0 %v2262
  %2627 = vmatpush1.msra.mxu0 %v2261
  %2628 = vmatprep.subr.mxu0 %v2264
  %2629 = vmatpush1.msra.mxu0 %v2263
  %2630 = vmatprep.subr.mxu0 %v2266
  %2631 = vmatpush1.msra.mxu0 %v2265
  %2632 = vmatprep.subr.mxu0 %v2268
  %2633 = vmatpush1.msra.mxu0 %v2267
  %2634 = vmatprep.subr.mxu0 %v2270
  %2635 = vmatpush1.msra.mxu0 %v2269
  %2636 = vmatprep.subr.mxu0 %v2272
  %2637 = vmatpush1.msra.mxu0 %v2271
  %2638 = vmatprep.subr.mxu0 %v2274
  %2639 = vmatpush1.msra.mxu0 %v2273
  %2640 = vmatprep.subr.mxu0 %v2276
  %2641 = vmatpush1.msra.mxu0 %v2275
  %2642 = vmatprep.subr.mxu0 %v2278
  %2643 = vmatpush1.msra.mxu0 %v2277
  %2644 = vmatprep.subr.mxu0 %v2280
  %2645 = vmatpush1.msra.mxu0 %v2279
  %2646 = vmatprep.subr.mxu0 %v2282
  %2647 = vmatpush1.msra.mxu0 %v2281
  %2648 = vmatprep.subr.mxu0 %v2284
  %2649 = vmatpush1.msra.mxu0 %v2283
  %2650 = vmatprep.subr.mxu0 %v2286
  %2651 = vmatpush1.msra.mxu0 %v2285
  %2652 = vmatprep.subr.mxu0 %v2288
  %2653 = vmatpush1.msra.mxu0 %v2287
  %2654 = vmatprep.subr.mxu0 %v2290
  %2655 = vmatpush1.msra.mxu0 %v2289
  %2656 = vmatprep.subr.mxu0 %v2292
  %2657 = vmatpush1.msra.mxu0 %v2291
  %2658 = vmatprep.subr.mxu0 %v2294
  %2659 = vmatpush1.msra.mxu0 %v2293
  %2660 = vmatprep.subr.mxu0 %v2296
  %2661 = vmatpush1.msra.mxu0 %v2295
  %2662 = vmatprep.subr.mxu0 %v2298
  %2663 = vmatpush1.msra.mxu0 %v2297
  %2664 = vmatprep.subr.mxu0 %v2300
  %2665 = vmatpush1.msra.mxu0 %v2299
  %2666 = vmatprep.subr.mxu0 %v2302
  %2667 = vmatpush1.msra.mxu0 %v2301
  %2668 = vmatprep.subr.mxu0 %v2304
  %2669 = vmatpush1.msra.mxu0 %v2303
  %2670 = vmatprep.subr.mxu0 %v2306
  %2671 = vmatpush1.msra.mxu0 %v2305
  %2672 = vmatprep.subr.mxu0 %v2308
  %2673 = vmatpush1.msra.mxu0 %v2307
  %2674 = vmatprep.subr.mxu0 %v2310
  %2675 = vmatpush1.msra.mxu0 %v2309
  %2676 = vmatprep.subr.mxu0 %v2312
  %2677 = vmatpush1.msra.mxu0 %v2311
  %2678 = vmatprep.subr.mxu0 %v2314
  %2679 = vmatpush1.msra.mxu0 %v2313
  %2680 = vmatprep.subr.mxu0 %v2316
  %2681 = vmatpush1.msra.mxu0 %v2315
  %2682 = vmatprep.mubr.f32.mxu0 %v2023
  %2683 = vmatmul.mubr.f32.gmra.mrb[0].mxu0 %v2003
  %v2684 = vpop.f32.mrb[0].mxu0
  %v2685 = vadd.f32 %v2596, %v2684
  %v2686 = vpop.f32.mrb[0].mxu0
  %v2687 = vadd.f32 %v2598, %v2686
  %2688 = vmatprep.mubr.f32.mxu0 %v2028
  %2689 = vmatmul.mubr.f32.gmra.mrb[0].mxu0 %v2008
  %v2690 = vpop.f32.mrb[0].mxu0
  %v2691 = vadd.f32 %v2602, %v2690
  %v2692 = vpop.f32.mrb[0].mxu0
  %v2693 = vadd.f32 %v2604, %v2692
  %2694 = vmatprep.mubr.f32.mxu0 %v2033
  %2695 = vmatmul.mubr.f32.gmra.mrb[0].mxu0 %v2013
  %v2696 = vpop.f32.mrb[0].mxu0
  %v2697 = vadd.f32 %v2608, %v2696
  %v2698 = vpop.f32.mrb[0].mxu0
  %v2699 = vadd.f32 %v2610, %v2698
  %2700 = vmatprep.mubr.f32.mxu0 %v2038
  %2701 = vmatmul.mubr.f32.gmra.mrb[0].mxu0 %v2018
  %v2702 = vpop.f32.mrb[0].mxu0
  %v2703 = vadd.f32 %v2614, %v2702
  %v2704 = vpop.f32.mrb[0].mxu0
  %v2705 = vadd.f32 %v2616, %v2704
  %2706 = vdwg.mxu0
  %2707 = vmatprep.subr.mxu0 %v2318
  %2708 = vmatpush1.msra.mxu0 %v2317
  %2709 = vmatprep.subr.mxu0 %v2320
  %2710 = vmatpush1.msra.mxu0 %v2319
  %2711 = vmatprep.subr.mxu0 %v2322
  %2712 = vmatpush1.msra.mxu0 %v2321
  %2713 = vmatprep.subr.mxu0 %v2324
  %2714 = vmatpush1.msra.mxu0 %v2323
  %2715 = vmatprep.subr.mxu0 %v2326
  %2716 = vmatpush1.msra.mxu0 %v2325
  %2717 = vmatprep.subr.mxu0 %v2328
  %2718 = vmatpush1.msra.mxu0 %v2327
  %2719 = vmatprep.subr.mxu0 %v2330
  %2720 = vmatpush1.msra.mxu0 %v2329
  %2721 = vmatprep.subr.mxu0 %v2332
  %2722 = vmatpush1.msra.mxu0 %v2331
  %2723 = vmatprep.subr.mxu0 %v2334
  %2724 = vmatpush1.msra.mxu0 %v2333
  %2725 = vmatprep.subr.mxu0 %v2336
  %2726 = vmatpush1.msra.mxu0 %v2335
  %2727 = vmatprep.subr.mxu0 %v2338
  %2728 = vmatpush1.msra.mxu0 %v2337
  %2729 = vmatprep.subr.mxu0 %v2340
  %2730 = vmatpush1.msra.mxu0 %v2339
  %2731 = vmatprep.subr.mxu0 %v2342
  %2732 = vmatpush1.msra.mxu0 %v2341
  %2733 = vmatprep.subr.mxu0 %v2344
  %2734 = vmatpush1.msra.mxu0 %v2343
  %2735 = vmatprep.subr.mxu0 %v2346
  %2736 = vmatpush1.msra.mxu0 %v2345
  %2737 = vmatprep.subr.mxu0 %v2348
  %2738 = vmatpush1.msra.mxu0 %v2347
  %2739 = vmatprep.subr.mxu0 0.0
  %2740 = vmatpush1.msra.mxu0 0.0
  %2741 = vmatprep.subr.mxu0 0.0
  %2742 = vmatpush1.msra.mxu0 0.0
  %2743 = vmatprep.subr.mxu0 0.0
  %2744 = vmatpush1.msra.mxu0 0.0
  %2745 = vmatprep.subr.mxu0 0.0
  %2746 = vmatpush1.msra.mxu0 0.0
  %2747 = vmatprep.subr.mxu0 0.0
  %2748 = vmatpush1.msra.mxu0 0.0
  %2749 = vmatprep.subr.mxu0 0.0
  %2750 = vmatpush1.msra.mxu0 0.0
  %2751 = vmatprep.subr.mxu0 0.0
  %2752 = vmatpush1.msra.mxu0 0.0
  %2753 = vmatprep.subr.mxu0 0.0
  %2754 = vmatpush1.msra.mxu0 0.0
  %2755 = vmatprep.subr.mxu0 0.0
  %2756 = vmatpush1.msra.mxu0 0.0
  %2757 = vmatprep.subr.mxu0 0.0
  %2758 = vmatpush1.msra.mxu0 0.0
  %2759 = vmatprep.subr.mxu0 0.0
  %2760 = vmatpush1.msra.mxu0 0.0
  %2761 = vmatprep.subr.mxu0 0.0
  %2762 = vmatpush1.msra.mxu0 0.0
  %2763 = vmatprep.subr.mxu0 0.0
  %2764 = vmatpush1.msra.mxu0 0.0
  %2765 = vmatprep.subr.mxu0 0.0
  %2766 = vmatpush1.msra.mxu0 0.0
  %2767 = vmatprep.subr.mxu0 0.0
  %2768 = vmatpush1.msra.mxu0 0.0
  %2769 = vmatprep.subr.mxu0 0.0
  %2770 = vmatpush1.msra.mxu0 0.0
  %2771 = vmatprep.mubr.f32.mxu0 0.0
  %2772 = vmatmul.mubr.f32.gmra.mrb[0].mxu0 %v2043
  %v2773 = vpop.f32.mrb[0].mxu0
  %v2774 = vadd.f32 %v2685, %v2773
  %v2775 = vpop.f32.mrb[0].mxu0
  %v2776 = vadd.f32 %v2687, %v2775
  %2777 = vmatprep.mubr.f32.mxu0 0.0
  %2778 = vmatmul.mubr.f32.gmra.mrb[0].mxu0 %v2048
  %v2779 = vpop.f32.mrb[0].mxu0
  %v2780 = vadd.f32 %v2691, %v2779
  %v2781 = vpop.f32.mrb[0].mxu0
  %v2782 = vadd.f32 %v2693, %v2781
  %2783 = vmatprep.mubr.f32.mxu0 0.0
  %2784 = vmatmul.mubr.f32.gmra.mrb[0].mxu0 %v2053
  %v2785 = vpop.f32.mrb[0].mxu0
  %v2786 = vadd.f32 %v2697, %v2785
  %v2787 = vpop.f32.mrb[0].mxu0
  %v2788 = vadd.f32 %v2699, %v2787
  %2789 = vmatprep.mubr.f32.mxu0 0.0
  %2790 = vmatmul.mubr.f32.gmra.mrb[0].mxu0 %v2058
  %v2791 = vpop.f32.mrb[0].mxu0
  %v2792 = vadd.f32 %v2703, %v2791
  %v2793 = vpop.f32.mrb[0].mxu0
  %v2794 = vadd.f32 %v2705, %v2793
  %2795 = vdwg.mxu0
  %v2796 = vand.u32 2147483647, %v2774
  %v2797 = vand.u32 2147483647, %v2776
  %v2798 = vand.u32 2147483647, %v2780
  %v2799 = vand.u32 2147483647, %v2782
  %v2800 = vand.u32 2147483647, %v2786
  %v2801 = vand.u32 2147483647, %v2788
  %v2802 = vand.u32 2147483647, %v2792
  %v2803 = vand.u32 2147483647, %v2794
  %v2804 = vsub.f32 0.0, %v2796
  %v2805 = vsub.f32 0.0, %v2797
  %v2806 = vsub.f32 0.0, %v2798
  %v2807 = vsub.f32 0.0, %v2799
  %v2808 = vsub.f32 0.0, %v2800
  %v2809 = vsub.f32 0.0, %v2801
  %v2810 = vsub.f32 0.0, %v2802
  %v2811 = vsub.f32 0.0, %v2803
  %v2812 = vmul.f32 %v2804, 1.442695
  %v2813 = vpow.pop %v2812
  %v2814 = vmul.f32 %v2805, 1.442695
  %v2815 = vpow.pop %v2814
  %v2816 = vmul.f32 %v2806, 1.442695
  %v2817 = vpow.pop %v2816
  %v2818 = vmul.f32 %v2807, 1.442695
  %v2819 = vpow.pop %v2818
  %v2820 = vmul.f32 %v2808, 1.442695
  %v2821 = vpow.pop %v2820
  %v2822 = vmul.f32 %v2809, 1.442695
  %v2823 = vpow.pop %v2822
  %v2824 = vmul.f32 %v2810, 1.442695
  %v2825 = vpow.pop %v2824
  %v2826 = vmul.f32 %v2811, 1.442695
  %v2827 = vpow.pop %v2826
  %vm2828 = vcmp.ge.f32.partialorder %v2774, 0.0
  %vm2829 = vcmp.ge.f32.partialorder %v2776, 0.0
  %vm2830 = vcmp.ge.f32.partialorder %v2780, 0.0
  %vm2831 = vcmp.ge.f32.partialorder %v2782, 0.0
  %vm2832 = vcmp.ge.f32.partialorder %v2786, 0.0
  %vm2833 = vcmp.ge.f32.partialorder %v2788, 0.0
  %vm2834 = vcmp.ge.f32.partialorder %v2792, 0.0
  %vm2835 = vcmp.ge.f32.partialorder %v2794, 0.0
  %v2836 = vadd.f32 %v2813, 1.0
  %v2837 = vadd.f32 %v2815, 1.0
  %v2838 = vadd.f32 %v2817, 1.0
  %v2839 = vadd.f32 %v2819, 1.0
  %v2840 = vadd.f32 %v2821, 1.0
  %v2841 = vadd.f32 %v2823, 1.0
  %v2842 = vadd.f32 %v2825, 1.0
  %v2843 = vadd.f32 %v2827, 1.0
  %v2844 = vrcp.pop %v2836
  %v2845 = vmul.f32 1.0, %v2844
  %v2846 = vrcp.pop %v2837
  %v2847 = vmul.f32 1.0, %v2846
  %v2848 = vrcp.pop %v2838
  %v2849 = vmul.f32 1.0, %v2848
  %v2850 = vrcp.pop %v2839
  %v2851 = vmul.f32 1.0, %v2850
  %v2852 = vrcp.pop %v2840
  %v2853 = vmul.f32 1.0, %v2852
  %v2854 = vrcp.pop %v2841
  %v2855 = vmul.f32 1.0, %v2854
  %v2856 = vrcp.pop %v2842
  %v2857 = vmul.f32 1.0, %v2856
  %v2858 = vrcp.pop %v2843
  %v2859 = vmul.f32 1.0, %v2858
  %v2860 = vmul.f32 %v2813, %v2844
  %v2861 = vmul.f32 %v2815, %v2846
  %v2862 = vmul.f32 %v2817, %v2848
  %v2863 = vmul.f32 %v2819, %v2850
  %v2864 = vmul.f32 %v2821, %v2852
  %v2865 = vmul.f32 %v2823, %v2854
  %v2866 = vmul.f32 %v2825, %v2856
  %v2867 = vmul.f32 %v2827, %v2858
  %v2868 = vsel %vm2828, %v2845, %v2860
  %v2869 = vsel %vm2829, %v2847, %v2861
  %v2870 = vsel %vm2830, %v2849, %v2862
  %v2871 = vsel %vm2831, %v2851, %v2863
  %v2872 = vsel %vm2832, %v2853, %v2864
  %v2873 = vsel %vm2833, %v2855, %v2865
  %v2874 = vsel %vm2834, %v2857, %v2866
  %v2875 = vsel %vm2835, %v2859, %v2867
  %v2876 = vld [vmem:[%s9] sm:$0xff]
  %v2877 = vld [vmem:[%s10] sm:$0xff]
  %2879 = vset.pattern.permute.xlu0 0
  %2880 = vperm.xlu0 %2879, %v2877
  %v2881 = vpop.permute.xlu0 %2880
  %v2884 = vsel %vm219, %v2876, 0
  %2886 = vmatprep.subr.mxu0 %v2869
  %2887 = vmatpush1.msra.mxu0 %v2868
  %2888 = vmatprep.subr.mxu0 %v2871
  %2889 = vmatpush1.msra.mxu0 %v2870
  %2890 = vmatprep.subr.mxu0 %v2873
  %2891 = vmatpush1.msra.mxu0 %v2872
  %2892 = vmatprep.subr.mxu0 %v2875
  %2893 = vmatpush1.msra.mxu0 %v2874
  %2894 = vmatprep.subr.mxu0 0.0
  %2895 = vmatpush1.msra.mxu0 0.0
  %2896 = vmatprep.subr.mxu0 0.0
  %2897 = vmatpush1.msra.mxu0 0.0
  %2898 = vmatprep.subr.mxu0 0.0
  %2899 = vmatpush1.msra.mxu0 0.0
  %2900 = vmatprep.subr.mxu0 0.0
  %2901 = vmatpush1.msra.mxu0 0.0
  %2902 = vmatprep.subr.mxu0 0.0
  %2903 = vmatpush1.msra.mxu0 0.0
  %2904 = vmatprep.subr.mxu0 0.0
  %2905 = vmatpush1.msra.mxu0 0.0
  %2906 = vmatprep.subr.mxu0 0.0
  %2907 = vmatpush1.msra.mxu0 0.0
  %2908 = vmatprep.subr.mxu0 0.0
  %2909 = vmatpush1.msra.mxu0 0.0
  %2910 = vmatprep.subr.mxu0 0.0
  %2911 = vmatpush1.msra.mxu0 0.0
  %2912 = vmatprep.subr.mxu0 0.0
  %2913 = vmatpush1.msra.mxu0 0.0
  %2914 = vmatprep.subr.mxu0 0.0
  %2915 = vmatpush1.msra.mxu0 0.0
  %2916 = vmatprep.subr.mxu0 0.0
  %2917 = vmatpush1.msra.mxu0 0.0
  %2918 = vmatprep.subr.mxu0 0.0
  %2919 = vmatpush1.msra.mxu0 0.0
  %2920 = vmatprep.subr.mxu0 0.0
  %2921 = vmatpush1.msra.mxu0 0.0
  %2922 = vmatprep.subr.mxu0 0.0
  %2923 = vmatpush1.msra.mxu0 0.0
  %2924 = vmatprep.subr.mxu0 0.0
  %2925 = vmatpush1.msra.mxu0 0.0
  %2926 = vmatprep.subr.mxu0 0.0
  %2927 = vmatpush1.msra.mxu0 0.0
  %2928 = vmatprep.subr.mxu0 0.0
  %2929 = vmatpush1.msra.mxu0 0.0
  %2930 = vmatprep.subr.mxu0 0.0
  %2931 = vmatpush1.msra.mxu0 0.0
  %2932 = vmatprep.subr.mxu0 0.0
  %2933 = vmatpush1.msra.mxu0 0.0
  %2934 = vmatprep.subr.mxu0 0.0
  %2935 = vmatpush1.msra.mxu0 0.0
  %2936 = vmatprep.subr.mxu0 0.0
  %2937 = vmatpush1.msra.mxu0 0.0
  %2938 = vmatprep.subr.mxu0 0.0
  %2939 = vmatpush1.msra.mxu0 0.0
  %2940 = vmatprep.subr.mxu0 0.0
  %2941 = vmatpush1.msra.mxu0 0.0
  %2942 = vmatprep.subr.mxu0 0.0
  %2943 = vmatpush1.msra.mxu0 0.0
  %2944 = vmatprep.subr.mxu0 0.0
  %2945 = vmatpush1.msra.mxu0 0.0
  %2946 = vmatprep.subr.mxu0 0.0
  %2947 = vmatpush1.msra.mxu0 0.0
  %2948 = vmatprep.subr.mxu0 0.0
  %2949 = vmatpush1.msra.mxu0 0.0
  %2950 = vmatprep.mubr.f32.mxu0 0.0
  %2951 = vmatmul.mubr.f32.gmra.mrb[0].mxu0 %v2884
  %v2952 = vpop.f32.mrb[0].mxu0
  %v2953 = vadd.f32 %v2881, %v2952
  %v2954 = vpop.f32.mrb[0].mxu0
  %v2955 = vadd.f32 %v2881, %v2954
  %2956 = vdwg.mxu0
  %2957 = vst [vmem:[%s11] sm:$0xff] %v2953
  %vm2958 = vcmask 277504
  %2959 = vst.msk [vmem:[%s11 + $0x8] sm:$0xff] %vm2958, %v2955
  // Predicated region
  $region46: #{generator_forward.1} parent=0 // pred_check
    _
  $region47: #{generator_forward.1} parent=0 // pred_check_branch
    %2961 = sbr.rel (0) target = $region49
  $region48: #{generator_forward.1} parent=0 // pred_region
    _
  $region49: #{generator_forward.1} parent=0 // pred_fallthru
    _
  // Predicated region
  $region50: #{generator_forward.1} parent=0 // pred_check
    _
  $region51: #{generator_forward.1} parent=0 // pred_check_branch
    %2963 = sbr.rel (0) target = $region53
  $region52: #{generator_forward.1} parent=0 // pred_region
    _
  $region53: #{generator_forward.1} parent=0 // pred_fallthru
    _

</llo_original>
